<compile_context>
chip_gen: v5e
topology: v5e:2x2
jax: 0.10.0
libtpu: 0.0.40
codegen_flags: <defaults>
</compile_context>

<pallas_src>
import jax
import jax.numpy as jnp
from jax import lax
from jax.experimental import pallas as pl
from jax.experimental.pallas import tpu as pltpu


_VMEM = pl.BlockSpec(memory_space=pltpu.MemorySpace.VMEM)
_VMEM_LIMIT = 48 * 1024 * 1024  # explicit budget, valid on v5e/v6e (128 MiB) and v7x (64 MiB)


# ----------------------------------------------------------------------------
# Encoder: plain JAX (tiny K/M matmuls; see header).  BatchNorm1d training mode
# (batch statistics, biased variance, eps=1e-5) like nn.BatchNorm1d in train().
# ----------------------------------------------------------------------------
def encoder_forward(images, p):
    B, C, Hs, Ws = images.shape
    pooled = images.reshape(B, C, Hs * Ws).astype(jnp.float32).mean(-1)   # (B, C)
    feat = jnp.maximum(pooled @ p["w_backbone"], 0.0)                     # (B, F)
    emb = feat @ p["w_embed"] + p["b_embed"]                              # (B, E)
    mean = emb.mean(0, keepdims=True)
    var = ((emb - mean) ** 2).mean(0, keepdims=True)
    return (emb - mean) * lax.rsqrt(var + 1e-5) * p["bn_gamma"] + p["bn_beta"]


# ----------------------------------------------------------------------------
# LSTM kernel (multi-layer, PyTorch gate order i,f,g,o).
#   x_ref    : (T*B, E)  bf16   time-major layer-0 input (row t*B+b = step t, sample b)
#   wih0_ref : (E, 4H)   bf16   layer-0 input weights (pre-transposed: x @ W)
#   wihr_ref : (max(L-1,1), H, 4H) bf16   input weights for layers 1..L-1
#   whh_ref  : (L, H, 4H) bf16  recurrent weights (pre-transposed: h @ W)
#   b_ref    : (L, 1, 4H) f32   fused b_ih + b_hh
#   hseq_ref : (T*B, H)  bf16   output: final-layer hidden states (also reused in
#                               place as the input buffer for layers > 0)
#   gx_ref   : (T*B, 4H) f32    scratch: hoisted input-gate projections
#   h_ref/c_ref : (B, H) f32    scratch: recurrent state
# ----------------------------------------------------------------------------
def lstm_kernel(x_ref, wih0_ref, wihr_ref, whh_ref, b_ref, hseq_ref,
                gx_ref, h_ref, c_ref):
    TB, H = hseq_ref.shape
    B = h_ref.shape[0]
    T = TB // B
    L = whh_ref.shape[0]

    for layer in range(L):                       # static unroll over layers
        whh = whh_ref[layer]                     # (H, 4H) bf16

        # Hoisted input projection: ONE big MXU matmul per layer (bias folded in).
        if layer == 0:
            gx = jnp.dot(x_ref[...], wih0_ref[...],
                         preferred_element_type=jnp.float32)
        else:
            # full read happens before this layer's in-place writes below
            gx = jnp.dot(hseq_ref[...], wihr_ref[layer - 1],
                         preferred_element_type=jnp.float32)
        gx_ref[...] = gx + b_ref[layer]          # (T*B, 4H) f32, one broadcast/layer

        h_ref[...] = jnp.zeros_like(h_ref)
        c_ref[...] = jnp.zeros_like(c_ref)

        # Time recurrence: fully unrolled (T is a small static constant).
        for t in range(T):
            r0 = t * B                           # static row offset
            gates = (gx_ref[pl.ds(r0, B), :]
                     + jnp.dot(h_ref[...].astype(jnp.bfloat16), whh,
                               preferred_element_type=jnp.float32))
            # H is a multiple of 128 -> whole-vreg static lane slices.
            i = jax.nn.sigmoid(gates[:, 0 * H:1 * H])
            f = jax.nn.sigmoid(gates[:, 1 * H:2 * H])
            g = jnp.tanh(gates[:, 2 * H:3 * H])
            o = jax.nn.sigmoid(gates[:, 3 * H:4 * H])
            c_new = f * c_ref[...] + i * g       # f32 gate math
            h_new = o * jnp.tanh(c_new)
            c_ref[...] = c_new
            h_ref[...] = h_new
            hseq_ref[pl.ds(r0, B), :] = h_new.astype(jnp.bfloat16)


# ----------------------------------------------------------------------------
# Vocab FC kernel: one lane-dense vocab tile per grid step.
# ----------------------------------------------------------------------------
def fc_kernel(h_ref, wfc_ref, bfc_ref, out_ref):
    out_ref[...] = (jnp.dot(h_ref[...], wfc_ref[...],
                            preferred_element_type=jnp.float32)
                    + bfc_ref[...])


# ----------------------------------------------------------------------------
# Decoder wrapper (embedding lookup + concat are plain-JAX glue).
# ----------------------------------------------------------------------------
def decoder_forward(features, captions, p, *, vocab_tile=512):
    B, E = features.shape
    cap_emb = p["embedding"][captions[:, :-1]]                       # (B, T-1, E)
    seq = jnp.concatenate([features[:, None, :], cap_emb], axis=1)   # (B, T, E)
    T = seq.shape[1]
    H = p["w_hh"].shape[1]
    V = p["w_fc"].shape[1]
    M = T * B

    # time-major, flattened: row t*B + b
    x_flat = jnp.transpose(seq, (1, 0, 2)).reshape(M, E).astype(jnp.bfloat16)

    hseq = pl.pallas_call(
        lstm_kernel,
        out_shape=jax.ShapeDtypeStruct((M, H), jnp.bfloat16),
        in_specs=[_VMEM] * 5,
        out_specs=_VMEM,
        scratch_shapes=[
            pltpu.VMEM((M, 4 * H), jnp.float32),   # hoisted input-gate projections
            pltpu.VMEM((B, H), jnp.float32),       # h state
            pltpu.VMEM((B, H), jnp.float32),       # c state
        ],
        compiler_params=pltpu.CompilerParams(vmem_limit_bytes=_VMEM_LIMIT),
    )(x_flat,
      p["w_ih0"].astype(jnp.bfloat16),
      p["w_ihr"].astype(jnp.bfloat16),
      p["w_hh"].astype(jnp.bfloat16),
      p["b"])

    tn = min(vocab_tile, V)
    assert V % tn == 0 and tn % 128 == 0, (V, tn)
    logits = pl.pallas_call(
        fc_kernel,
        out_shape=jax.ShapeDtypeStruct((M, V), jnp.float32),
        grid_spec=pltpu.PrefetchScalarGridSpec(
            num_scalar_prefetch=0,
            grid=(V // tn,),
            in_specs=[
                pl.BlockSpec((M, H), lambda j: (0, 0)),
                pl.BlockSpec((H, tn), lambda j: (0, j)),
                pl.BlockSpec((1, tn), lambda j: (0, j)),
            ],
            out_specs=pl.BlockSpec((M, tn), lambda j: (0, j)),
        ),
        compiler_params=pltpu.CompilerParams(
            dimension_semantics=("parallel",),
            vmem_limit_bytes=_VMEM_LIMIT),
    )(hseq, p["w_fc"].astype(jnp.bfloat16), p["b_fc"])

    return jnp.transpose(logits.reshape(T, B, V), (1, 0, 2))         # (B, T, V)


def cnn_to_lstm_forward(images, captions, params):
    features = encoder_forward(images, params)
    return decoder_forward(features, captions, params)


# ----------------------------------------------------------------------------
# Deterministic parameter init (PyTorch-like uniform(-1/sqrt(fan_in), ...)).
# Layer-0 LSTM input weights are stored separately so embed_size may differ
# from hidden_size (general nn.LSTM(embed, hidden, L)).
# ----------------------------------------------------------------------------
def init_params(key, *, in_channels, feat_dim, embed_size, hidden_size,
                vocab_size, num_layers):
    E, H, L, V = embed_size, hidden_size, num_layers, vocab_size
    ks = jax.random.split(key, 10)

    def u(k, shape, fan_in):
        b = 1.0 / float(fan_in) ** 0.5
        return jax.random.uniform(k, shape, jnp.float32, -b, b)

    return {
        "w_backbone": u(ks[0], (in_channels, feat_dim), in_channels),
        "w_embed": u(ks[1], (feat_dim, E), feat_dim),
        "b_embed": u(ks[2], (1, E), feat_dim),
        "bn_gamma": jnp.ones((1, E), jnp.float32),
        "bn_beta": jnp.zeros((1, E), jnp.float32),
        "embedding": jax.random.normal(ks[3], (V, E), jnp.float32),
        # weights pre-transposed: x @ w_ih, h @ w_hh ; PyTorch gate order i,f,g,o
        "w_ih0": u(ks[4], (E, 4 * H), H),
        "w_ihr": u(ks[5], (max(L - 1, 1), H, 4 * H), H),
        "w_hh": u(ks[6], (L, H, 4 * H), H),
        "b": u(ks[7], (L, 1, 4 * H), H),        # fused b_ih + b_hh
        "w_fc": u(ks[8], (H, V), H),
        "b_fc": u(ks[9], (1, V), H),
    }


# ----------------------------------------------------------------------------
# Pure-JAX reference with the SAME precision policy (bf16 matmul operands,
# f32 accumulation and gate math) so the check verifies kernel logic tightly.
# ----------------------------------------------------------------------------
def reference_forward(images, captions, p):
    features = encoder_forward(images, p)
    cap_emb = p["embedding"][captions[:, :-1]]
    seq = jnp.concatenate([features[:, None, :], cap_emb], axis=1)    # (B, T, E)
    B, T, _ = seq.shape
    L, H = p["w_hh"].shape[0], p["w_hh"].shape[1]
    x = jnp.transpose(seq, (1, 0, 2)).astype(jnp.bfloat16)            # (T, B, E)

    for layer in range(L):
        wih = (p["w_ih0"] if layer == 0 else p["w_ihr"][layer - 1]).astype(jnp.bfloat16)
        whh = p["w_hh"][layer].astype(jnp.bfloat16)
        gx = (jnp.dot(x.reshape(T * B, -1), wih, preferred_element_type=jnp.float32)
              + p["b"][layer]).reshape(T, B, 4 * H)
        h = jnp.zeros((B, H), jnp.float32)
        c = jnp.zeros((B, H), jnp.float32)
        outs = []
        for t in range(T):
            gates = gx[t] + jnp.dot(h.astype(jnp.bfloat16), whh,
                                    preferred_element_type=jnp.float32)
            i = jax.nn.sigmoid(gates[:, :H])
            f = jax.nn.sigmoid(gates[:, H:2 * H])
            g = jnp.tanh(gates[:, 2 * H:3 * H])
            o = jax.nn.sigmoid(gates[:, 3 * H:])
            c = f * c + i * g
            h = o * jnp.tanh(c)
            outs.append(h.astype(jnp.bfloat16))
        x = jnp.stack(outs, axis=0)                                   # (T, B, H) bf16

    logits = (jnp.dot(x.reshape(T * B, H), p["w_fc"].astype(jnp.bfloat16),
                      preferred_element_type=jnp.float32) + p["b_fc"])
    return jnp.transpose(logits.reshape(T, B, -1), (1, 0, 2))


if __name__ == "__main__":
    B, C, S = 2, 3, 16
    embed_size = hidden_size = 128   # multiple of 128 -> lane-aligned gate slices
    vocab_size = 1024
    num_layers = 2
    feat_dim = 64                    # stands in for resnet.fc.in_features (2048)
    cap_len = 8                      # LSTM T = cap_len (1 feature + cap_len-1 tokens)

    key = jax.random.PRNGKey(0)
    kp, ki, kc = jax.random.split(key, 3)
    params = init_params(kp, in_channels=C, feat_dim=feat_dim,
                         embed_size=embed_size, hidden_size=hidden_size,
                         vocab_size=vocab_size, num_layers=num_layers)
    images = jax.random.normal(ki, (B, C, S, S), jnp.float32)
    captions = jax.random.randint(kc, (B, cap_len), 0, vocab_size, dtype=jnp.int32)

    fwd = jax.jit(cnn_to_lstm_forward)
    out = jax.block_until_ready(fwd(images, captions, params))
    assert out.shape == (B, cap_len, vocab_size), out.shape

    ref = reference_forward(images, captions, params)
    err = float(jnp.max(jnp.abs(out - ref)))
    assert err < 1e-2, f"kernel/reference mismatch: max abs err = {err}"

    print("KERNEL_OK")
</pallas_src>

<mosaic_0001>
module attributes {stable_mosaic.version = 11 : i64} {
  func.func @fc_kernel(%arg0: i32, %arg1: memref<16x128xbf16, #tpu.memory_space<vmem>>, %arg2: memref<128x512xbf16, #tpu.memory_space<vmem>>, %arg3: memref<1x512xf32, #tpu.memory_space<vmem>>, %arg4: memref<16x512xf32, #tpu.memory_space<vmem>>) attributes {dimension_semantics = [#tpu.dimension_semantics<parallel>], iteration_bounds = array<i64: 2>, scalar_prefetch = 0 : i64, scratch_operands = 0 : i64, tpu.core_type = #tpu.core_type<tc>, window_params = [{pipeline_mode = #tpu.pipeline_mode<synchronous>, transform_indices = @transform_0, window_bounds = array<i64: 16, 128>}, {transform_indices = @transform_1, window_bounds = array<i64: 128, 512>}, {transform_indices = @transform_2, window_bounds = array<i64: 1, 512>}, {transform_indices = @transform_3, window_bounds = array<i64: 16, 512>}]} {
    %c0 = arith.constant 0 : index
    %c0_0 = arith.constant 0 : index
    %0 = vector.load %arg1[%c0, %c0_0] : memref<16x128xbf16, #tpu.memory_space<vmem>>, vector<16x128xbf16>
    %c0_1 = arith.constant 0 : index
    %c0_2 = arith.constant 0 : index
    %1 = vector.load %arg2[%c0_1, %c0_2] : memref<128x512xbf16, #tpu.memory_space<vmem>>, vector<128x512xbf16>
    %cst = arith.constant dense<0.000000e+00> : vector<16x512xf32>
    %2 = tpu.matmul %0, %1, %cst {dimension_numbers = #tpu.dot_dimension_numbers<[1], [0], [0], [1], [0, 0, 1, 1], [], []>} : vector<16x128xbf16>, vector<128x512xbf16>, vector<16x512xf32> -> vector<16x512xf32>
    %c0_3 = arith.constant 0 : index
    %c0_4 = arith.constant 0 : index
    %3 = vector.load %arg3[%c0_3, %c0_4] : memref<1x512xf32, #tpu.memory_space<vmem>>, vector<1x512xf32>
    %4 = vector.broadcast %3 : vector<1x512xf32> to vector<16x512xf32>
    %5 = arith.addf %2, %4 : vector<16x512xf32>
    %c0_5 = arith.constant 0 : index
    %c0_6 = arith.constant 0 : index
    %6 = vector.load %arg4[%c0_5, %c0_6] : memref<16x512xf32, #tpu.memory_space<vmem>>, vector<16x512xf32>
    tpu.vector_store %arg4[%c0_5, %c0_6], %5 {strides = array<i32>} : memref<16x512xf32, #tpu.memory_space<vmem>>, vector<16x512xf32>,
    return
  }
  func.func @transform_0(%arg0: i32) -> (i32, i32) {
    %c0_i32 = arith.constant 0 : i32
    %c0_i32_0 = arith.constant 0 : i32
    %c0_i32_1 = arith.constant 0 : i32
    return %c0_i32, %c0_i32_0 : i32, i32
  }
  func.func @transform_1(%arg0: i32) -> (i32, i32) {
    %c0_i32 = arith.constant 0 : i32
    %c0_i32_0 = arith.constant 0 : i32
    return %c0_i32, %arg0 : i32, i32
  }
  func.func @transform_2(%arg0: i32) -> (i32, i32) {
    %c0_i32 = arith.constant 0 : i32
    %c0_i32_0 = arith.constant 0 : i32
    return %c0_i32, %arg0 : i32, i32
  }
  func.func @transform_3(%arg0: i32) -> (i32, i32) {
    %c0_i32 = arith.constant 0 : i32
    %c0_i32_0 = arith.constant 0 : i32
    return %c0_i32, %arg0 : i32, i32
  }
}

module attributes {stable_mosaic.version = 11 : i64} {
  func.func @lstm_kernel(%arg0: memref<16x128xbf16, #tpu.memory_space<vmem>>, %arg1: memref<128x512xbf16, #tpu.memory_space<vmem>>, %arg2: memref<1x128x512xbf16, #tpu.memory_space<vmem>>, %arg3: memref<2x128x512xbf16, #tpu.memory_space<vmem>>, %arg4: memref<2x1x512xf32, #tpu.memory_space<vmem>>, %arg5: memref<16x128xbf16, #tpu.memory_space<vmem>>, %arg6: memref<16x512xf32, #tpu.memory_space<vmem>>, %arg7: memref<2x128xf32, #tpu.memory_space<vmem>>, %arg8: memref<2x128xf32, #tpu.memory_space<vmem>>) attributes {dimension_semantics = [], scalar_prefetch = 0 : i64, scratch_operands = 3 : i64, tpu.core_type = #tpu.core_type<tc>} {
    %c0 = arith.constant 0 : index
    %c0_0 = arith.constant 0 : index
    %c0_1 = arith.constant 0 : index
    %0 = vector.load %arg3[%c0, %c0_0, %c0_1] : memref<2x128x512xbf16, #tpu.memory_space<vmem>>, vector<1x128x512xbf16>
    %1 = vector.shape_cast %0 : vector<1x128x512xbf16> to vector<128x512xbf16>
    %c0_2 = arith.constant 0 : index
    %c0_3 = arith.constant 0 : index
    %2 = vector.load %arg0[%c0_2, %c0_3] : memref<16x128xbf16, #tpu.memory_space<vmem>>, vector<16x128xbf16>
    %c0_4 = arith.constant 0 : index
    %c0_5 = arith.constant 0 : index
    %3 = vector.load %arg1[%c0_4, %c0_5] : memref<128x512xbf16, #tpu.memory_space<vmem>>, vector<128x512xbf16>
    %cst = arith.constant dense<0.000000e+00> : vector<16x512xf32>
    %4 = tpu.matmul %2, %3, %cst {dimension_numbers = #tpu.dot_dimension_numbers<[1], [0], [0], [1], [0, 0, 1, 1], [], []>} : vector<16x128xbf16>, vector<128x512xbf16>, vector<16x512xf32> -> vector<16x512xf32>
    %c0_6 = arith.constant 0 : index
    %c0_7 = arith.constant 0 : index
    %c0_8 = arith.constant 0 : index
    %5 = vector.load %arg4[%c0_6, %c0_7, %c0_8] : memref<2x1x512xf32, #tpu.memory_space<vmem>>, vector<1x1x512xf32>
    %6 = vector.shape_cast %5 : vector<1x1x512xf32> to vector<1x512xf32>
    %7 = vector.broadcast %6 : vector<1x512xf32> to vector<16x512xf32>
    %8 = arith.addf %4, %7 : vector<16x512xf32>
    %c0_9 = arith.constant 0 : index
    %c0_10 = arith.constant 0 : index
    %9 = vector.load %arg6[%c0_9, %c0_10] : memref<16x512xf32, #tpu.memory_space<vmem>>, vector<16x512xf32>
    tpu.vector_store %arg6[%c0_9, %c0_10], %8 {strides = array<i32>} : memref<16x512xf32, #tpu.memory_space<vmem>>, vector<16x512xf32>,
    %cst_11 = arith.constant 0.000000e+00 : f32
    %10 = vector.broadcast %cst_11 : f32 to vector<2x128xf32>
    %c0_12 = arith.constant 0 : index
    %c0_13 = arith.constant 0 : index
    %11 = vector.load %arg7[%c0_12, %c0_13] : memref<2x128xf32, #tpu.memory_space<vmem>>, vector<2x128xf32>
    tpu.vector_store %arg7[%c0_12, %c0_13], %10 {strides = array<i32>} : memref<2x128xf32, #tpu.memory_space<vmem>>, vector<2x128xf32>,
    %cst_14 = arith.constant 0.000000e+00 : f32
    %12 = vector.broadcast %cst_14 : f32 to vector<2x128xf32>
    %c0_15 = arith.constant 0 : index
    %c0_16 = arith.constant 0 : index
    %13 = vector.load %arg8[%c0_15, %c0_16] : memref<2x128xf32, #tpu.memory_space<vmem>>, vector<2x128xf32>
    tpu.vector_store %arg8[%c0_15, %c0_16], %12 {strides = array<i32>} : memref<2x128xf32, #tpu.memory_space<vmem>>, vector<2x128xf32>,
    %c0_17 = arith.constant 0 : index
    %c0_18 = arith.constant 0 : index
    %14 = vector.load %arg6[%c0_17, %c0_18] : memref<16x512xf32, #tpu.memory_space<vmem>>, vector<2x512xf32>
    %c0_19 = arith.constant 0 : index
    %c0_20 = arith.constant 0 : index
    %15 = vector.load %arg7[%c0_19, %c0_20] : memref<2x128xf32, #tpu.memory_space<vmem>>, vector<2x128xf32>
    %16 = arith.truncf %15 : vector<2x128xf32> to vector<2x128xbf16>
    %cst_21 = arith.constant dense<0.000000e+00> : vector<2x512xf32>
    %17 = tpu.matmul %16, %1, %cst_21 {dimension_numbers = #tpu.dot_dimension_numbers<[1], [0], [0], [1], [0, 0, 1, 1], [], []>} : vector<2x128xbf16>, vector<128x512xbf16>, vector<2x512xf32> -> vector<2x512xf32>
    %18 = arith.addf %14, %17 : vector<2x512xf32>
    %19 = vector.extract_strided_slice %18 {offsets = [0, 0], sizes = [2, 128], strides = [1, 1]} : vector<2x512xf32> to vector<2x128xf32>
    %20 = arith.negf %19 : vector<2x128xf32>
    %21 = math.exp %20 : vector<2x128xf32>
    %cst_22 = arith.constant 1.000000e+00 : f32
    %22 = vector.broadcast %cst_22 : f32 to vector<2x128xf32>
    %23 = arith.addf %22, %21 : vector<2x128xf32>
    %24 = arith.divf %22, %23 : vector<2x128xf32>
    %25 = vector.extract_strided_slice %18 {offsets = [0, 128], sizes = [2, 128], strides = [1, 1]} : vector<2x512xf32> to vector<2x128xf32>
    %26 = arith.negf %25 : vector<2x128xf32>
    %27 = math.exp %26 : vector<2x128xf32>
    %cst_23 = arith.constant 1.000000e+00 : f32
    %28 = vector.broadcast %cst_23 : f32 to vector<2x128xf32>
    %29 = arith.addf %28, %27 : vector<2x128xf32>
    %30 = arith.divf %28, %29 : vector<2x128xf32>
    %31 = vector.extract_strided_slice %18 {offsets = [0, 256], sizes = [2, 128], strides = [1, 1]} : vector<2x512xf32> to vector<2x128xf32>
    %32 = math.tanh %31 : vector<2x128xf32>
    %33 = vector.extract_strided_slice %18 {offsets = [0, 384], sizes = [2, 128], strides = [1, 1]} : vector<2x512xf32> to vector<2x128xf32>
    %34 = arith.negf %33 : vector<2x128xf32>
    %35 = math.exp %34 : vector<2x128xf32>
    %cst_24 = arith.constant 1.000000e+00 : f32
    %36 = vector.broadcast %cst_24 : f32 to vector<2x128xf32>
    %37 = arith.addf %36, %35 : vector<2x128xf32>
    %38 = arith.divf %36, %37 : vector<2x128xf32>
    %c0_25 = arith.constant 0 : index
    %c0_26 = arith.constant 0 : index
    %39 = vector.load %arg8[%c0_25, %c0_26] : memref<2x128xf32, #tpu.memory_space<vmem>>, vector<2x128xf32>
    %40 = arith.mulf %30, %39 : vector<2x128xf32>
    %41 = arith.mulf %24, %32 : vector<2x128xf32>
    %42 = arith.addf %40, %41 : vector<2x128xf32>
    %43 = math.tanh %42 : vector<2x128xf32>
    %44 = arith.mulf %38, %43 : vector<2x128xf32>
    %c0_27 = arith.constant 0 : index
    %c0_28 = arith.constant 0 : index
    %45 = vector.load %arg8[%c0_27, %c0_28] : memref<2x128xf32, #tpu.memory_space<vmem>>, vector<2x128xf32>
    tpu.vector_store %arg8[%c0_27, %c0_28], %42 {strides = array<i32>} : memref<2x128xf32, #tpu.memory_space<vmem>>, vector<2x128xf32>,
    %c0_29 = arith.constant 0 : index
    %c0_30 = arith.constant 0 : index
    %46 = vector.load %arg7[%c0_29, %c0_30] : memref<2x128xf32, #tpu.memory_space<vmem>>, vector<2x128xf32>
    tpu.vector_store %arg7[%c0_29, %c0_30], %44 {strides = array<i32>} : memref<2x128xf32, #tpu.memory_space<vmem>>, vector<2x128xf32>,
    %47 = arith.truncf %44 : vector<2x128xf32> to vector<2x128xbf16>
    %c0_31 = arith.constant 0 : index
    %c0_32 = arith.constant 0 : index
    %48 = vector.load %arg5[%c0_31, %c0_32] : memref<16x128xbf16, #tpu.memory_space<vmem>>, vector<2x128xbf16>
    tpu.vector_store %arg5[%c0_31, %c0_32], %47 {strides = array<i32>} : memref<16x128xbf16, #tpu.memory_space<vmem>>, vector<2x128xbf16>,
    %c2 = arith.constant 2 : index
    %c0_33 = arith.constant 0 : index
    %49 = vector.load %arg6[%c2, %c0_33] : memref<16x512xf32, #tpu.memory_space<vmem>>, vector<2x512xf32>
    %c0_34 = arith.constant 0 : index
    %c0_35 = arith.constant 0 : index
    %50 = vector.load %arg7[%c0_34, %c0_35] : memref<2x128xf32, #tpu.memory_space<vmem>>, vector<2x128xf32>
    %51 = arith.truncf %50 : vector<2x128xf32> to vector<2x128xbf16>
    %cst_36 = arith.constant dense<0.000000e+00> : vector<2x512xf32>
    %52 = tpu.matmul %51, %1, %cst_36 {dimension_numbers = #tpu.dot_dimension_numbers<[1], [0], [0], [1], [0, 0, 1, 1], [], []>} : vector<2x128xbf16>, vector<128x512xbf16>, vector<2x512xf32> -> vector<2x512xf32>
    %53 = arith.addf %49, %52 : vector<2x512xf32>
    %54 = vector.extract_strided_slice %53 {offsets = [0, 0], sizes = [2, 128], strides = [1, 1]} : vector<2x512xf32> to vector<2x128xf32>
    %55 = arith.negf %54 : vector<2x128xf32>
    %56 = math.exp %55 : vector<2x128xf32>
    %cst_37 = arith.constant 1.000000e+00 : f32
    %57 = vector.broadcast %cst_37 : f32 to vector<2x128xf32>
    %58 = arith.addf %57, %56 : vector<2x128xf32>
    %59 = arith.divf %57, %58 : vector<2x128xf32>
    %60 = vector.extract_strided_slice %53 {offsets = [0, 128], sizes = [2, 128], strides = [1, 1]} : vector<2x512xf32> to vector<2x128xf32>
    %61 = arith.negf %60 : vector<2x128xf32>
    %62 = math.exp %61 : vector<2x128xf32>
    %cst_38 = arith.constant 1.000000e+00 : f32
    %63 = vector.broadcast %cst_38 : f32 to vector<2x128xf32>
    %64 = arith.addf %63, %62 : vector<2x128xf32>
    %65 = arith.divf %63, %64 : vector<2x128xf32>
    %66 = vector.extract_strided_slice %53 {offsets = [0, 256], sizes = [2, 128], strides = [1, 1]} : vector<2x512xf32> to vector<2x128xf32>
    %67 = math.tanh %66 : vector<2x128xf32>
    %68 = vector.extract_strided_slice %53 {offsets = [0, 384], sizes = [2, 128], strides = [1, 1]} : vector<2x512xf32> to vector<2x128xf32>
    %69 = arith.negf %68 : vector<2x128xf32>
    %70 = math.exp %69 : vector<2x128xf32>
    %cst_39 = arith.constant 1.000000e+00 : f32
    %71 = vector.broadcast %cst_39 : f32 to vector<2x128xf32>
    %72 = arith.addf %71, %70 : vector<2x128xf32>
    %73 = arith.divf %71, %72 : vector<2x128xf32>
    %c0_40 = arith.constant 0 : index
    %c0_41 = arith.constant 0 : index
    %74 = vector.load %arg8[%c0_40, %c0_41] : memref<2x128xf32, #tpu.memory_space<vmem>>, vector<2x128xf32>
    %75 = arith.mulf %65, %74 : vector<2x128xf32>
    %76 = arith.mulf %59, %67 : vector<2x128xf32>
    %77 = arith.addf %75, %76 : vector<2x128xf32>
    %78 = math.tanh %77 : vector<2x128xf32>
    %79 = arith.mulf %73, %78 : vector<2x128xf32>
    %c0_42 = arith.constant 0 : index
    %c0_43 = arith.constant 0 : index
    %80 = vector.load %arg8[%c0_42, %c0_43] : memref<2x128xf32, #tpu.memory_space<vmem>>, vector<2x128xf32>
    tpu.vector_store %arg8[%c0_42, %c0_43], %77 {strides = array<i32>} : memref<2x128xf32, #tpu.memory_space<vmem>>, vector<2x128xf32>,
    %c0_44 = arith.constant 0 : index
    %c0_45 = arith.constant 0 : index
    %81 = vector.load %arg7[%c0_44, %c0_45] : memref<2x128xf32, #tpu.memory_space<vmem>>, vector<2x128xf32>
    tpu.vector_store %arg7[%c0_44, %c0_45], %79 {strides = array<i32>} : memref<2x128xf32, #tpu.memory_space<vmem>>, vector<2x128xf32>,
    %82 = arith.truncf %79 : vector<2x128xf32> to vector<2x128xbf16>
    %c2_46 = arith.constant 2 : index
    %c0_47 = arith.constant 0 : index
    %83 = vector.load %arg5[%c2_46, %c0_47] : memref<16x128xbf16, #tpu.memory_space<vmem>>, vector<2x128xbf16>
    tpu.vector_store %arg5[%c2_46, %c0_47], %82 {strides = array<i32>} : memref<16x128xbf16, #tpu.memory_space<vmem>>, vector<2x128xbf16>,
    %c4 = arith.constant 4 : index
    %c0_48 = arith.constant 0 : index
    %84 = vector.load %arg6[%c4, %c0_48] : memref<16x512xf32, #tpu.memory_space<vmem>>, vector<2x512xf32>
    %c0_49 = arith.constant 0 : index
    %c0_50 = arith.constant 0 : index
    %85 = vector.load %arg7[%c0_49, %c0_50] : memref<2x128xf32, #tpu.memory_space<vmem>>, vector<2x128xf32>
    %86 = arith.truncf %85 : vector<2x128xf32> to vector<2x128xbf16>
    %cst_51 = arith.constant dense<0.000000e+00> : vector<2x512xf32>
    %87 = tpu.matmul %86, %1, %cst_51 {dimension_numbers = #tpu.dot_dimension_numbers<[1], [0], [0], [1], [0, 0, 1, 1], [], []>} : vector<2x128xbf16>, vector<128x512xbf16>, vector<2x512xf32> -> vector<2x512xf32>
    %88 = arith.addf %84, %87 : vector<2x512xf32>
    %89 = vector.extract_strided_slice %88 {offsets = [0, 0], sizes = [2, 128], strides = [1, 1]} : vector<2x512xf32> to vector<2x128xf32>
    %90 = arith.negf %89 : vector<2x128xf32>
    %91 = math.exp %90 : vector<2x128xf32>
    %cst_52 = arith.constant 1.000000e+00 : f32
    %92 = vector.broadcast %cst_52 : f32 to vector<2x128xf32>
    %93 = arith.addf %92, %91 : vector<2x128xf32>
    %94 = arith.divf %92, %93 : vector<2x128xf32>
    %95 = vector.extract_strided_slice %88 {offsets = [0, 128], sizes = [2, 128], strides = [1, 1]} : vector<2x512xf32> to vector<2x128xf32>
    %96 = arith.negf %95 : vector<2x128xf32>
    %97 = math.exp %96 : vector<2x128xf32>
    %cst_53 = arith.constant 1.000000e+00 : f32
    %98 = vector.broadcast %cst_53 : f32 to vector<2x128xf32>
    %99 = arith.addf %98, %97 : vector<2x128xf32>
    %100 = arith.divf %98, %99 : vector<2x128xf32>
    %101 = vector.extract_strided_slice %88 {offsets = [0, 256], sizes = [2, 128], strides = [1, 1]} : vector<2x512xf32> to vector<2x128xf32>
    %102 = math.tanh %101 : vector<2x128xf32>
    %103 = vector.extract_strided_slice %88 {offsets = [0, 384], sizes = [2, 128], strides = [1, 1]} : vector<2x512xf32> to vector<2x128xf32>
    %104 = arith.negf %103 : vector<2x128xf32>
    %105 = math.exp %104 : vector<2x128xf32>
    %cst_54 = arith.constant 1.000000e+00 : f32
    %106 = vector.broadcast %cst_54 : f32 to vector<2x128xf32>
    %107 = arith.addf %106, %105 : vector<2x128xf32>
    %108 = arith.divf %106, %107 : vector<2x128xf32>
    %c0_55 = arith.constant 0 : index
    %c0_56 = arith.constant 0 : index
    %109 = vector.load %arg8[%c0_55, %c0_56] : memref<2x128xf32, #tpu.memory_space<vmem>>, vector<2x128xf32>
    %110 = arith.mulf %100, %109 : vector<2x128xf32>
    %111 = arith.mulf %94, %102 : vector<2x128xf32>
    %112 = arith.addf %110, %111 : vector<2x128xf32>
    %113 = math.tanh %112 : vector<2x128xf32>
    %114 = arith.mulf %108, %113 : vector<2x128xf32>
    %c0_57 = arith.constant 0 : index
    %c0_58 = arith.constant 0 : index
    %115 = vector.load %arg8[%c0_57, %c0_58] : memref<2x128xf32, #tpu.memory_space<vmem>>, vector<2x128xf32>
    tpu.vector_store %arg8[%c0_57, %c0_58], %112 {strides = array<i32>} : memref<2x128xf32, #tpu.memory_space<vmem>>, vector<2x128xf32>,
    %c0_59 = arith.constant 0 : index
    %c0_60 = arith.constant 0 : index
    %116 = vector.load %arg7[%c0_59, %c0_60] : memref<2x128xf32, #tpu.memory_space<vmem>>, vector<2x128xf32>
    tpu.vector_store %arg7[%c0_59, %c0_60], %114 {strides = array<i32>} : memref<2x128xf32, #tpu.memory_space<vmem>>, vector<2x128xf32>,
    %117 = arith.truncf %114 : vector<2x128xf32> to vector<2x128xbf16>
    %c4_61 = arith.constant 4 : index
    %c0_62 = arith.constant 0 : index
    %118 = vector.load %arg5[%c4_61, %c0_62] : memref<16x128xbf16, #tpu.memory_space<vmem>>, vector<2x128xbf16>
    tpu.vector_store %arg5[%c4_61, %c0_62], %117 {strides = array<i32>} : memref<16x128xbf16, #tpu.memory_space<vmem>>, vector<2x128xbf16>,
    %c6 = arith.constant 6 : index
    %c0_63 = arith.constant 0 : index
    %119 = vector.load %arg6[%c6, %c0_63] : memref<16x512xf32, #tpu.memory_space<vmem>>, vector<2x512xf32>
    %c0_64 = arith.constant 0 : index
    %c0_65 = arith.constant 0 : index
    %120 = vector.load %arg7[%c0_64, %c0_65] : memref<2x128xf32, #tpu.memory_space<vmem>>, vector<2x128xf32>
    %121 = arith.truncf %120 : vector<2x128xf32> to vector<2x128xbf16>
    %cst_66 = arith.constant dense<0.000000e+00> : vector<2x512xf32>
    %122 = tpu.matmul %121, %1, %cst_66 {dimension_numbers = #tpu.dot_dimension_numbers<[1], [0], [0], [1], [0, 0, 1, 1], [], []>} : vector<2x128xbf16>, vector<128x512xbf16>, vector<2x512xf32> -> vector<2x512xf32>
    %123 = arith.addf %119, %122 : vector<2x512xf32>
    %124 = vector.extract_strided_slice %123 {offsets = [0, 0], sizes = [2, 128], strides = [1, 1]} : vector<2x512xf32> to vector<2x128xf32>
    %125 = arith.negf %124 : vector<2x128xf32>
    %126 = math.exp %125 : vector<2x128xf32>
    %cst_67 = arith.constant 1.000000e+00 : f32
    %127 = vector.broadcast %cst_67 : f32 to vector<2x128xf32>
    %128 = arith.addf %127, %126 : vector<2x128xf32>
    %129 = arith.divf %127, %128 : vector<2x128xf32>
    %130 = vector.extract_strided_slice %123 {offsets = [0, 128], sizes = [2, 128], strides = [1, 1]} : vector<2x512xf32> to vector<2x128xf32>
    %131 = arith.negf %130 : vector<2x128xf32>
    %132 = math.exp %131 : vector<2x128xf32>
    %cst_68 = arith.constant 1.000000e+00 : f32
    %133 = vector.broadcast %cst_68 : f32 to vector<2x128xf32>
    %134 = arith.addf %133, %132 : vector<2x128xf32>
    %135 = arith.divf %133, %134 : vector<2x128xf32>
    %136 = vector.extract_strided_slice %123 {offsets = [0, 256], sizes = [2, 128], strides = [1, 1]} : vector<2x512xf32> to vector<2x128xf32>
    %137 = math.tanh %136 : vector<2x128xf32>
    %138 = vector.extract_strided_slice %123 {offsets = [0, 384], sizes = [2, 128], strides = [1, 1]} : vector<2x512xf32> to vector<2x128xf32>
    %139 = arith.negf %138 : vector<2x128xf32>
    %140 = math.exp %139 : vector<2x128xf32>
    %cst_69 = arith.constant 1.000000e+00 : f32
    %141 = vector.broadcast %cst_69 : f32 to vector<2x128xf32>
    %142 = arith.addf %141, %140 : vector<2x128xf32>
    %143 = arith.divf %141, %142 : vector<2x128xf32>
    %c0_70 = arith.constant 0 : index
    %c0_71 = arith.constant 0 : index
    %144 = vector.load %arg8[%c0_70, %c0_71] : memref<2x128xf32, #tpu.memory_space<vmem>>, vector<2x128xf32>
    %145 = arith.mulf %135, %144 : vector<2x128xf32>
    %146 = arith.mulf %129, %137 : vector<2x128xf32>
    %147 = arith.addf %145, %146 : vector<2x128xf32>
    %148 = math.tanh %147 : vector<2x128xf32>
    %149 = arith.mulf %143, %148 : vector<2x128xf32>
    %c0_72 = arith.constant 0 : index
    %c0_73 = arith.constant 0 : index
    %150 = vector.load %arg8[%c0_72, %c0_73] : memref<2x128xf32, #tpu.memory_space<vmem>>, vector<2x128xf32>
    tpu.vector_store %arg8[%c0_72, %c0_73], %147 {strides = array<i32>} : memref<2x128xf32, #tpu.memory_space<vmem>>, vector<2x128xf32>,
    %c0_74 = arith.constant 0 : index
    %c0_75 = arith.constant 0 : index
    %151 = vector.load %arg7[%c0_74, %c0_75] : memref<2x128xf32, #tpu.memory_space<vmem>>, vector<2x128xf32>
    tpu.vector_store %arg7[%c0_74, %c0_75], %149 {strides = array<i32>} : memref<2x128xf32, #tpu.memory_space<vmem>>, vector<2x128xf32>,
    %152 = arith.truncf %149 : vector<2x128xf32> to vector<2x128xbf16>
    %c6_76 = arith.constant 6 : index
    %c0_77 = arith.constant 0 : index
    %153 = vector.load %arg5[%c6_76, %c0_77] : memref<16x128xbf16, #tpu.memory_space<vmem>>, vector<2x128xbf16>
    tpu.vector_store %arg5[%c6_76, %c0_77], %152 {strides = array<i32>} : memref<16x128xbf16, #tpu.memory_space<vmem>>, vector<2x128xbf16>,
    %c8 = arith.constant 8 : index
    %c0_78 = arith.constant 0 : index
    %154 = vector.load %arg6[%c8, %c0_78] : memref<16x512xf32, #tpu.memory_space<vmem>>, vector<2x512xf32>
    %c0_79 = arith.constant 0 : index
    %c0_80 = arith.constant 0 : index
    %155 = vector.load %arg7[%c0_79, %c0_80] : memref<2x128xf32, #tpu.memory_space<vmem>>, vector<2x128xf32>
    %156 = arith.truncf %155 : vector<2x128xf32> to vector<2x128xbf16>
    %cst_81 = arith.constant dense<0.000000e+00> : vector<2x512xf32>
    %157 = tpu.matmul %156, %1, %cst_81 {dimension_numbers = #tpu.dot_dimension_numbers<[1], [0], [0], [1], [0, 0, 1, 1], [], []>} : vector<2x128xbf16>, vector<128x512xbf16>, vector<2x512xf32> -> vector<2x512xf32>
    %158 = arith.addf %154, %157 : vector<2x512xf32>
    %159 = vector.extract_strided_slice %158 {offsets = [0, 0], sizes = [2, 128], strides = [1, 1]} : vector<2x512xf32> to vector<2x128xf32>
    %160 = arith.negf %159 : vector<2x128xf32>
    %161 = math.exp %160 : vector<2x128xf32>
    %cst_82 = arith.constant 1.000000e+00 : f32
    %162 = vector.broadcast %cst_82 : f32 to vector<2x128xf32>
    %163 = arith.addf %162, %161 : vector<2x128xf32>
    %164 = arith.divf %162, %163 : vector<2x128xf32>
    %165 = vector.extract_strided_slice %158 {offsets = [0, 128], sizes = [2, 128], strides = [1, 1]} : vector<2x512xf32> to vector<2x128xf32>
    %166 = arith.negf %165 : vector<2x128xf32>
    %167 = math.exp %166 : vector<2x128xf32>
    %cst_83 = arith.constant 1.000000e+00 : f32
    %168 = vector.broadcast %cst_83 : f32 to vector<2x128xf32>
    %169 = arith.addf %168, %167 : vector<2x128xf32>
    %170 = arith.divf %168, %169 : vector<2x128xf32>
    %171 = vector.extract_strided_slice %158 {offsets = [0, 256], sizes = [2, 128], strides = [1, 1]} : vector<2x512xf32> to vector<2x128xf32>
    %172 = math.tanh %171 : vector<2x128xf32>
    %173 = vector.extract_strided_slice %158 {offsets = [0, 384], sizes = [2, 128], strides = [1, 1]} : vector<2x512xf32> to vector<2x128xf32>
    %174 = arith.negf %173 : vector<2x128xf32>
    %175 = math.exp %174 : vector<2x128xf32>
    %cst_84 = arith.constant 1.000000e+00 : f32
    %176 = vector.broadcast %cst_84 : f32 to vector<2x128xf32>
    %177 = arith.addf %176, %175 : vector<2x128xf32>
    %178 = arith.divf %176, %177 : vector<2x128xf32>
    %c0_85 = arith.constant 0 : index
    %c0_86 = arith.constant 0 : index
    %179 = vector.load %arg8[%c0_85, %c0_86] : memref<2x128xf32, #tpu.memory_space<vmem>>, vector<2x128xf32>
    %180 = arith.mulf %170, %179 : vector<2x128xf32>
    %181 = arith.mulf %164, %172 : vector<2x128xf32>
    %182 = arith.addf %180, %181 : vector<2x128xf32>
    %183 = math.tanh %182 : vector<2x128xf32>
    %184 = arith.mulf %178, %183 : vector<2x128xf32>
    %c0_87 = arith.constant 0 : index
    %c0_88 = arith.constant 0 : index
    %185 = vector.load %arg8[%c0_87, %c0_88] : memref<2x128xf32, #tpu.memory_space<vmem>>, vector<2x128xf32>
    tpu.vector_store %arg8[%c0_87, %c0_88], %182 {strides = array<i32>} : memref<2x128xf32, #tpu.memory_space<vmem>>, vector<2x128xf32>,
    %c0_89 = arith.constant 0 : index
    %c0_90 = arith.constant 0 : index
    %186 = vector.load %arg7[%c0_89, %c0_90] : memref<2x128xf32, #tpu.memory_space<vmem>>, vector<2x128xf32>
    tpu.vector_store %arg7[%c0_89, %c0_90], %184 {strides = array<i32>} : memref<2x128xf32, #tpu.memory_space<vmem>>, vector<2x128xf32>,
    %187 = arith.truncf %184 : vector<2x128xf32> to vector<2x128xbf16>
    %c8_91 = arith.constant 8 : index
    %c0_92 = arith.constant 0 : index
    %188 = vector.load %arg5[%c8_91, %c0_92] : memref<16x128xbf16, #tpu.memory_space<vmem>>, vector<2x128xbf16>
    tpu.vector_store %arg5[%c8_91, %c0_92], %187 {strides = array<i32>} : memref<16x128xbf16, #tpu.memory_space<vmem>>, vector<2x128xbf16>,
    %c10 = arith.constant 10 : index
    %c0_93 = arith.constant 0 : index
    %189 = vector.load %arg6[%c10, %c0_93] : memref<16x512xf32, #tpu.memory_space<vmem>>, vector<2x512xf32>
    %c0_94 = arith.constant 0 : index
    %c0_95 = arith.constant 0 : index
    %190 = vector.load %arg7[%c0_94, %c0_95] : memref<2x128xf32, #tpu.memory_space<vmem>>, vector<2x128xf32>
    %191 = arith.truncf %190 : vector<2x128xf32> to vector<2x128xbf16>
    %cst_96 = arith.constant dense<0.000000e+00> : vector<2x512xf32>
    %192 = tpu.matmul %191, %1, %cst_96 {dimension_numbers = #tpu.dot_dimension_numbers<[1], [0], [0], [1], [0, 0, 1, 1], [], []>} : vector<2x128xbf16>, vector<128x512xbf16>, vector<2x512xf32> -> vector<2x512xf32>
    %193 = arith.addf %189, %192 : vector<2x512xf32>
    %194 = vector.extract_strided_slice %193 {offsets = [0, 0], sizes = [2, 128], strides = [1, 1]} : vector<2x512xf32> to vector<2x128xf32>
    %195 = arith.negf %194 : vector<2x128xf32>
    %196 = math.exp %195 : vector<2x128xf32>
    %cst_97 = arith.constant 1.000000e+00 : f32
    %197 = vector.broadcast %cst_97 : f32 to vector<2x128xf32>
    %198 = arith.addf %197, %196 : vector<2x128xf32>
    %199 = arith.divf %197, %198 : vector<2x128xf32>
    %200 = vector.extract_strided_slice %193 {offsets = [0, 128], sizes = [2, 128], strides = [1, 1]} : vector<2x512xf32> to vector<2x128xf32>
    %201 = arith.negf %200 : vector<2x128xf32>
    %202 = math.exp %201 : vector<2x128xf32>
    %cst_98 = arith.constant 1.000000e+00 : f32
    %203 = vector.broadcast %cst_98 : f32 to vector<2x128xf32>
    %204 = arith.addf %203, %202 : vector<2x128xf32>
    %205 = arith.divf %203, %204 : vector<2x128xf32>
    %206 = vector.extract_strided_slice %193 {offsets = [0, 256], sizes = [2, 128], strides = [1, 1]} : vector<2x512xf32> to vector<2x128xf32>
    %207 = math.tanh %206 : vector<2x128xf32>
    %208 = vector.extract_strided_slice %193 {offsets = [0, 384], sizes = [2, 128], strides = [1, 1]} : vector<2x512xf32> to vector<2x128xf32>
    %209 = arith.negf %208 : vector<2x128xf32>
    %210 = math.exp %209 : vector<2x128xf32>
    %cst_99 = arith.constant 1.000000e+00 : f32
    %211 = vector.broadcast %cst_99 : f32 to vector<2x128xf32>
    %212 = arith.addf %211, %210 : vector<2x128xf32>
    %213 = arith.divf %211, %212 : vector<2x128xf32>
    %c0_100 = arith.constant 0 : index
    %c0_101 = arith.constant 0 : index
    %214 = vector.load %arg8[%c0_100, %c0_101] : memref<2x128xf32, #tpu.memory_space<vmem>>, vector<2x128xf32>
    %215 = arith.mulf %205, %214 : vector<2x128xf32>
    %216 = arith.mulf %199, %207 : vector<2x128xf32>
    %217 = arith.addf %215, %216 : vector<2x128xf32>
    %218 = math.tanh %217 : vector<2x128xf32>
    %219 = arith.mulf %213, %218 : vector<2x128xf32>
    %c0_102 = arith.constant 0 : index
    %c0_103 = arith.constant 0 : index
    %220 = vector.load %arg8[%c0_102, %c0_103] : memref<2x128xf32, #tpu.memory_space<vmem>>, vector<2x128xf32>
    tpu.vector_store %arg8[%c0_102, %c0_103], %217 {strides = array<i32>} : memref<2x128xf32, #tpu.memory_space<vmem>>, vector<2x128xf32>,
    %c0_104 = arith.constant 0 : index
    %c0_105 = arith.constant 0 : index
    %221 = vector.load %arg7[%c0_104, %c0_105] : memref<2x128xf32, #tpu.memory_space<vmem>>, vector<2x128xf32>
    tpu.vector_store %arg7[%c0_104, %c0_105], %219 {strides = array<i32>} : memref<2x128xf32, #tpu.memory_space<vmem>>, vector<2x128xf32>,
    %222 = arith.truncf %219 : vector<2x128xf32> to vector<2x128xbf16>
    %c10_106 = arith.constant 10 : index
    %c0_107 = arith.constant 0 : index
    %223 = vector.load %arg5[%c10_106, %c0_107] : memref<16x128xbf16, #tpu.memory_space<vmem>>, vector<2x128xbf16>
    tpu.vector_store %arg5[%c10_106, %c0_107], %222 {strides = array<i32>} : memref<16x128xbf16, #tpu.memory_space<vmem>>, vector<2x128xbf16>,
    %c12 = arith.constant 12 : index
    %c0_108 = arith.constant 0 : index
    %224 = vector.load %arg6[%c12, %c0_108] : memref<16x512xf32, #tpu.memory_space<vmem>>, vector<2x512xf32>
    %c0_109 = arith.constant 0 : index
    %c0_110 = arith.constant 0 : index
    %225 = vector.load %arg7[%c0_109, %c0_110] : memref<2x128xf32, #tpu.memory_space<vmem>>, vector<2x128xf32>
    %226 = arith.truncf %225 : vector<2x128xf32> to vector<2x128xbf16>
    %cst_111 = arith.constant dense<0.000000e+00> : vector<2x512xf32>
    %227 = tpu.matmul %226, %1, %cst_111 {dimension_numbers = #tpu.dot_dimension_numbers<[1], [0], [0], [1], [0, 0, 1, 1], [], []>} : vector<2x128xbf16>, vector<128x512xbf16>, vector<2x512xf32> -> vector<2x512xf32>
    %228 = arith.addf %224, %227 : vector<2x512xf32>
    %229 = vector.extract_strided_slice %228 {offsets = [0, 0], sizes = [2, 128], strides = [1, 1]} : vector<2x512xf32> to vector<2x128xf32>
    %230 = arith.negf %229 : vector<2x128xf32>
    %231 = math.exp %230 : vector<2x128xf32>
    %cst_112 = arith.constant 1.000000e+00 : f32
    %232 = vector.broadcast %cst_112 : f32 to vector<2x128xf32>
    %233 = arith.addf %232, %231 : vector<2x128xf32>
    %234 = arith.divf %232, %233 : vector<2x128xf32>
    %235 = vector.extract_strided_slice %228 {offsets = [0, 128], sizes = [2, 128], strides = [1, 1]} : vector<2x512xf32> to vector<2x128xf32>
    %236 = arith.negf %235 : vector<2x128xf32>
    %237 = math.exp %236 : vector<2x128xf32>
    %cst_113 = arith.constant 1.000000e+00 : f32
    %238 = vector.broadcast %cst_113 : f32 to vector<2x128xf32>
    %239 = arith.addf %238, %237 : vector<2x128xf32>
    %240 = arith.divf %238, %239 : vector<2x128xf32>
    %241 = vector.extract_strided_slice %228 {offsets = [0, 256], sizes = [2, 128], strides = [1, 1]} : vector<2x512xf32> to vector<2x128xf32>
    %242 = math.tanh %241 : vector<2x128xf32>
    %243 = vector.extract_strided_slice %228 {offsets = [0, 384], sizes = [2, 128], strides = [1, 1]} : vector<2x512xf32> to vector<2x128xf32>
    %244 = arith.negf %243 : vector<2x128xf32>
    %245 = math.exp %244 : vector<2x128xf32>
    %cst_114 = arith.constant 1.000000e+00 : f32
    %246 = vector.broadcast %cst_114 : f32 to vector<2x128xf32>
    %247 = arith.addf %246, %245 : vector<2x128xf32>
    %248 = arith.divf %246, %247 : vector<2x128xf32>
    %c0_115 = arith.constant 0 : index
    %c0_116 = arith.constant 0 : index
    %249 = vector.load %arg8[%c0_115, %c0_116] : memref<2x128xf32, #tpu.memory_space<vmem>>, vector<2x128xf32>
    %250 = arith.mulf %240, %249 : vector<2x128xf32>
    %251 = arith.mulf %234, %242 : vector<2x128xf32>
    %252 = arith.addf %250, %251 : vector<2x128xf32>
    %253 = math.tanh %252 : vector<2x128xf32>
    %254 = arith.mulf %248, %253 : vector<2x128xf32>
    %c0_117 = arith.constant 0 : index
    %c0_118 = arith.constant 0 : index
    %255 = vector.load %arg8[%c0_117, %c0_118] : memref<2x128xf32, #tpu.memory_space<vmem>>, vector<2x128xf32>
    tpu.vector_store %arg8[%c0_117, %c0_118], %252 {strides = array<i32>} : memref<2x128xf32, #tpu.memory_space<vmem>>, vector<2x128xf32>,
    %c0_119 = arith.constant 0 : index
    %c0_120 = arith.constant 0 : index
    %256 = vector.load %arg7[%c0_119, %c0_120] : memref<2x128xf32, #tpu.memory_space<vmem>>, vector<2x128xf32>
    tpu.vector_store %arg7[%c0_119, %c0_120], %254 {strides = array<i32>} : memref<2x128xf32, #tpu.memory_space<vmem>>, vector<2x128xf32>,
    %257 = arith.truncf %254 : vector<2x128xf32> to vector<2x128xbf16>
    %c12_121 = arith.constant 12 : index
    %c0_122 = arith.constant 0 : index
    %258 = vector.load %arg5[%c12_121, %c0_122] : memref<16x128xbf16, #tpu.memory_space<vmem>>, vector<2x128xbf16>
    tpu.vector_store %arg5[%c12_121, %c0_122], %257 {strides = array<i32>} : memref<16x128xbf16, #tpu.memory_space<vmem>>, vector<2x128xbf16>,
    %c14 = arith.constant 14 : index
    %c0_123 = arith.constant 0 : index
    %259 = vector.load %arg6[%c14, %c0_123] : memref<16x512xf32, #tpu.memory_space<vmem>>, vector<2x512xf32>
    %c0_124 = arith.constant 0 : index
    %c0_125 = arith.constant 0 : index
    %260 = vector.load %arg7[%c0_124, %c0_125] : memref<2x128xf32, #tpu.memory_space<vmem>>, vector<2x128xf32>
    %261 = arith.truncf %260 : vector<2x128xf32> to vector<2x128xbf16>
    %cst_126 = arith.constant dense<0.000000e+00> : vector<2x512xf32>
    %262 = tpu.matmul %261, %1, %cst_126 {dimension_numbers = #tpu.dot_dimension_numbers<[1], [0], [0], [1], [0, 0, 1, 1], [], []>} : vector<2x128xbf16>, vector<128x512xbf16>, vector<2x512xf32> -> vector<2x512xf32>
    %263 = arith.addf %259, %262 : vector<2x512xf32>
    %264 = vector.extract_strided_slice %263 {offsets = [0, 0], sizes = [2, 128], strides = [1, 1]} : vector<2x512xf32> to vector<2x128xf32>
    %265 = arith.negf %264 : vector<2x128xf32>
    %266 = math.exp %265 : vector<2x128xf32>
    %cst_127 = arith.constant 1.000000e+00 : f32
    %267 = vector.broadcast %cst_127 : f32 to vector<2x128xf32>
    %268 = arith.addf %267, %266 : vector<2x128xf32>
    %269 = arith.divf %267, %268 : vector<2x128xf32>
    %270 = vector.extract_strided_slice %263 {offsets = [0, 128], sizes = [2, 128], strides = [1, 1]} : vector<2x512xf32> to vector<2x128xf32>
    %271 = arith.negf %270 : vector<2x128xf32>
    %272 = math.exp %271 : vector<2x128xf32>
    %cst_128 = arith.constant 1.000000e+00 : f32
    %273 = vector.broadcast %cst_128 : f32 to vector<2x128xf32>
    %274 = arith.addf %273, %272 : vector<2x128xf32>
    %275 = arith.divf %273, %274 : vector<2x128xf32>
    %276 = vector.extract_strided_slice %263 {offsets = [0, 256], sizes = [2, 128], strides = [1, 1]} : vector<2x512xf32> to vector<2x128xf32>
    %277 = math.tanh %276 : vector<2x128xf32>
    %278 = vector.extract_strided_slice %263 {offsets = [0, 384], sizes = [2, 128], strides = [1, 1]} : vector<2x512xf32> to vector<2x128xf32>
    %279 = arith.negf %278 : vector<2x128xf32>
    %280 = math.exp %279 : vector<2x128xf32>
    %cst_129 = arith.constant 1.000000e+00 : f32
    %281 = vector.broadcast %cst_129 : f32 to vector<2x128xf32>
    %282 = arith.addf %281, %280 : vector<2x128xf32>
    %283 = arith.divf %281, %282 : vector<2x128xf32>
    %c0_130 = arith.constant 0 : index
    %c0_131 = arith.constant 0 : index
    %284 = vector.load %arg8[%c0_130, %c0_131] : memref<2x128xf32, #tpu.memory_space<vmem>>, vector<2x128xf32>
    %285 = arith.mulf %275, %284 : vector<2x128xf32>
    %286 = arith.mulf %269, %277 : vector<2x128xf32>
    %287 = arith.addf %285, %286 : vector<2x128xf32>
    %288 = math.tanh %287 : vector<2x128xf32>
    %289 = arith.mulf %283, %288 : vector<2x128xf32>
    %c0_132 = arith.constant 0 : index
    %c0_133 = arith.constant 0 : index
    %290 = vector.load %arg8[%c0_132, %c0_133] : memref<2x128xf32, #tpu.memory_space<vmem>>, vector<2x128xf32>
    tpu.vector_store %arg8[%c0_132, %c0_133], %287 {strides = array<i32>} : memref<2x128xf32, #tpu.memory_space<vmem>>, vector<2x128xf32>,
    %c0_134 = arith.constant 0 : index
    %c0_135 = arith.constant 0 : index
    %291 = vector.load %arg7[%c0_134, %c0_135] : memref<2x128xf32, #tpu.memory_space<vmem>>, vector<2x128xf32>
    tpu.vector_store %arg7[%c0_134, %c0_135], %289 {strides = array<i32>} : memref<2x128xf32, #tpu.memory_space<vmem>>, vector<2x128xf32>,
    %292 = arith.truncf %289 : vector<2x128xf32> to vector<2x128xbf16>
    %c14_136 = arith.constant 14 : index
    %c0_137 = arith.constant 0 : index
    %293 = vector.load %arg5[%c14_136, %c0_137] : memref<16x128xbf16, #tpu.memory_space<vmem>>, vector<2x128xbf16>
    tpu.vector_store %arg5[%c14_136, %c0_137], %292 {strides = array<i32>} : memref<16x128xbf16, #tpu.memory_space<vmem>>, vector<2x128xbf16>,
    %c1 = arith.constant 1 : index
    %c0_138 = arith.constant 0 : index
    %c0_139 = arith.constant 0 : index
    %294 = vector.load %arg3[%c1, %c0_138, %c0_139] : memref<2x128x512xbf16, #tpu.memory_space<vmem>>, vector<1x128x512xbf16>
    %295 = vector.shape_cast %294 : vector<1x128x512xbf16> to vector<128x512xbf16>
    %c0_140 = arith.constant 0 : index
    %c0_141 = arith.constant 0 : index
    %296 = vector.load %arg5[%c0_140, %c0_141] : memref<16x128xbf16, #tpu.memory_space<vmem>>, vector<16x128xbf16>
    %c0_142 = arith.constant 0 : index
    %c0_143 = arith.constant 0 : index
    %c0_144 = arith.constant 0 : index
    %297 = vector.load %arg2[%c0_142, %c0_143, %c0_144] : memref<1x128x512xbf16, #tpu.memory_space<vmem>>, vector<1x128x512xbf16>
    %298 = vector.shape_cast %297 : vector<1x128x512xbf16> to vector<128x512xbf16>
    %cst_145 = arith.constant dense<0.000000e+00> : vector<16x512xf32>
    %299 = tpu.matmul %296, %298, %cst_145 {dimension_numbers = #tpu.dot_dimension_numbers<[1], [0], [0], [1], [0, 0, 1, 1], [], []>} : vector<16x128xbf16>, vector<128x512xbf16>, vector<16x512xf32> -> vector<16x512xf32>
    %c1_146 = arith.constant 1 : index
    %c0_147 = arith.constant 0 : index
    %c0_148 = arith.constant 0 : index
    %300 = vector.load %arg4[%c1_146, %c0_147, %c0_148] : memref<2x1x512xf32, #tpu.memory_space<vmem>>, vector<1x1x512xf32>
    %301 = vector.shape_cast %300 : vector<1x1x512xf32> to vector<1x512xf32>
    %302 = vector.broadcast %301 : vector<1x512xf32> to vector<16x512xf32>
    %303 = arith.addf %299, %302 : vector<16x512xf32>
    %c0_149 = arith.constant 0 : index
    %c0_150 = arith.constant 0 : index
    %304 = vector.load %arg6[%c0_149, %c0_150] : memref<16x512xf32, #tpu.memory_space<vmem>>, vector<16x512xf32>
    tpu.vector_store %arg6[%c0_149, %c0_150], %303 {strides = array<i32>} : memref<16x512xf32, #tpu.memory_space<vmem>>, vector<16x512xf32>,
    %cst_151 = arith.constant 0.000000e+00 : f32
    %305 = vector.broadcast %cst_151 : f32 to vector<2x128xf32>
    %c0_152 = arith.constant 0 : index
    %c0_153 = arith.constant 0 : index
    %306 = vector.load %arg7[%c0_152, %c0_153] : memref<2x128xf32, #tpu.memory_space<vmem>>, vector<2x128xf32>
    tpu.vector_store %arg7[%c0_152, %c0_153], %305 {strides = array<i32>} : memref<2x128xf32, #tpu.memory_space<vmem>>, vector<2x128xf32>,
    %cst_154 = arith.constant 0.000000e+00 : f32
    %307 = vector.broadcast %cst_154 : f32 to vector<2x128xf32>
    %c0_155 = arith.constant 0 : index
    %c0_156 = arith.constant 0 : index
    %308 = vector.load %arg8[%c0_155, %c0_156] : memref<2x128xf32, #tpu.memory_space<vmem>>, vector<2x128xf32>
    tpu.vector_store %arg8[%c0_155, %c0_156], %307 {strides = array<i32>} : memref<2x128xf32, #tpu.memory_space<vmem>>, vector<2x128xf32>,
    %c0_157 = arith.constant 0 : index
    %c0_158 = arith.constant 0 : index
    %309 = vector.load %arg6[%c0_157, %c0_158] : memref<16x512xf32, #tpu.memory_space<vmem>>, vector<2x512xf32>
    %c0_159 = arith.constant 0 : index
    %c0_160 = arith.constant 0 : index
    %310 = vector.load %arg7[%c0_159, %c0_160] : memref<2x128xf32, #tpu.memory_space<vmem>>, vector<2x128xf32>
    %311 = arith.truncf %310 : vector<2x128xf32> to vector<2x128xbf16>
    %cst_161 = arith.constant dense<0.000000e+00> : vector<2x512xf32>
    %312 = tpu.matmul %311, %295, %cst_161 {dimension_numbers = #tpu.dot_dimension_numbers<[1], [0], [0], [1], [0, 0, 1, 1], [], []>} : vector<2x128xbf16>, vector<128x512xbf16>, vector<2x512xf32> -> vector<2x512xf32>
    %313 = arith.addf %309, %312 : vector<2x512xf32>
    %314 = vector.extract_strided_slice %313 {offsets = [0, 0], sizes = [2, 128], strides = [1, 1]} : vector<2x512xf32> to vector<2x128xf32>
    %315 = arith.negf %314 : vector<2x128xf32>
    %316 = math.exp %315 : vector<2x128xf32>
    %cst_162 = arith.constant 1.000000e+00 : f32
    %317 = vector.broadcast %cst_162 : f32 to vector<2x128xf32>
    %318 = arith.addf %317, %316 : vector<2x128xf32>
    %319 = arith.divf %317, %318 : vector<2x128xf32>
    %320 = vector.extract_strided_slice %313 {offsets = [0, 128], sizes = [2, 128], strides = [1, 1]} : vector<2x512xf32> to vector<2x128xf32>
    %321 = arith.negf %320 : vector<2x128xf32>
    %322 = math.exp %321 : vector<2x128xf32>
    %cst_163 = arith.constant 1.000000e+00 : f32
    %323 = vector.broadcast %cst_163 : f32 to vector<2x128xf32>
    %324 = arith.addf %323, %322 : vector<2x128xf32>
    %325 = arith.divf %323, %324 : vector<2x128xf32>
    %326 = vector.extract_strided_slice %313 {offsets = [0, 256], sizes = [2, 128], strides = [1, 1]} : vector<2x512xf32> to vector<2x128xf32>
    %327 = math.tanh %326 : vector<2x128xf32>
    %328 = vector.extract_strided_slice %313 {offsets = [0, 384], sizes = [2, 128], strides = [1, 1]} : vector<2x512xf32> to vector<2x128xf32>
    %329 = arith.negf %328 : vector<2x128xf32>
    %330 = math.exp %329 : vector<2x128xf32>
    %cst_164 = arith.constant 1.000000e+00 : f32
    %331 = vector.broadcast %cst_164 : f32 to vector<2x128xf32>
    %332 = arith.addf %331, %330 : vector<2x128xf32>
    %333 = arith.divf %331, %332 : vector<2x128xf32>
    %c0_165 = arith.constant 0 : index
    %c0_166 = arith.constant 0 : index
    %334 = vector.load %arg8[%c0_165, %c0_166] : memref<2x128xf32, #tpu.memory_space<vmem>>, vector<2x128xf32>
    %335 = arith.mulf %325, %334 : vector<2x128xf32>
    %336 = arith.mulf %319, %327 : vector<2x128xf32>
    %337 = arith.addf %335, %336 : vector<2x128xf32>
    %338 = math.tanh %337 : vector<2x128xf32>
    %339 = arith.mulf %333, %338 : vector<2x128xf32>
    %c0_167 = arith.constant 0 : index
    %c0_168 = arith.constant 0 : index
    %340 = vector.load %arg8[%c0_167, %c0_168] : memref<2x128xf32, #tpu.memory_space<vmem>>, vector<2x128xf32>
    tpu.vector_store %arg8[%c0_167, %c0_168], %337 {strides = array<i32>} : memref<2x128xf32, #tpu.memory_space<vmem>>, vector<2x128xf32>,
    %c0_169 = arith.constant 0 : index
    %c0_170 = arith.constant 0 : index
    %341 = vector.load %arg7[%c0_169, %c0_170] : memref<2x128xf32, #tpu.memory_space<vmem>>, vector<2x128xf32>
    tpu.vector_store %arg7[%c0_169, %c0_170], %339 {strides = array<i32>} : memref<2x128xf32, #tpu.memory_space<vmem>>, vector<2x128xf32>,
    %342 = arith.truncf %339 : vector<2x128xf32> to vector<2x128xbf16>
    %c0_171 = arith.constant 0 : index
    %c0_172 = arith.constant 0 : index
    %343 = vector.load %arg5[%c0_171, %c0_172] : memref<16x128xbf16, #tpu.memory_space<vmem>>, vector<2x128xbf16>
    tpu.vector_store %arg5[%c0_171, %c0_172], %342 {strides = array<i32>} : memref<16x128xbf16, #tpu.memory_space<vmem>>, vector<2x128xbf16>,
    %c2_173 = arith.constant 2 : index
    %c0_174 = arith.constant 0 : index
    %344 = vector.load %arg6[%c2_173, %c0_174] : memref<16x512xf32, #tpu.memory_space<vmem>>, vector<2x512xf32>
    %c0_175 = arith.constant 0 : index
    %c0_176 = arith.constant 0 : index
    %345 = vector.load %arg7[%c0_175, %c0_176] : memref<2x128xf32, #tpu.memory_space<vmem>>, vector<2x128xf32>
    %346 = arith.truncf %345 : vector<2x128xf32> to vector<2x128xbf16>
    %cst_177 = arith.constant dense<0.000000e+00> : vector<2x512xf32>
    %347 = tpu.matmul %346, %295, %cst_177 {dimension_numbers = #tpu.dot_dimension_numbers<[1], [0], [0], [1], [0, 0, 1, 1], [], []>} : vector<2x128xbf16>, vector<128x512xbf16>, vector<2x512xf32> -> vector<2x512xf32>
    %348 = arith.addf %344, %347 : vector<2x512xf32>
    %349 = vector.extract_strided_slice %348 {offsets = [0, 0], sizes = [2, 128], strides = [1, 1]} : vector<2x512xf32> to vector<2x128xf32>
    %350 = arith.negf %349 : vector<2x128xf32>
    %351 = math.exp %350 : vector<2x128xf32>
    %cst_178 = arith.constant 1.000000e+00 : f32
    %352 = vector.broadcast %cst_178 : f32 to vector<2x128xf32>
    %353 = arith.addf %352, %351 : vector<2x128xf32>
    %354 = arith.divf %352, %353 : vector<2x128xf32>
    %355 = vector.extract_strided_slice %348 {offsets = [0, 128], sizes = [2, 128], strides = [1, 1]} : vector<2x512xf32> to vector<2x128xf32>
    %356 = arith.negf %355 : vector<2x128xf32>
    %357 = math.exp %356 : vector<2x128xf32>
    %cst_179 = arith.constant 1.000000e+00 : f32
    %358 = vector.broadcast %cst_179 : f32 to vector<2x128xf32>
    %359 = arith.addf %358, %357 : vector<2x128xf32>
    %360 = arith.divf %358, %359 : vector<2x128xf32>
    %361 = vector.extract_strided_slice %348 {offsets = [0, 256], sizes = [2, 128], strides = [1, 1]} : vector<2x512xf32> to vector<2x128xf32>
    %362 = math.tanh %361 : vector<2x128xf32>
    %363 = vector.extract_strided_slice %348 {offsets = [0, 384], sizes = [2, 128], strides = [1, 1]} : vector<2x512xf32> to vector<2x128xf32>
    %364 = arith.negf %363 : vector<2x128xf32>
    %365 = math.exp %364 : vector<2x128xf32>
    %cst_180 = arith.constant 1.000000e+00 : f32
    %366 = vector.broadcast %cst_180 : f32 to vector<2x128xf32>
    %367 = arith.addf %366, %365 : vector<2x128xf32>
    %368 = arith.divf %366, %367 : vector<2x128xf32>
    %c0_181 = arith.constant 0 : index
    %c0_182 = arith.constant 0 : index
    %369 = vector.load %arg8[%c0_181, %c0_182] : memref<2x128xf32, #tpu.memory_space<vmem>>, vector<2x128xf32>
    %370 = arith.mulf %360, %369 : vector<2x128xf32>
    %371 = arith.mulf %354, %362 : vector<2x128xf32>
    %372 = arith.addf %370, %371 : vector<2x128xf32>
    %373 = math.tanh %372 : vector<2x128xf32>
    %374 = arith.mulf %368, %373 : vector<2x128xf32>
    %c0_183 = arith.constant 0 : index
    %c0_184 = arith.constant 0 : index
    %375 = vector.load %arg8[%c0_183, %c0_184] : memref<2x128xf32, #tpu.memory_space<vmem>>, vector<2x128xf32>
    tpu.vector_store %arg8[%c0_183, %c0_184], %372 {strides = array<i32>} : memref<2x128xf32, #tpu.memory_space<vmem>>, vector<2x128xf32>,
    %c0_185 = arith.constant 0 : index
    %c0_186 = arith.constant 0 : index
    %376 = vector.load %arg7[%c0_185, %c0_186] : memref<2x128xf32, #tpu.memory_space<vmem>>, vector<2x128xf32>
    tpu.vector_store %arg7[%c0_185, %c0_186], %374 {strides = array<i32>} : memref<2x128xf32, #tpu.memory_space<vmem>>, vector<2x128xf32>,
    %377 = arith.truncf %374 : vector<2x128xf32> to vector<2x128xbf16>
    %c2_187 = arith.constant 2 : index
    %c0_188 = arith.constant 0 : index
    %378 = vector.load %arg5[%c2_187, %c0_188] : memref<16x128xbf16, #tpu.memory_space<vmem>>, vector<2x128xbf16>
    tpu.vector_store %arg5[%c2_187, %c0_188], %377 {strides = array<i32>} : memref<16x128xbf16, #tpu.memory_space<vmem>>, vector<2x128xbf16>,
    %c4_189 = arith.constant 4 : index
    %c0_190 = arith.constant 0 : index
    %379 = vector.load %arg6[%c4_189, %c0_190] : memref<16x512xf32, #tpu.memory_space<vmem>>, vector<2x512xf32>
    %c0_191 = arith.constant 0 : index
    %c0_192 = arith.constant 0 : index
    %380 = vector.load %arg7[%c0_191, %c0_192] : memref<2x128xf32, #tpu.memory_space<vmem>>, vector<2x128xf32>
    %381 = arith.truncf %380 : vector<2x128xf32> to vector<2x128xbf16>
    %cst_193 = arith.constant dense<0.000000e+00> : vector<2x512xf32>
    %382 = tpu.matmul %381, %295, %cst_193 {dimension_numbers = #tpu.dot_dimension_numbers<[1], [0], [0], [1], [0, 0, 1, 1], [], []>} : vector<2x128xbf16>, vector<128x512xbf16>, vector<2x512xf32> -> vector<2x512xf32>
    %383 = arith.addf %379, %382 : vector<2x512xf32>
    %384 = vector.extract_strided_slice %383 {offsets = [0, 0], sizes = [2, 128], strides = [1, 1]} : vector<2x512xf32> to vector<2x128xf32>
    %385 = arith.negf %384 : vector<2x128xf32>
    %386 = math.exp %385 : vector<2x128xf32>
    %cst_194 = arith.constant 1.000000e+00 : f32
    %387 = vector.broadcast %cst_194 : f32 to vector<2x128xf32>
    %388 = arith.addf %387, %386 : vector<2x128xf32>
    %389 = arith.divf %387, %388 : vector<2x128xf32>
    %390 = vector.extract_strided_slice %383 {offsets = [0, 128], sizes = [2, 128], strides = [1, 1]} : vector<2x512xf32> to vector<2x128xf32>
    %391 = arith.negf %390 : vector<2x128xf32>
    %392 = math.exp %391 : vector<2x128xf32>
    %cst_195 = arith.constant 1.000000e+00 : f32
    %393 = vector.broadcast %cst_195 : f32 to vector<2x128xf32>
    %394 = arith.addf %393, %392 : vector<2x128xf32>
    %395 = arith.divf %393, %394 : vector<2x128xf32>
    %396 = vector.extract_strided_slice %383 {offsets = [0, 256], sizes = [2, 128], strides = [1, 1]} : vector<2x512xf32> to vector<2x128xf32>
    %397 = math.tanh %396 : vector<2x128xf32>
    %398 = vector.extract_strided_slice %383 {offsets = [0, 384], sizes = [2, 128], strides = [1, 1]} : vector<2x512xf32> to vector<2x128xf32>
    %399 = arith.negf %398 : vector<2x128xf32>
    %400 = math.exp %399 : vector<2x128xf32>
    %cst_196 = arith.constant 1.000000e+00 : f32
    %401 = vector.broadcast %cst_196 : f32 to vector<2x128xf32>
    %402 = arith.addf %401, %400 : vector<2x128xf32>
    %403 = arith.divf %401, %402 : vector<2x128xf32>
    %c0_197 = arith.constant 0 : index
    %c0_198 = arith.constant 0 : index
    %404 = vector.load %arg8[%c0_197, %c0_198] : memref<2x128xf32, #tpu.memory_space<vmem>>, vector<2x128xf32>
    %405 = arith.mulf %395, %404 : vector<2x128xf32>
    %406 = arith.mulf %389, %397 : vector<2x128xf32>
    %407 = arith.addf %405, %406 : vector<2x128xf32>
    %408 = math.tanh %407 : vector<2x128xf32>
    %409 = arith.mulf %403, %408 : vector<2x128xf32>
    %c0_199 = arith.constant 0 : index
    %c0_200 = arith.constant 0 : index
    %410 = vector.load %arg8[%c0_199, %c0_200] : memref<2x128xf32, #tpu.memory_space<vmem>>, vector<2x128xf32>
    tpu.vector_store %arg8[%c0_199, %c0_200], %407 {strides = array<i32>} : memref<2x128xf32, #tpu.memory_space<vmem>>, vector<2x128xf32>,
    %c0_201 = arith.constant 0 : index
    %c0_202 = arith.constant 0 : index
    %411 = vector.load %arg7[%c0_201, %c0_202] : memref<2x128xf32, #tpu.memory_space<vmem>>, vector<2x128xf32>
    tpu.vector_store %arg7[%c0_201, %c0_202], %409 {strides = array<i32>} : memref<2x128xf32, #tpu.memory_space<vmem>>, vector<2x128xf32>,
    %412 = arith.truncf %409 : vector<2x128xf32> to vector<2x128xbf16>
    %c4_203 = arith.constant 4 : index
    %c0_204 = arith.constant 0 : index
    %413 = vector.load %arg5[%c4_203, %c0_204] : memref<16x128xbf16, #tpu.memory_space<vmem>>, vector<2x128xbf16>
    tpu.vector_store %arg5[%c4_203, %c0_204], %412 {strides = array<i32>} : memref<16x128xbf16, #tpu.memory_space<vmem>>, vector<2x128xbf16>,
    %c6_205 = arith.constant 6 : index
    %c0_206 = arith.constant 0 : index
    %414 = vector.load %arg6[%c6_205, %c0_206] : memref<16x512xf32, #tpu.memory_space<vmem>>, vector<2x512xf32>
    %c0_207 = arith.constant 0 : index
    %c0_208 = arith.constant 0 : index
    %415 = vector.load %arg7[%c0_207, %c0_208] : memref<2x128xf32, #tpu.memory_space<vmem>>, vector<2x128xf32>
    %416 = arith.truncf %415 : vector<2x128xf32> to vector<2x128xbf16>
    %cst_209 = arith.constant dense<0.000000e+00> : vector<2x512xf32>
    %417 = tpu.matmul %416, %295, %cst_209 {dimension_numbers = #tpu.dot_dimension_numbers<[1], [0], [0], [1], [0, 0, 1, 1], [], []>} : vector<2x128xbf16>, vector<128x512xbf16>, vector<2x512xf32> -> vector<2x512xf32>
    %418 = arith.addf %414, %417 : vector<2x512xf32>
    %419 = vector.extract_strided_slice %418 {offsets = [0, 0], sizes = [2, 128], strides = [1, 1]} : vector<2x512xf32> to vector<2x128xf32>
    %420 = arith.negf %419 : vector<2x128xf32>
    %421 = math.exp %420 : vector<2x128xf32>
    %cst_210 = arith.constant 1.000000e+00 : f32
    %422 = vector.broadcast %cst_210 : f32 to vector<2x128xf32>
    %423 = arith.addf %422, %421 : vector<2x128xf32>
    %424 = arith.divf %422, %423 : vector<2x128xf32>
    %425 = vector.extract_strided_slice %418 {offsets = [0, 128], sizes = [2, 128], strides = [1, 1]} : vector<2x512xf32> to vector<2x128xf32>
    %426 = arith.negf %425 : vector<2x128xf32>
    %427 = math.exp %426 : vector<2x128xf32>
    %cst_211 = arith.constant 1.000000e+00 : f32
    %428 = vector.broadcast %cst_211 : f32 to vector<2x128xf32>
    %429 = arith.addf %428, %427 : vector<2x128xf32>
    %430 = arith.divf %428, %429 : vector<2x128xf32>
    %431 = vector.extract_strided_slice %418 {offsets = [0, 256], sizes = [2, 128], strides = [1, 1]} : vector<2x512xf32> to vector<2x128xf32>
    %432 = math.tanh %431 : vector<2x128xf32>
    %433 = vector.extract_strided_slice %418 {offsets = [0, 384], sizes = [2, 128], strides = [1, 1]} : vector<2x512xf32> to vector<2x128xf32>
    %434 = arith.negf %433 : vector<2x128xf32>
    %435 = math.exp %434 : vector<2x128xf32>
    %cst_212 = arith.constant 1.000000e+00 : f32
    %436 = vector.broadcast %cst_212 : f32 to vector<2x128xf32>
    %437 = arith.addf %436, %435 : vector<2x128xf32>
    %438 = arith.divf %436, %437 : vector<2x128xf32>
    %c0_213 = arith.constant 0 : index
    %c0_214 = arith.constant 0 : index
    %439 = vector.load %arg8[%c0_213, %c0_214] : memref<2x128xf32, #tpu.memory_space<vmem>>, vector<2x128xf32>
    %440 = arith.mulf %430, %439 : vector<2x128xf32>
    %441 = arith.mulf %424, %432 : vector<2x128xf32>
    %442 = arith.addf %440, %441 : vector<2x128xf32>
    %443 = math.tanh %442 : vector<2x128xf32>
    %444 = arith.mulf %438, %443 : vector<2x128xf32>
    %c0_215 = arith.constant 0 : index
    %c0_216 = arith.constant 0 : index
    %445 = vector.load %arg8[%c0_215, %c0_216] : memref<2x128xf32, #tpu.memory_space<vmem>>, vector<2x128xf32>
    tpu.vector_store %arg8[%c0_215, %c0_216], %442 {strides = array<i32>} : memref<2x128xf32, #tpu.memory_space<vmem>>, vector<2x128xf32>,
    %c0_217 = arith.constant 0 : index
    %c0_218 = arith.constant 0 : index
    %446 = vector.load %arg7[%c0_217, %c0_218] : memref<2x128xf32, #tpu.memory_space<vmem>>, vector<2x128xf32>
    tpu.vector_store %arg7[%c0_217, %c0_218], %444 {strides = array<i32>} : memref<2x128xf32, #tpu.memory_space<vmem>>, vector<2x128xf32>,
    %447 = arith.truncf %444 : vector<2x128xf32> to vector<2x128xbf16>
    %c6_219 = arith.constant 6 : index
    %c0_220 = arith.constant 0 : index
    %448 = vector.load %arg5[%c6_219, %c0_220] : memref<16x128xbf16, #tpu.memory_space<vmem>>, vector<2x128xbf16>
    tpu.vector_store %arg5[%c6_219, %c0_220], %447 {strides = array<i32>} : memref<16x128xbf16, #tpu.memory_space<vmem>>, vector<2x128xbf16>,
    %c8_221 = arith.constant 8 : index
    %c0_222 = arith.constant 0 : index
    %449 = vector.load %arg6[%c8_221, %c0_222] : memref<16x512xf32, #tpu.memory_space<vmem>>, vector<2x512xf32>
    %c0_223 = arith.constant 0 : index
    %c0_224 = arith.constant 0 : index
    %450 = vector.load %arg7[%c0_223, %c0_224] : memref<2x128xf32, #tpu.memory_space<vmem>>, vector<2x128xf32>
    %451 = arith.truncf %450 : vector<2x128xf32> to vector<2x128xbf16>
    %cst_225 = arith.constant dense<0.000000e+00> : vector<2x512xf32>
    %452 = tpu.matmul %451, %295, %cst_225 {dimension_numbers = #tpu.dot_dimension_numbers<[1], [0], [0], [1], [0, 0, 1, 1], [], []>} : vector<2x128xbf16>, vector<128x512xbf16>, vector<2x512xf32> -> vector<2x512xf32>
    %453 = arith.addf %449, %452 : vector<2x512xf32>
    %454 = vector.extract_strided_slice %453 {offsets = [0, 0], sizes = [2, 128], strides = [1, 1]} : vector<2x512xf32> to vector<2x128xf32>
    %455 = arith.negf %454 : vector<2x128xf32>
    %456 = math.exp %455 : vector<2x128xf32>
    %cst_226 = arith.constant 1.000000e+00 : f32
    %457 = vector.broadcast %cst_226 : f32 to vector<2x128xf32>
    %458 = arith.addf %457, %456 : vector<2x128xf32>
    %459 = arith.divf %457, %458 : vector<2x128xf32>
    %460 = vector.extract_strided_slice %453 {offsets = [0, 128], sizes = [2, 128], strides = [1, 1]} : vector<2x512xf32> to vector<2x128xf32>
    %461 = arith.negf %460 : vector<2x128xf32>
    %462 = math.exp %461 : vector<2x128xf32>
    %cst_227 = arith.constant 1.000000e+00 : f32
    %463 = vector.broadcast %cst_227 : f32 to vector<2x128xf32>
    %464 = arith.addf %463, %462 : vector<2x128xf32>
    %465 = arith.divf %463, %464 : vector<2x128xf32>
    %466 = vector.extract_strided_slice %453 {offsets = [0, 256], sizes = [2, 128], strides = [1, 1]} : vector<2x512xf32> to vector<2x128xf32>
    %467 = math.tanh %466 : vector<2x128xf32>
    %468 = vector.extract_strided_slice %453 {offsets = [0, 384], sizes = [2, 128], strides = [1, 1]} : vector<2x512xf32> to vector<2x128xf32>
    %469 = arith.negf %468 : vector<2x128xf32>
    %470 = math.exp %469 : vector<2x128xf32>
    %cst_228 = arith.constant 1.000000e+00 : f32
    %471 = vector.broadcast %cst_228 : f32 to vector<2x128xf32>
    %472 = arith.addf %471, %470 : vector<2x128xf32>
    %473 = arith.divf %471, %472 : vector<2x128xf32>
    %c0_229 = arith.constant 0 : index
    %c0_230 = arith.constant 0 : index
    %474 = vector.load %arg8[%c0_229, %c0_230] : memref<2x128xf32, #tpu.memory_space<vmem>>, vector<2x128xf32>
    %475 = arith.mulf %465, %474 : vector<2x128xf32>
    %476 = arith.mulf %459, %467 : vector<2x128xf32>
    %477 = arith.addf %475, %476 : vector<2x128xf32>
    %478 = math.tanh %477 : vector<2x128xf32>
    %479 = arith.mulf %473, %478 : vector<2x128xf32>
    %c0_231 = arith.constant 0 : index
    %c0_232 = arith.constant 0 : index
    %480 = vector.load %arg8[%c0_231, %c0_232] : memref<2x128xf32, #tpu.memory_space<vmem>>, vector<2x128xf32>
    tpu.vector_store %arg8[%c0_231, %c0_232], %477 {strides = array<i32>} : memref<2x128xf32, #tpu.memory_space<vmem>>, vector<2x128xf32>,
    %c0_233 = arith.constant 0 : index
    %c0_234 = arith.constant 0 : index
    %481 = vector.load %arg7[%c0_233, %c0_234] : memref<2x128xf32, #tpu.memory_space<vmem>>, vector<2x128xf32>
    tpu.vector_store %arg7[%c0_233, %c0_234], %479 {strides = array<i32>} : memref<2x128xf32, #tpu.memory_space<vmem>>, vector<2x128xf32>,
    %482 = arith.truncf %479 : vector<2x128xf32> to vector<2x128xbf16>
    %c8_235 = arith.constant 8 : index
    %c0_236 = arith.constant 0 : index
    %483 = vector.load %arg5[%c8_235, %c0_236] : memref<16x128xbf16, #tpu.memory_space<vmem>>, vector<2x128xbf16>
    tpu.vector_store %arg5[%c8_235, %c0_236], %482 {strides = array<i32>} : memref<16x128xbf16, #tpu.memory_space<vmem>>, vector<2x128xbf16>,
    %c10_237 = arith.constant 10 : index
    %c0_238 = arith.constant 0 : index
    %484 = vector.load %arg6[%c10_237, %c0_238] : memref<16x512xf32, #tpu.memory_space<vmem>>, vector<2x512xf32>
    %c0_239 = arith.constant 0 : index
    %c0_240 = arith.constant 0 : index
    %485 = vector.load %arg7[%c0_239, %c0_240] : memref<2x128xf32, #tpu.memory_space<vmem>>, vector<2x128xf32>
    %486 = arith.truncf %485 : vector<2x128xf32> to vector<2x128xbf16>
    %cst_241 = arith.constant dense<0.000000e+00> : vector<2x512xf32>
    %487 = tpu.matmul %486, %295, %cst_241 {dimension_numbers = #tpu.dot_dimension_numbers<[1], [0], [0], [1], [0, 0, 1, 1], [], []>} : vector<2x128xbf16>, vector<128x512xbf16>, vector<2x512xf32> -> vector<2x512xf32>
    %488 = arith.addf %484, %487 : vector<2x512xf32>
    %489 = vector.extract_strided_slice %488 {offsets = [0, 0], sizes = [2, 128], strides = [1, 1]} : vector<2x512xf32> to vector<2x128xf32>
    %490 = arith.negf %489 : vector<2x128xf32>
    %491 = math.exp %490 : vector<2x128xf32>
    %cst_242 = arith.constant 1.000000e+00 : f32
    %492 = vector.broadcast %cst_242 : f32 to vector<2x128xf32>
    %493 = arith.addf %492, %491 : vector<2x128xf32>
    %494 = arith.divf %492, %493 : vector<2x128xf32>
    %495 = vector.extract_strided_slice %488 {offsets = [0, 128], sizes = [2, 128], strides = [1, 1]} : vector<2x512xf32> to vector<2x128xf32>
    %496 = arith.negf %495 : vector<2x128xf32>
    %497 = math.exp %496 : vector<2x128xf32>
    %cst_243 = arith.constant 1.000000e+00 : f32
    %498 = vector.broadcast %cst_243 : f32 to vector<2x128xf32>
    %499 = arith.addf %498, %497 : vector<2x128xf32>
    %500 = arith.divf %498, %499 : vector<2x128xf32>
    %501 = vector.extract_strided_slice %488 {offsets = [0, 256], sizes = [2, 128], strides = [1, 1]} : vector<2x512xf32> to vector<2x128xf32>
    %502 = math.tanh %501 : vector<2x128xf32>
    %503 = vector.extract_strided_slice %488 {offsets = [0, 384], sizes = [2, 128], strides = [1, 1]} : vector<2x512xf32> to vector<2x128xf32>
    %504 = arith.negf %503 : vector<2x128xf32>
    %505 = math.exp %504 : vector<2x128xf32>
    %cst_244 = arith.constant 1.000000e+00 : f32
    %506 = vector.broadcast %cst_244 : f32 to vector<2x128xf32>
    %507 = arith.addf %506, %505 : vector<2x128xf32>
    %508 = arith.divf %506, %507 : vector<2x128xf32>
    %c0_245 = arith.constant 0 : index
    %c0_246 = arith.constant 0 : index
    %509 = vector.load %arg8[%c0_245, %c0_246] : memref<2x128xf32, #tpu.memory_space<vmem>>, vector<2x128xf32>
    %510 = arith.mulf %500, %509 : vector<2x128xf32>
    %511 = arith.mulf %494, %502 : vector<2x128xf32>
    %512 = arith.addf %510, %511 : vector<2x128xf32>
    %513 = math.tanh %512 : vector<2x128xf32>
    %514 = arith.mulf %508, %513 : vector<2x128xf32>
    %c0_247 = arith.constant 0 : index
    %c0_248 = arith.constant 0 : index
    %515 = vector.load %arg8[%c0_247, %c0_248] : memref<2x128xf32, #tpu.memory_space<vmem>>, vector<2x128xf32>
    tpu.vector_store %arg8[%c0_247, %c0_248], %512 {strides = array<i32>} : memref<2x128xf32, #tpu.memory_space<vmem>>, vector<2x128xf32>,
    %c0_249 = arith.constant 0 : index
    %c0_250 = arith.constant 0 : index
    %516 = vector.load %arg7[%c0_249, %c0_250] : memref<2x128xf32, #tpu.memory_space<vmem>>, vector<2x128xf32>
    tpu.vector_store %arg7[%c0_249, %c0_250], %514 {strides = array<i32>} : memref<2x128xf32, #tpu.memory_space<vmem>>, vector<2x128xf32>,
    %517 = arith.truncf %514 : vector<2x128xf32> to vector<2x128xbf16>
    %c10_251 = arith.constant 10 : index
    %c0_252 = arith.constant 0 : index
    %518 = vector.load %arg5[%c10_251, %c0_252] : memref<16x128xbf16, #tpu.memory_space<vmem>>, vector<2x128xbf16>
    tpu.vector_store %arg5[%c10_251, %c0_252], %517 {strides = array<i32>} : memref<16x128xbf16, #tpu.memory_space<vmem>>, vector<2x128xbf16>,
    %c12_253 = arith.constant 12 : index
    %c0_254 = arith.constant 0 : index
    %519 = vector.load %arg6[%c12_253, %c0_254] : memref<16x512xf32, #tpu.memory_space<vmem>>, vector<2x512xf32>
    %c0_255 = arith.constant 0 : index
    %c0_256 = arith.constant 0 : index
    %520 = vector.load %arg7[%c0_255, %c0_256] : memref<2x128xf32, #tpu.memory_space<vmem>>, vector<2x128xf32>
    %521 = arith.truncf %520 : vector<2x128xf32> to vector<2x128xbf16>
    %cst_257 = arith.constant dense<0.000000e+00> : vector<2x512xf32>
    %522 = tpu.matmul %521, %295, %cst_257 {dimension_numbers = #tpu.dot_dimension_numbers<[1], [0], [0], [1], [0, 0, 1, 1], [], []>} : vector<2x128xbf16>, vector<128x512xbf16>, vector<2x512xf32> -> vector<2x512xf32>
    %523 = arith.addf %519, %522 : vector<2x512xf32>
    %524 = vector.extract_strided_slice %523 {offsets = [0, 0], sizes = [2, 128], strides = [1, 1]} : vector<2x512xf32> to vector<2x128xf32>
    %525 = arith.negf %524 : vector<2x128xf32>
    %526 = math.exp %525 : vector<2x128xf32>
    %cst_258 = arith.constant 1.000000e+00 : f32
    %527 = vector.broadcast %cst_258 : f32 to vector<2x128xf32>
    %528 = arith.addf %527, %526 : vector<2x128xf32>
    %529 = arith.divf %527, %528 : vector<2x128xf32>
    %530 = vector.extract_strided_slice %523 {offsets = [0, 128], sizes = [2, 128], strides = [1, 1]} : vector<2x512xf32> to vector<2x128xf32>
    %531 = arith.negf %530 : vector<2x128xf32>
    %532 = math.exp %531 : vector<2x128xf32>
    %cst_259 = arith.constant 1.000000e+00 : f32
    %533 = vector.broadcast %cst_259 : f32 to vector<2x128xf32>
    %534 = arith.addf %533, %532 : vector<2x128xf32>
    %535 = arith.divf %533, %534 : vector<2x128xf32>
    %536 = vector.extract_strided_slice %523 {offsets = [0, 256], sizes = [2, 128], strides = [1, 1]} : vector<2x512xf32> to vector<2x128xf32>
    %537 = math.tanh %536 : vector<2x128xf32>
    %538 = vector.extract_strided_slice %523 {offsets = [0, 384], sizes = [2, 128], strides = [1, 1]} : vector<2x512xf32> to vector<2x128xf32>
    %539 = arith.negf %538 : vector<2x128xf32>
    %540 = math.exp %539 : vector<2x128xf32>
    %cst_260 = arith.constant 1.000000e+00 : f32
    %541 = vector.broadcast %cst_260 : f32 to vector<2x128xf32>
    %542 = arith.addf %541, %540 : vector<2x128xf32>
    %543 = arith.divf %541, %542 : vector<2x128xf32>
    %c0_261 = arith.constant 0 : index
    %c0_262 = arith.constant 0 : index
    %544 = vector.load %arg8[%c0_261, %c0_262] : memref<2x128xf32, #tpu.memory_space<vmem>>, vector<2x128xf32>
    %545 = arith.mulf %535, %544 : vector<2x128xf32>
    %546 = arith.mulf %529, %537 : vector<2x128xf32>
    %547 = arith.addf %545, %546 : vector<2x128xf32>
    %548 = math.tanh %547 : vector<2x128xf32>
    %549 = arith.mulf %543, %548 : vector<2x128xf32>
    %c0_263 = arith.constant 0 : index
    %c0_264 = arith.constant 0 : index
    %550 = vector.load %arg8[%c0_263, %c0_264] : memref<2x128xf32, #tpu.memory_space<vmem>>, vector<2x128xf32>
    tpu.vector_store %arg8[%c0_263, %c0_264], %547 {strides = array<i32>} : memref<2x128xf32, #tpu.memory_space<vmem>>, vector<2x128xf32>,
    %c0_265 = arith.constant 0 : index
    %c0_266 = arith.constant 0 : index
    %551 = vector.load %arg7[%c0_265, %c0_266] : memref<2x128xf32, #tpu.memory_space<vmem>>, vector<2x128xf32>
    tpu.vector_store %arg7[%c0_265, %c0_266], %549 {strides = array<i32>} : memref<2x128xf32, #tpu.memory_space<vmem>>, vector<2x128xf32>,
    %552 = arith.truncf %549 : vector<2x128xf32> to vector<2x128xbf16>
    %c12_267 = arith.constant 12 : index
    %c0_268 = arith.constant 0 : index
    %553 = vector.load %arg5[%c12_267, %c0_268] : memref<16x128xbf16, #tpu.memory_space<vmem>>, vector<2x128xbf16>
    tpu.vector_store %arg5[%c12_267, %c0_268], %552 {strides = array<i32>} : memref<16x128xbf16, #tpu.memory_space<vmem>>, vector<2x128xbf16>,
    %c14_269 = arith.constant 14 : index
    %c0_270 = arith.constant 0 : index
    %554 = vector.load %arg6[%c14_269, %c0_270] : memref<16x512xf32, #tpu.memory_space<vmem>>, vector<2x512xf32>
    %c0_271 = arith.constant 0 : index
    %c0_272 = arith.constant 0 : index
    %555 = vector.load %arg7[%c0_271, %c0_272] : memref<2x128xf32, #tpu.memory_space<vmem>>, vector<2x128xf32>
    %556 = arith.truncf %555 : vector<2x128xf32> to vector<2x128xbf16>
    %cst_273 = arith.constant dense<0.000000e+00> : vector<2x512xf32>
    %557 = tpu.matmul %556, %295, %cst_273 {dimension_numbers = #tpu.dot_dimension_numbers<[1], [0], [0], [1], [0, 0, 1, 1], [], []>} : vector<2x128xbf16>, vector<128x512xbf16>, vector<2x512xf32> -> vector<2x512xf32>
    %558 = arith.addf %554, %557 : vector<2x512xf32>
    %559 = vector.extract_strided_slice %558 {offsets = [0, 0], sizes = [2, 128], strides = [1, 1]} : vector<2x512xf32> to vector<2x128xf32>
    %560 = arith.negf %559 : vector<2x128xf32>
    %561 = math.exp %560 : vector<2x128xf32>
    %cst_274 = arith.constant 1.000000e+00 : f32
    %562 = vector.broadcast %cst_274 : f32 to vector<2x128xf32>
    %563 = arith.addf %562, %561 : vector<2x128xf32>
    %564 = arith.divf %562, %563 : vector<2x128xf32>
    %565 = vector.extract_strided_slice %558 {offsets = [0, 128], sizes = [2, 128], strides = [1, 1]} : vector<2x512xf32> to vector<2x128xf32>
    %566 = arith.negf %565 : vector<2x128xf32>
    %567 = math.exp %566 : vector<2x128xf32>
    %cst_275 = arith.constant 1.000000e+00 : f32
    %568 = vector.broadcast %cst_275 : f32 to vector<2x128xf32>
    %569 = arith.addf %568, %567 : vector<2x128xf32>
    %570 = arith.divf %568, %569 : vector<2x128xf32>
    %571 = vector.extract_strided_slice %558 {offsets = [0, 256], sizes = [2, 128], strides = [1, 1]} : vector<2x512xf32> to vector<2x128xf32>
    %572 = math.tanh %571 : vector<2x128xf32>
    %573 = vector.extract_strided_slice %558 {offsets = [0, 384], sizes = [2, 128], strides = [1, 1]} : vector<2x512xf32> to vector<2x128xf32>
    %574 = arith.negf %573 : vector<2x128xf32>
    %575 = math.exp %574 : vector<2x128xf32>
    %cst_276 = arith.constant 1.000000e+00 : f32
    %576 = vector.broadcast %cst_276 : f32 to vector<2x128xf32>
    %577 = arith.addf %576, %575 : vector<2x128xf32>
    %578 = arith.divf %576, %577 : vector<2x128xf32>
    %c0_277 = arith.constant 0 : index
    %c0_278 = arith.constant 0 : index
    %579 = vector.load %arg8[%c0_277, %c0_278] : memref<2x128xf32, #tpu.memory_space<vmem>>, vector<2x128xf32>
    %580 = arith.mulf %570, %579 : vector<2x128xf32>
    %581 = arith.mulf %564, %572 : vector<2x128xf32>
    %582 = arith.addf %580, %581 : vector<2x128xf32>
    %583 = math.tanh %582 : vector<2x128xf32>
    %584 = arith.mulf %578, %583 : vector<2x128xf32>
    %c0_279 = arith.constant 0 : index
    %c0_280 = arith.constant 0 : index
    %585 = vector.load %arg8[%c0_279, %c0_280] : memref<2x128xf32, #tpu.memory_space<vmem>>, vector<2x128xf32>
    tpu.vector_store %arg8[%c0_279, %c0_280], %582 {strides = array<i32>} : memref<2x128xf32, #tpu.memory_space<vmem>>, vector<2x128xf32>,
    %c0_281 = arith.constant 0 : index
    %c0_282 = arith.constant 0 : index
    %586 = vector.load %arg7[%c0_281, %c0_282] : memref<2x128xf32, #tpu.memory_space<vmem>>, vector<2x128xf32>
    tpu.vector_store %arg7[%c0_281, %c0_282], %584 {strides = array<i32>} : memref<2x128xf32, #tpu.memory_space<vmem>>, vector<2x128xf32>,
    %587 = arith.truncf %584 : vector<2x128xf32> to vector<2x128xbf16>
    %c14_283 = arith.constant 14 : index
    %c0_284 = arith.constant 0 : index
    %588 = vector.load %arg5[%c14_283, %c0_284] : memref<16x128xbf16, #tpu.memory_space<vmem>>, vector<2x128xbf16>
    tpu.vector_store %arg5[%c14_283, %c0_284], %587 {strides = array<i32>} : memref<16x128xbf16, #tpu.memory_space<vmem>>, vector<2x128xbf16>,
    return
  }
}

</mosaic_0001>

<llo_original>
// kernel: cnn_to_lstm_forward.3
$region0: #{cnn_to_lstm_forward.3}
  #allocation0 [shape = 'u32[]', space=smem, size = 0x4, offset = 0x4, fixed_abs, tag = 'smem constant byte address 0x4 - core index']
  #allocation1 [shape = 'u32[72,128]{1,0:T(1,128)}', space=vmem, size = 0x9000, scoped, tag = 'internal scratch']
  %s0 = inlined_call_operand.vmem [shape: bf16[16,128], index: 0, kind: input, shape index: {}]
  %s1 = inlined_call_operand.vmem [shape: bf16[128,1024], index: 1, kind: input, shape index: {}]
  %s2 = inlined_call_operand.vmem [shape: f32[1,1024], index: 2, kind: input, shape index: {}]
  %s3 = inlined_call_operand.vmem [shape: f32[16,1024], index: 3, kind: output, shape index: {}]
  %s4 = sld [smem:[#allocation0]]
  $region87: #{cnn_to_lstm_forward.3} parent=0
    _
  %s6 = ssub.s32 1, %s4
  %s7 = scalar_select 0, %s6, %s4
  $region1: #{cnn_to_lstm_forward.3} parent=0
    #allocation2 [shape = 'u8[262144]{0}', space=vmem, size = 0x40000, scoped, tag = 'input window, operand 1']
    #allocation3 [shape = 'u8[65536]{0}', space=vmem, size = 0x10000, scoped, tag = 'output window, operand 0']
    loop: start=0, step=1, limit=4
    $region2: #{cnn_to_lstm_forward.3} parent=1 // loop_pre_header
      _
    $region3: #{cnn_to_lstm_forward.3} parent=1 // loop_header
      %s9 = sphi 0, %s13
      %p10 = scmp.ge.s32.totalorder %s9, 4
      %s17 = sphi 0, %s17
      %s19 = sphi 0, %s17
      %s20 = sphi 0, %s19
      %s34 = sphi 0, %s20
      %s40 = sphi 0, %s42
      %s43 = sphi 0, %s40
      %s44 = sphi 0, %s43
      %s60 = sphi 0, %s44
      %s66 = sphi 0, %s68
      %s69 = sphi 0, %s66
      %s70 = sphi 0, %s69
      %s86 = sphi 0, %s70
      %s92 = sphi 0, %s94
      %s95 = sphi 0, %s92
      %s96 = sphi 0, %s95
      %s112 = sphi 0, %s96
    $region4: #{cnn_to_lstm_forward.3} parent=1 // loop_header_branch
      %12 = sbr.rel (%p10) target = $region8
    $region5: #{cnn_to_lstm_forward.3} parent=1 // loop_body
      %s14 = ssub.s32 %s9, 1
      %s15 = ssub.s32 %s9, 2
      %s16 = sadd.s32 %s9, 1
      %s18 = sadd.s32 %s17, 1
      %p21 = scmp.eq.s32.totalorder %s9, 1
      %p22 = scmp.ne.s32.totalorder %s17, %s19
      %p23 = scmp.eq.s32.totalorder %s9, 0
      %p24 = por %p22, %p23
      %p25 = scmp.ne.s32.totalorder %s17, %s19
      %p26 = scmp.eq.s32.totalorder %s14, 1
      %p27 = por %p25, %p26
      %p28 = scmp.ne.s32.totalorder %s19, %s20
      %p29 = scmp.eq.s32.totalorder %s14, 0
      %p30 = por %p28, %p29
      %p31 = scmp.ne.s32.totalorder %s19, %s20
      %p32 = scmp.eq.s32.totalorder %s15, 1
      %p33 = por %p31, %p32
      %p35 = scmp.ne.s32.totalorder %s20, %s34
      %p36 = scmp.eq.s32.totalorder %s15, 0
      %p37 = por %p35, %p36
      %s38 = ssub.s32 %s9, %s16
      %p39 = scmp.eq.s32.totalorder %s38, 0
      %s41 = sadd.s32 %s40, 1
      %s42 = scalar_select %p39, %s40, %s41
      %p45 = pneg %p39
      %p46 = scmp.eq.s32.totalorder %s9, 1
      %p47 = por %p45, %p46
      %p48 = scmp.ne.s32.totalorder %s40, %s43
      %p49 = scmp.eq.s32.totalorder %s9, 0
      %p50 = por %p48, %p49
      %p51 = scmp.ne.s32.totalorder %s40, %s43
      %p52 = scmp.eq.s32.totalorder %s14, 1
      %p53 = por %p51, %p52
      %p54 = scmp.ne.s32.totalorder %s43, %s44
      %p55 = scmp.eq.s32.totalorder %s14, 0
      %p56 = por %p54, %p55
      %p57 = scmp.ne.s32.totalorder %s43, %s44
      %p58 = scmp.eq.s32.totalorder %s15, 1
      %p59 = por %p57, %p58
      %p61 = scmp.ne.s32.totalorder %s44, %s60
      %p62 = scmp.eq.s32.totalorder %s15, 0
      %p63 = por %p61, %p62
      %s64 = ssub.s32 %s9, %s16
      %p65 = scmp.eq.s32.totalorder %s64, 0
      %s67 = sadd.s32 %s66, 1
      %s68 = scalar_select %p65, %s66, %s67
      %p71 = pneg %p65
      %p72 = scmp.eq.s32.totalorder %s9, 1
      %p73 = por %p71, %p72
      %p74 = scmp.ne.s32.totalorder %s66, %s69
      %p75 = scmp.eq.s32.totalorder %s9, 0
      %p76 = por %p74, %p75
      %p77 = scmp.ne.s32.totalorder %s66, %s69
      %p78 = scmp.eq.s32.totalorder %s14, 1
      %p79 = por %p77, %p78
      %p80 = scmp.ne.s32.totalorder %s69, %s70
      %p81 = scmp.eq.s32.totalorder %s14, 0
      %p82 = por %p80, %p81
      %p83 = scmp.ne.s32.totalorder %s69, %s70
      %p84 = scmp.eq.s32.totalorder %s15, 1
      %p85 = por %p83, %p84
      %p87 = scmp.ne.s32.totalorder %s70, %s86
      %p88 = scmp.eq.s32.totalorder %s15, 0
      %p89 = por %p87, %p88
      %s90 = ssub.s32 %s9, %s16
      %p91 = scmp.eq.s32.totalorder %s90, 0
      %s93 = sadd.s32 %s92, 1
      %s94 = scalar_select %p91, %s92, %s93
      %p97 = pneg %p91
      %p98 = scmp.eq.s32.totalorder %s9, 1
      %p99 = por %p97, %p98
      %p100 = scmp.ne.s32.totalorder %s92, %s95
      %p101 = scmp.eq.s32.totalorder %s9, 0
      %p102 = por %p100, %p101
      %p103 = scmp.ne.s32.totalorder %s92, %s95
      %p104 = scmp.eq.s32.totalorder %s14, 1
      %p105 = por %p103, %p104
      %p106 = scmp.ne.s32.totalorder %s95, %s96
      %p107 = scmp.eq.s32.totalorder %s14, 0
      %p108 = por %p106, %p107
      %p109 = scmp.ne.s32.totalorder %s95, %s96
      %p110 = scmp.eq.s32.totalorder %s15, 1
      %p111 = por %p109, %p110
      %p113 = scmp.ne.s32.totalorder %s96, %s112
      %p114 = scmp.eq.s32.totalorder %s15, 0
      %p115 = por %p113, %p114
      %p116 = scmp.le.s32.totalorder 1, %s9
      %p117 = scmp.lt.s32.totalorder %s9, 3
      %p118 = pnand %p116, %p117
      %p119 = pneg %p118
      // Predicated region
      $region9: #{cnn_to_lstm_forward.3} parent=5 // pred_check
        _
      $region10: #{cnn_to_lstm_forward.3} parent=5 // pred_check_branch
        %121 = sbr.rel (%p118) target = $region12
      $region11: #{cnn_to_lstm_forward.3} parent=5 // pred_region
        %s122 = ssub.s32 %s9, 1
        // Predicated region
        $region13: #{cnn_to_lstm_forward.3} parent=11 // pred_check
          %p123 = pneg %p30
        $region14: #{cnn_to_lstm_forward.3} parent=11 // pred_check_branch
          %125 = sbr.rel (%p123) target = $region16
        $region15: #{cnn_to_lstm_forward.3} parent=11 // pred_region
          _
        $region16: #{cnn_to_lstm_forward.3} parent=11 // pred_fallthru
          _
      $region12: #{cnn_to_lstm_forward.3} parent=5 // pred_fallthru
        _
      %p126 = scmp.lt.s32.totalorder %s9, 2
      // Predicated region
      $region17: #{cnn_to_lstm_forward.3} parent=5 // pred_check
        %p127 = pneg %p126
      $region18: #{cnn_to_lstm_forward.3} parent=5 // pred_check_branch
        %129 = sbr.rel (%p127) target = $region20
      $region19: #{cnn_to_lstm_forward.3} parent=5 // pred_region
        // Predicated region
        $region21: #{cnn_to_lstm_forward.3} parent=19 // pred_check
          %p130 = pneg %p50
        $region22: #{cnn_to_lstm_forward.3} parent=19 // pred_check_branch
          %132 = sbr.rel (%p130) target = $region24
        $region23: #{cnn_to_lstm_forward.3} parent=19 // pred_region
          %s133 = sand.u32 %s40, 1
          %s134 = sand.u32 %s40, 1
          %s135 = smul.addr %s134, 256
          %s136 = scalar_lea.vmem [#allocation2], %s135
          %s137 = smul.u32 4, %s9
          %s138 = smul.addr %s137, 4
          %s139 = scalar_lea.vmem %s1, %s138
          // Predicated region
          $region25: #{cnn_to_lstm_forward.3} parent=23 // pred_check
            _
          $region26: #{cnn_to_lstm_forward.3} parent=23 // pred_check_branch
            %141 = sbr.rel (0) target = $region28
          $region27: #{cnn_to_lstm_forward.3} parent=23 // pred_region
            // Predicated region
            $region29: #{cnn_to_lstm_forward.3} parent=27 // pred_check
              _
            $region30: #{cnn_to_lstm_forward.3} parent=27 // pred_check_branch
              %143 = sbr.rel (0) target = $region32
            $region31: #{cnn_to_lstm_forward.3} parent=27 // pred_region
              loop: start=0, step=1, limit=1
              $region33: #{cnn_to_lstm_forward.3} parent=31 // loop_pre_header
                _
              $region34: #{cnn_to_lstm_forward.3} parent=31 // loop_header
                %s145 = sphi 0, %s149
                %p146 = scmp.ge.s32.totalorder %s145, 1
                %s150 = sphi %s139, %s139
                %s151 = sphi %s136, %s136
              $region35: #{cnn_to_lstm_forward.3} parent=31 // loop_header_branch
                %148 = sbr.rel (%p146) target = $region39
              $region36: #{cnn_to_lstm_forward.3} parent=31 // loop_body
                %v152 = vld [vmem:[%s150] sm:$0xff]
                %153 = vst [vmem:[%s151] sm:$0xff] %v152
                %v154 = vld [vmem:[%s150 + $0x8] sm:$0xff]
                %155 = vst [vmem:[%s151 + $0x8] sm:$0xff] %v154
                %v156 = vld [vmem:[%s150 + $0x20] sm:$0xff]
                %157 = vst [vmem:[%s151 + $0x10] sm:$0xff] %v156
                %v158 = vld [vmem:[%s150 + $0x28] sm:$0xff]
                %159 = vst [vmem:[%s151 + $0x18] sm:$0xff] %v158
                %v160 = vld [vmem:[%s150 + $0x40] sm:$0xff]
                %161 = vst [vmem:[%s151 + $0x20] sm:$0xff] %v160
                %v162 = vld [vmem:[%s150 + $0x48] sm:$0xff]
                %163 = vst [vmem:[%s151 + $0x28] sm:$0xff] %v162
                %v164 = vld [vmem:[%s150 + $0x60] sm:$0xff]
                %165 = vst [vmem:[%s151 + $0x30] sm:$0xff] %v164
                %v166 = vld [vmem:[%s150 + $0x68] sm:$0xff]
                %167 = vst [vmem:[%s151 + $0x38] sm:$0xff] %v166
                %v168 = vld [vmem:[%s150 + $0x80] sm:$0xff]
                %169 = vst [vmem:[%s151 + $0x40] sm:$0xff] %v168
                %v170 = vld [vmem:[%s150 + $0x88] sm:$0xff]
                %171 = vst [vmem:[%s151 + $0x48] sm:$0xff] %v170
                %v172 = vld [vmem:[%s150 + $0xa0] sm:$0xff]
                %173 = vst [vmem:[%s151 + $0x50] sm:$0xff] %v172
                %v174 = vld [vmem:[%s150 + $0xa8] sm:$0xff]
                %175 = vst [vmem:[%s151 + $0x58] sm:$0xff] %v174
                %v176 = vld [vmem:[%s150 + $0xc0] sm:$0xff]
                %177 = vst [vmem:[%s151 + $0x60] sm:$0xff] %v176
                %v178 = vld [vmem:[%s150 + $0xc8] sm:$0xff]
                %179 = vst [vmem:[%s151 + $0x68] sm:$0xff] %v178
                %v180 = vld [vmem:[%s150 + $0xe0] sm:$0xff]
                %181 = vst [vmem:[%s151 + $0x70] sm:$0xff] %v180
                %v182 = vld [vmem:[%s150 + $0xe8] sm:$0xff]
                %183 = vst [vmem:[%s151 + $0x78] sm:$0xff] %v182
                %v184 = vld [vmem:[%s150 + $0x100] sm:$0xff]
                %185 = vst [vmem:[%s151 + $0x80] sm:$0xff] %v184
                %v186 = vld [vmem:[%s150 + $0x108] sm:$0xff]
                %187 = vst [vmem:[%s151 + $0x88] sm:$0xff] %v186
                %v188 = vld [vmem:[%s150 + $0x120] sm:$0xff]
                %189 = vst [vmem:[%s151 + $0x90] sm:$0xff] %v188
                %v190 = vld [vmem:[%s150 + $0x128] sm:$0xff]
                %191 = vst [vmem:[%s151 + $0x98] sm:$0xff] %v190
                %v192 = vld [vmem:[%s150 + $0x140] sm:$0xff]
                %193 = vst [vmem:[%s151 + $0xa0] sm:$0xff] %v192
                %v194 = vld [vmem:[%s150 + $0x148] sm:$0xff]
                %195 = vst [vmem:[%s151 + $0xa8] sm:$0xff] %v194
                %v196 = vld [vmem:[%s150 + $0x160] sm:$0xff]
                %197 = vst [vmem:[%s151 + $0xb0] sm:$0xff] %v196
                %v198 = vld [vmem:[%s150 + $0x168] sm:$0xff]
                %199 = vst [vmem:[%s151 + $0xb8] sm:$0xff] %v198
                %v200 = vld [vmem:[%s150 + $0x180] sm:$0xff]
                %201 = vst [vmem:[%s151 + $0xc0] sm:$0xff] %v200
                %v202 = vld [vmem:[%s150 + $0x188] sm:$0xff]
                %203 = vst [vmem:[%s151 + $0xc8] sm:$0xff] %v202
                %v204 = vld [vmem:[%s150 + $0x1a0] sm:$0xff]
                %205 = vst [vmem:[%s151 + $0xd0] sm:$0xff] %v204
                %v206 = vld [vmem:[%s150 + $0x1a8] sm:$0xff]
                %207 = vst [vmem:[%s151 + $0xd8] sm:$0xff] %v206
                %v208 = vld [vmem:[%s150 + $0x1c0] sm:$0xff]
                %209 = vst [vmem:[%s151 + $0xe0] sm:$0xff] %v208
                %v210 = vld [vmem:[%s150 + $0x1c8] sm:$0xff]
                %211 = vst [vmem:[%s151 + $0xe8] sm:$0xff] %v210
                %v212 = vld [vmem:[%s150 + $0x1e0] sm:$0xff]
                %213 = vst [vmem:[%s151 + $0xf0] sm:$0xff] %v212
                %v214 = vld [vmem:[%s150 + $0x1e8] sm:$0xff]
                %215 = vst [vmem:[%s151 + $0xf8] sm:$0xff] %v214
              $region37: #{cnn_to_lstm_forward.3} parent=31 // loop_footer
                %s149 = sadd.s32 1, %s145
              $region38: #{cnn_to_lstm_forward.3} parent=31 // loop_footer_branch
                %144 = sbr.rel target = $region34
              $region39: #{cnn_to_lstm_forward.3} parent=31 // loop_exit
                _
            $region32: #{cnn_to_lstm_forward.3} parent=27 // pred_fallthru
              _
            // Predicated region
            $region40: #{cnn_to_lstm_forward.3} parent=27 // pred_check
              _
            $region41: #{cnn_to_lstm_forward.3} parent=27 // pred_check_branch
              %217 = sbr.rel target = $region43
            $region42: #{cnn_to_lstm_forward.3} parent=27 // pred_region
              _
            $region43: #{cnn_to_lstm_forward.3} parent=27 // pred_fallthru
              _
          $region28: #{cnn_to_lstm_forward.3} parent=23 // pred_fallthru
            _
          %218 = vnop
        $region24: #{cnn_to_lstm_forward.3} parent=19 // pred_fallthru
          _
        // Predicated region
        $region44: #{cnn_to_lstm_forward.3} parent=19 // pred_check
          %p219 = pneg %p76
        $region45: #{cnn_to_lstm_forward.3} parent=19 // pred_check_branch
          %221 = sbr.rel (%p219) target = $region47
        $region46: #{cnn_to_lstm_forward.3} parent=19 // pred_region
          %s222 = smul.u32 4, %s9
          %p223 = scmp.lt.s32.totalorder %s222, 7
          %s224 = scalar_select %p223, %s222, 7
          %s225 = scalar_lea.vmem %s2, %s224
          %s226 = smul.u32 4, %s9
        $region47: #{cnn_to_lstm_forward.3} parent=19 // pred_fallthru
          _
      $region20: #{cnn_to_lstm_forward.3} parent=5 // pred_fallthru
        _
      %p227 = scmp.le.s32.totalorder 1, %s9
      %p228 = scmp.lt.s32.totalorder %s9, 3
      %p229 = pnand %p227, %p228
      %p230 = pneg %p229
      // Predicated region
      $region48: #{cnn_to_lstm_forward.3} parent=5 // pred_check
        _
      $region49: #{cnn_to_lstm_forward.3} parent=5 // pred_check_branch
        %232 = sbr.rel (%p229) target = $region51
      $region50: #{cnn_to_lstm_forward.3} parent=5 // pred_region
        %s233 = ssub.s32 %s9, 1
        %s234 = sand.u32 %s43, 1
        %s235 = sand.u32 %s43, 1
        %s236 = smul.addr %s235, 256
        %s237 = scalar_lea.vmem [#allocation2], %s236
        // Predicated region
        $region52: #{cnn_to_lstm_forward.3} parent=50 // pred_check
          %p238 = pneg %p56
        $region53: #{cnn_to_lstm_forward.3} parent=50 // pred_check_branch
          %240 = sbr.rel (%p238) target = $region55
        $region54: #{cnn_to_lstm_forward.3} parent=50 // pred_region
          _
        $region55: #{cnn_to_lstm_forward.3} parent=50 // pred_fallthru
          _
        %p241 = pneg %p30
        %p242 = pneg %p27
        %s243 = sand.u32 %s43, 1
        %s244 = sand.u32 %s43, 1
        %s245 = smul.addr %s244, 256
        %s246 = scalar_lea.vmem [#allocation2], %s245
        %p247 = pneg %p56
        %p248 = pneg %p53
        %s249 = smul.u32 4, %s14
        %p250 = scmp.lt.s32.totalorder %s249, 7
        %s251 = scalar_select %p250, %s249, 7
        %s252 = scalar_lea.vmem %s2, %s251
        %p253 = pneg %p82
        %p254 = pneg %p79
        %p255 = pneg %p108
        %p256 = pneg %p105
        %s257 = sand.u32 %s95, 1
        %s258 = sand.u32 %s95, 1
        %s259 = smul.addr %s258, 64
        %s260 = scalar_lea.vmem [#allocation3], %s259
        %s261 = smul.u32 4, %s14
        %s262 = smul.u32 4, %s14
        %p263 = scmp.lt.s32.totalorder %s262, 7
        %s264 = scalar_select %p263, %s262, 7
        %s265 = scalar_lea.vmem %s2, %s264
        %s266 = smul.u32 4, %s14
        %s267 = smul.u32 4, %s14
        %v268 = vld [vmem:[%s0] sm:$0xf]
        %v269 = vld [vmem:[%s0 + $0x4] sm:$0xf]
        %v270 = vld [vmem:[%s237] sm:$0xff]
        %v271 = vld [vmem:[%s237 + $0x8] sm:$0xff]
        %v272 = vld [vmem:[%s237 + $0x10] sm:$0xff]
        %v273 = vld [vmem:[%s237 + $0x18] sm:$0xff]
        %v274 = vld [vmem:[%s237 + $0x20] sm:$0xff]
        %v275 = vld [vmem:[%s237 + $0x28] sm:$0xff]
        %v276 = vld [vmem:[%s237 + $0x30] sm:$0xff]
        %v277 = vld [vmem:[%s237 + $0x38] sm:$0xff]
        %v278 = vld [vmem:[%s237 + $0x40] sm:$0xff]
        %v279 = vld [vmem:[%s237 + $0x48] sm:$0xff]
        %v280 = vld [vmem:[%s237 + $0x50] sm:$0xff]
        %v281 = vld [vmem:[%s237 + $0x58] sm:$0xff]
        %v282 = vld [vmem:[%s237 + $0x60] sm:$0xff]
        %v283 = vld [vmem:[%s237 + $0x68] sm:$0xff]
        %v284 = vld [vmem:[%s237 + $0x70] sm:$0xff]
        %v285 = vld [vmem:[%s237 + $0x78] sm:$0xff]
        %v286 = vld [vmem:[%s237 + $0x80] sm:$0xff]
        %v287 = vld [vmem:[%s237 + $0x88] sm:$0xff]
        %v288 = vld [vmem:[%s237 + $0x90] sm:$0xff]
        %v289 = vld [vmem:[%s237 + $0x98] sm:$0xff]
        %v290 = vld [vmem:[%s237 + $0xa0] sm:$0xff]
        %v291 = vld [vmem:[%s237 + $0xa8] sm:$0xff]
        %v292 = vld [vmem:[%s237 + $0xb0] sm:$0xff]
        %v293 = vld [vmem:[%s237 + $0xb8] sm:$0xff]
        %v294 = vld [vmem:[%s237 + $0xc0] sm:$0xff]
        %v295 = vld [vmem:[%s237 + $0xc8] sm:$0xff]
        %v296 = vld [vmem:[%s237 + $0xd0] sm:$0xff]
        %v297 = vld [vmem:[%s237 + $0xd8] sm:$0xff]
        %v298 = vld [vmem:[%s237 + $0xe0] sm:$0xff]
        %v299 = vld [vmem:[%s237 + $0xe8] sm:$0xff]
        %v300 = vld [vmem:[%s237 + $0xf0] sm:$0xff]
        %v301 = vld [vmem:[%s237 + $0xf8] sm:$0xff]
        %v302 = vld [vmem:[%s265] sm:$0xf]
        %v304 = vperm.slane %v302, 0
        %v305 = vperm.slane %v302, 1
        %v306 = vperm.slane %v302, 2
        %v307 = vperm.slane %v302, 3
        %v314 = vunpack.c.l.b16 %v268
        %v315 = vunpack.c.l.b16 %v269
        %v316 = vpack.c.b16 %v315, %v314
        %v350 = vunpack.c.l.b16 %v270
        %v351 = vunpack.c.h.b16 %v270
        %v352 = vunpack.c.l.b16 %v271
        %v353 = vunpack.c.h.b16 %v271
        %v354 = vunpack.c.l.b16 %v272
        %v355 = vunpack.c.h.b16 %v272
        %v356 = vunpack.c.l.b16 %v273
        %v357 = vunpack.c.h.b16 %v273
        %v358 = vunpack.c.l.b16 %v274
        %v359 = vunpack.c.h.b16 %v274
        %v360 = vunpack.c.l.b16 %v275
        %v361 = vunpack.c.h.b16 %v275
        %v362 = vunpack.c.l.b16 %v276
        %v363 = vunpack.c.h.b16 %v276
        %v364 = vunpack.c.l.b16 %v277
        %v365 = vunpack.c.h.b16 %v277
        %v366 = vunpack.c.l.b16 %v278
        %v367 = vunpack.c.h.b16 %v278
        %v368 = vunpack.c.l.b16 %v279
        %v369 = vunpack.c.h.b16 %v279
        %v370 = vunpack.c.l.b16 %v280
        %v371 = vunpack.c.h.b16 %v280
        %v372 = vunpack.c.l.b16 %v281
        %v373 = vunpack.c.h.b16 %v281
        %v374 = vunpack.c.l.b16 %v282
        %v375 = vunpack.c.h.b16 %v282
        %v376 = vunpack.c.l.b16 %v283
        %v377 = vunpack.c.h.b16 %v283
        %v378 = vunpack.c.l.b16 %v284
        %v379 = vunpack.c.h.b16 %v284
        %v380 = vunpack.c.l.b16 %v285
        %v381 = vunpack.c.h.b16 %v285
        %v382 = vunpack.c.l.b16 %v286
        %v383 = vunpack.c.h.b16 %v286
        %v384 = vunpack.c.l.b16 %v287
        %v385 = vunpack.c.h.b16 %v287
        %v386 = vunpack.c.l.b16 %v288
        %v387 = vunpack.c.h.b16 %v288
        %v388 = vunpack.c.l.b16 %v289
        %v389 = vunpack.c.h.b16 %v289
        %v390 = vunpack.c.l.b16 %v290
        %v391 = vunpack.c.h.b16 %v290
        %v392 = vunpack.c.l.b16 %v291
        %v393 = vunpack.c.h.b16 %v291
        %v394 = vunpack.c.l.b16 %v292
        %v395 = vunpack.c.h.b16 %v292
        %v396 = vunpack.c.l.b16 %v293
        %v397 = vunpack.c.h.b16 %v293
        %v398 = vunpack.c.l.b16 %v294
        %v399 = vunpack.c.h.b16 %v294
        %v400 = vunpack.c.l.b16 %v295
        %v401 = vunpack.c.h.b16 %v295
        %v402 = vunpack.c.l.b16 %v296
        %v403 = vunpack.c.h.b16 %v296
        %v404 = vunpack.c.l.b16 %v297
        %v405 = vunpack.c.h.b16 %v297
        %v406 = vunpack.c.l.b16 %v298
        %v407 = vunpack.c.h.b16 %v298
        %v408 = vunpack.c.l.b16 %v299
        %v409 = vunpack.c.h.b16 %v299
        %v410 = vunpack.c.l.b16 %v300
        %v411 = vunpack.c.h.b16 %v300
        %v412 = vunpack.c.l.b16 %v301
        %v413 = vunpack.c.h.b16 %v301
        %v414 = vpack.c.b16 %v354, %v350
        %v415 = vpack.c.b16 %v355, %v351
        %v416 = vpack.c.b16 %v356, %v352
        %v417 = vpack.c.b16 %v357, %v353
        %v418 = vpack.c.b16 %v362, %v358
        %v419 = vpack.c.b16 %v363, %v359
        %v420 = vpack.c.b16 %v364, %v360
        %v421 = vpack.c.b16 %v365, %v361
        %v422 = vpack.c.b16 %v370, %v366
        %v423 = vpack.c.b16 %v371, %v367
        %v424 = vpack.c.b16 %v372, %v368
        %v425 = vpack.c.b16 %v373, %v369
        %v426 = vpack.c.b16 %v378, %v374
        %v427 = vpack.c.b16 %v379, %v375
        %v428 = vpack.c.b16 %v380, %v376
        %v429 = vpack.c.b16 %v381, %v377
        %v430 = vpack.c.b16 %v386, %v382
        %v431 = vpack.c.b16 %v387, %v383
        %v432 = vpack.c.b16 %v388, %v384
        %v433 = vpack.c.b16 %v389, %v385
        %v434 = vpack.c.b16 %v394, %v390
        %v435 = vpack.c.b16 %v395, %v391
        %v436 = vpack.c.b16 %v396, %v392
        %v437 = vpack.c.b16 %v397, %v393
        %v438 = vpack.c.b16 %v402, %v398
        %v439 = vpack.c.b16 %v403, %v399
        %v440 = vpack.c.b16 %v404, %v400
        %v441 = vpack.c.b16 %v405, %v401
        %v442 = vpack.c.b16 %v410, %v406
        %v443 = vpack.c.b16 %v411, %v407
        %v444 = vpack.c.b16 %v412, %v408
        %v445 = vpack.c.b16 %v413, %v409
        %478 = vmatpush.bf16.msra.mxu0 %v442
        %479 = vmatpush.bf16.msra.mxu0 %v438
        %480 = vmatpush.bf16.msra.mxu0 %v434
        %481 = vmatpush.bf16.msra.mxu0 %v430
        %482 = vmatpush.bf16.msra.mxu0 %v426
        %483 = vmatpush.bf16.msra.mxu0 %v422
        %484 = vmatpush.bf16.msra.mxu0 %v418
        %485 = vmatpush.bf16.msra.mxu0 %v414
        %486 = vmatmul.bf16.gmra.mxu0 %v316
        %v487 = vpop.f32.mrf.mxu0
        %v488 = vadd.f32 %v304, %v487
        %v489 = vpop.f32.mrf.mxu0
        %v490 = vadd.f32 %v304, %v489
        %491 = vdwg.mxu0
        %492 = vmatpush.bf16.msra.mxu0 %v443
        %493 = vmatpush.bf16.msra.mxu0 %v439
        %494 = vmatpush.bf16.msra.mxu0 %v435
        %495 = vmatpush.bf16.msra.mxu0 %v431
        %496 = vmatpush.bf16.msra.mxu0 %v427
        %497 = vmatpush.bf16.msra.mxu0 %v423
        %498 = vmatpush.bf16.msra.mxu0 %v419
        %499 = vmatpush.bf16.msra.mxu0 %v415
        %500 = vmatmul.bf16.gmra.mxu0 %v316
        %v501 = vpop.f32.mrf.mxu0
        %v502 = vadd.f32 %v305, %v501
        %v503 = vpop.f32.mrf.mxu0
        %v504 = vadd.f32 %v305, %v503
        %505 = vdwg.mxu0
        %506 = vmatpush.bf16.msra.mxu0 %v444
        %507 = vmatpush.bf16.msra.mxu0 %v440
        %508 = vmatpush.bf16.msra.mxu0 %v436
        %509 = vmatpush.bf16.msra.mxu0 %v432
        %510 = vmatpush.bf16.msra.mxu0 %v428
        %511 = vmatpush.bf16.msra.mxu0 %v424
        %512 = vmatpush.bf16.msra.mxu0 %v420
        %513 = vmatpush.bf16.msra.mxu0 %v416
        %514 = vmatmul.bf16.gmra.mxu0 %v316
        %v515 = vpop.f32.mrf.mxu0
        %v516 = vadd.f32 %v306, %v515
        %v517 = vpop.f32.mrf.mxu0
        %v518 = vadd.f32 %v306, %v517
        %519 = vdwg.mxu0
        %520 = vmatpush.bf16.msra.mxu0 %v445
        %521 = vmatpush.bf16.msra.mxu0 %v441
        %522 = vmatpush.bf16.msra.mxu0 %v437
        %523 = vmatpush.bf16.msra.mxu0 %v433
        %524 = vmatpush.bf16.msra.mxu0 %v429
        %525 = vmatpush.bf16.msra.mxu0 %v425
        %526 = vmatpush.bf16.msra.mxu0 %v421
        %527 = vmatpush.bf16.msra.mxu0 %v417
        %528 = vmatmul.bf16.gmra.mxu0 %v316
        %v529 = vpop.f32.mrf.mxu0
        %v530 = vadd.f32 %v307, %v529
        %v531 = vpop.f32.mrf.mxu0
        %v532 = vadd.f32 %v307, %v531
        %533 = vdwg.mxu0
        %534 = vst [vmem:[%s260] sm:$0xff] %v488
        %535 = vst [vmem:[%s260 + $0x8] sm:$0xff] %v502
        %536 = vst [vmem:[%s260 + $0x10] sm:$0xff] %v516
        %537 = vst [vmem:[%s260 + $0x18] sm:$0xff] %v530
        %538 = vst [vmem:[%s260 + $0x20] sm:$0xff] %v490
        %539 = vst [vmem:[%s260 + $0x28] sm:$0xff] %v504
        %540 = vst [vmem:[%s260 + $0x30] sm:$0xff] %v518
        %541 = vst [vmem:[%s260 + $0x38] sm:$0xff] %v532
        %s542 = sand.u32 %s95, 1
        %s543 = sand.u32 %s95, 1
        %s544 = smul.addr %s543, 64
        %s545 = scalar_lea.vmem [#allocation3], %s544
        // Predicated region
        $region56: #{cnn_to_lstm_forward.3} parent=50 // pred_check
          %p546 = pneg %p105
        $region57: #{cnn_to_lstm_forward.3} parent=50 // pred_check_branch
          %548 = sbr.rel (%p546) target = $region59
        $region58: #{cnn_to_lstm_forward.3} parent=50 // pred_region
          %s549 = smul.u32 4, %s14
          %s550 = smul.addr %s549, 8
          %s551 = scalar_lea.vmem %s3, %s550
          // Predicated region
          $region60: #{cnn_to_lstm_forward.3} parent=58 // pred_check
            _
          $region61: #{cnn_to_lstm_forward.3} parent=58 // pred_check_branch
            %553 = sbr.rel (0) target = $region63
          $region62: #{cnn_to_lstm_forward.3} parent=58 // pred_region
            // Predicated region
            $region64: #{cnn_to_lstm_forward.3} parent=62 // pred_check
              _
            $region65: #{cnn_to_lstm_forward.3} parent=62 // pred_check_branch
              %555 = sbr.rel (0) target = $region67
            $region66: #{cnn_to_lstm_forward.3} parent=62 // pred_region
              loop: start=0, step=1, limit=1
              $region68: #{cnn_to_lstm_forward.3} parent=66 // loop_pre_header
                _
              $region69: #{cnn_to_lstm_forward.3} parent=66 // loop_header
                %s557 = sphi 0, %s561
                %p558 = scmp.ge.s32.totalorder %s557, 1
                %s562 = sphi %s545, %s545
                %s563 = sphi %s551, %s551
              $region70: #{cnn_to_lstm_forward.3} parent=66 // loop_header_branch
                %560 = sbr.rel (%p558) target = $region74
              $region71: #{cnn_to_lstm_forward.3} parent=66 // loop_body
                %v564 = vld [vmem:[%s562] sm:$0xff]
                %565 = vst [vmem:[%s563] sm:$0xff] %v564
                %v566 = vld [vmem:[%s562 + $0x8] sm:$0xff]
                %567 = vst [vmem:[%s563 + $0x8] sm:$0xff] %v566
                %v568 = vld [vmem:[%s562 + $0x10] sm:$0xff]
                %569 = vst [vmem:[%s563 + $0x10] sm:$0xff] %v568
                %v570 = vld [vmem:[%s562 + $0x18] sm:$0xff]
                %571 = vst [vmem:[%s563 + $0x18] sm:$0xff] %v570
                %v572 = vld [vmem:[%s562 + $0x20] sm:$0xff]
                %573 = vst [vmem:[%s563 + $0x40] sm:$0xff] %v572
                %v574 = vld [vmem:[%s562 + $0x28] sm:$0xff]
                %575 = vst [vmem:[%s563 + $0x48] sm:$0xff] %v574
                %v576 = vld [vmem:[%s562 + $0x30] sm:$0xff]
                %577 = vst [vmem:[%s563 + $0x50] sm:$0xff] %v576
                %v578 = vld [vmem:[%s562 + $0x38] sm:$0xff]
                %579 = vst [vmem:[%s563 + $0x58] sm:$0xff] %v578
              $region72: #{cnn_to_lstm_forward.3} parent=66 // loop_footer
                %s561 = sadd.s32 1, %s557
              $region73: #{cnn_to_lstm_forward.3} parent=66 // loop_footer_branch
                %556 = sbr.rel target = $region69
              $region74: #{cnn_to_lstm_forward.3} parent=66 // loop_exit
                _
            $region67: #{cnn_to_lstm_forward.3} parent=62 // pred_fallthru
              _
            // Predicated region
            $region75: #{cnn_to_lstm_forward.3} parent=62 // pred_check
              _
            $region76: #{cnn_to_lstm_forward.3} parent=62 // pred_check_branch
              %581 = sbr.rel target = $region78
            $region77: #{cnn_to_lstm_forward.3} parent=62 // pred_region
              _
            $region78: #{cnn_to_lstm_forward.3} parent=62 // pred_fallthru
              _
          $region63: #{cnn_to_lstm_forward.3} parent=58 // pred_fallthru
            _
          %582 = vnop
        $region59: #{cnn_to_lstm_forward.3} parent=50 // pred_fallthru
          _
      $region51: #{cnn_to_lstm_forward.3} parent=5 // pred_fallthru
        _
      %p583 = scmp.le.s32.totalorder 2, %s9
      // Predicated region
      $region79: #{cnn_to_lstm_forward.3} parent=5 // pred_check
        %p584 = pneg %p583
      $region80: #{cnn_to_lstm_forward.3} parent=5 // pred_check_branch
        %586 = sbr.rel (%p584) target = $region82
      $region81: #{cnn_to_lstm_forward.3} parent=5 // pred_region
        %s587 = ssub.s32 %s9, 2
        // Predicated region
        $region83: #{cnn_to_lstm_forward.3} parent=81 // pred_check
          %p588 = pneg %p111
        $region84: #{cnn_to_lstm_forward.3} parent=81 // pred_check_branch
          %590 = sbr.rel (%p588) target = $region86
        $region85: #{cnn_to_lstm_forward.3} parent=81 // pred_region
          %s591 = sand.u32 %s96, 1
          %s592 = sand.u32 %s96, 1
          %s593 = smul.addr %s592, 64
          %s594 = scalar_lea.vmem [#allocation3], %s593
        $region86: #{cnn_to_lstm_forward.3} parent=81 // pred_fallthru
          _
      $region82: #{cnn_to_lstm_forward.3} parent=5 // pred_fallthru
        _
    $region6: #{cnn_to_lstm_forward.3} parent=1 // loop_footer
      %s13 = sadd.s32 1, %s9
    $region7: #{cnn_to_lstm_forward.3} parent=1 // loop_footer_branch
      %8 = sbr.rel target = $region3
    $region8: #{cnn_to_lstm_forward.3} parent=1 // loop_exit
      _

// kernel: cnn_to_lstm_forward.2
$region0: #{cnn_to_lstm_forward.2}
  #allocation0 [shape = 'u32[]', space=smem, size = 0x4, offset = 0x4, fixed_abs, tag = 'smem constant byte address 0x4 - core index']
  #allocation1 [shape = 'u32[72,128]{1,0:T(1,128)}', space=vmem, size = 0x9000, scoped, tag = 'internal scratch']
  #allocation2 [shape = 'f32[16,512]{1,0:T(8,128)}', space=vmem, size = 0x8000, scoped, tag = 'scratch operand']
  #allocation3 [shape = 'f32[2,128]{1,0:T(2,128)}', space=vmem, size = 0x400, scoped, tag = 'scratch operand']
  #allocation4 [shape = 'f32[2,128]{1,0:T(2,128)}', space=vmem, size = 0x400, scoped, tag = 'scratch operand']
  %s0 = inlined_call_operand.vmem [shape: bf16[16,128], index: 0, kind: input, shape index: {}]
  %s1 = inlined_call_operand.vmem [shape: bf16[128,512], index: 1, kind: input, shape index: {}]
  %s2 = inlined_call_operand.vmem [shape: bf16[1,128,512], index: 2, kind: input, shape index: {}]
  %s3 = inlined_call_operand.vmem [shape: bf16[2,128,512], index: 3, kind: input, shape index: {}]
  %s4 = inlined_call_operand.vmem [shape: f32[2,1,512], index: 4, kind: input, shape index: {}]
  %s5 = inlined_call_operand.vmem [shape: bf16[16,128], index: 5, kind: output, shape index: {}]
  %s6 = sld [smem:[#allocation0]]
  $region30: #{cnn_to_lstm_forward.2} parent=0
    _
  %s8 = ssub.s32 1, %s6
  %s9 = scalar_select 0, %s8, %s6
  // Predicated region
  $region2: #{cnn_to_lstm_forward.2} parent=0 // pred_check
    _
  $region3: #{cnn_to_lstm_forward.2} parent=0 // pred_check_branch
    %11 = sbr.rel (0) target = $region5
  $region4: #{cnn_to_lstm_forward.2} parent=0 // pred_region
    _
  $region5: #{cnn_to_lstm_forward.2} parent=0 // pred_fallthru
    _
  // Predicated region
  $region6: #{cnn_to_lstm_forward.2} parent=0 // pred_check
    _
  $region7: #{cnn_to_lstm_forward.2} parent=0 // pred_check_branch
    %13 = sbr.rel (0) target = $region9
  $region8: #{cnn_to_lstm_forward.2} parent=0 // pred_region
    _
  $region9: #{cnn_to_lstm_forward.2} parent=0 // pred_fallthru
    _
  // Predicated region
  $region10: #{cnn_to_lstm_forward.2} parent=0 // pred_check
    _
  $region11: #{cnn_to_lstm_forward.2} parent=0 // pred_check_branch
    %15 = sbr.rel (0) target = $region13
  $region12: #{cnn_to_lstm_forward.2} parent=0 // pred_region
    _
  $region13: #{cnn_to_lstm_forward.2} parent=0 // pred_fallthru
    _
  // Predicated region
  $region14: #{cnn_to_lstm_forward.2} parent=0 // pred_check
    _
  $region15: #{cnn_to_lstm_forward.2} parent=0 // pred_check_branch
    %17 = sbr.rel (0) target = $region17
  $region16: #{cnn_to_lstm_forward.2} parent=0 // pred_region
    _
  $region17: #{cnn_to_lstm_forward.2} parent=0 // pred_fallthru
    _
  // Predicated region
  $region18: #{cnn_to_lstm_forward.2} parent=0 // pred_check
    _
  $region19: #{cnn_to_lstm_forward.2} parent=0 // pred_check_branch
    %19 = sbr.rel (0) target = $region21
  $region20: #{cnn_to_lstm_forward.2} parent=0 // pred_region
    _
  $region21: #{cnn_to_lstm_forward.2} parent=0 // pred_fallthru
    _
  %v20 = vld [vmem:[%s3] sm:$0xff]
  %v21 = vld [vmem:[%s3 + $0x8] sm:$0xff]
  %v22 = vld [vmem:[%s3 + $0x10] sm:$0xff]
  %v23 = vld [vmem:[%s3 + $0x18] sm:$0xff]
  %v24 = vld [vmem:[%s3 + $0x20] sm:$0xff]
  %v25 = vld [vmem:[%s3 + $0x28] sm:$0xff]
  %v26 = vld [vmem:[%s3 + $0x30] sm:$0xff]
  %v27 = vld [vmem:[%s3 + $0x38] sm:$0xff]
  %v28 = vld [vmem:[%s3 + $0x40] sm:$0xff]
  %v29 = vld [vmem:[%s3 + $0x48] sm:$0xff]
  %v30 = vld [vmem:[%s3 + $0x50] sm:$0xff]
  %v31 = vld [vmem:[%s3 + $0x58] sm:$0xff]
  %v32 = vld [vmem:[%s3 + $0x60] sm:$0xff]
  %v33 = vld [vmem:[%s3 + $0x68] sm:$0xff]
  %v34 = vld [vmem:[%s3 + $0x70] sm:$0xff]
  %v35 = vld [vmem:[%s3 + $0x78] sm:$0xff]
  %v36 = vld [vmem:[%s3 + $0x80] sm:$0xff]
  %v37 = vld [vmem:[%s3 + $0x88] sm:$0xff]
  %v38 = vld [vmem:[%s3 + $0x90] sm:$0xff]
  %v39 = vld [vmem:[%s3 + $0x98] sm:$0xff]
  %v40 = vld [vmem:[%s3 + $0xa0] sm:$0xff]
  %v41 = vld [vmem:[%s3 + $0xa8] sm:$0xff]
  %v42 = vld [vmem:[%s3 + $0xb0] sm:$0xff]
  %v43 = vld [vmem:[%s3 + $0xb8] sm:$0xff]
  %v44 = vld [vmem:[%s3 + $0xc0] sm:$0xff]
  %v45 = vld [vmem:[%s3 + $0xc8] sm:$0xff]
  %v46 = vld [vmem:[%s3 + $0xd0] sm:$0xff]
  %v47 = vld [vmem:[%s3 + $0xd8] sm:$0xff]
  %v48 = vld [vmem:[%s3 + $0xe0] sm:$0xff]
  %v49 = vld [vmem:[%s3 + $0xe8] sm:$0xff]
  %v50 = vld [vmem:[%s3 + $0xf0] sm:$0xff]
  %v51 = vld [vmem:[%s3 + $0xf8] sm:$0xff]
  %v52 = vld [vmem:[%s0] sm:$0xf]
  %v53 = vld [vmem:[%s0 + $0x4] sm:$0xf]
  %v54 = vld [vmem:[%s1] sm:$0xff]
  %v55 = vld [vmem:[%s1 + $0x8] sm:$0xff]
  %v56 = vld [vmem:[%s1 + $0x10] sm:$0xff]
  %v57 = vld [vmem:[%s1 + $0x18] sm:$0xff]
  %v58 = vld [vmem:[%s1 + $0x20] sm:$0xff]
  %v59 = vld [vmem:[%s1 + $0x28] sm:$0xff]
  %v60 = vld [vmem:[%s1 + $0x30] sm:$0xff]
  %v61 = vld [vmem:[%s1 + $0x38] sm:$0xff]
  %v62 = vld [vmem:[%s1 + $0x40] sm:$0xff]
  %v63 = vld [vmem:[%s1 + $0x48] sm:$0xff]
  %v64 = vld [vmem:[%s1 + $0x50] sm:$0xff]
  %v65 = vld [vmem:[%s1 + $0x58] sm:$0xff]
  %v66 = vld [vmem:[%s1 + $0x60] sm:$0xff]
  %v67 = vld [vmem:[%s1 + $0x68] sm:$0xff]
  %v68 = vld [vmem:[%s1 + $0x70] sm:$0xff]
  %v69 = vld [vmem:[%s1 + $0x78] sm:$0xff]
  %v70 = vld [vmem:[%s1 + $0x80] sm:$0xff]
  %v71 = vld [vmem:[%s1 + $0x88] sm:$0xff]
  %v72 = vld [vmem:[%s1 + $0x90] sm:$0xff]
  %v73 = vld [vmem:[%s1 + $0x98] sm:$0xff]
  %v74 = vld [vmem:[%s1 + $0xa0] sm:$0xff]
  %v75 = vld [vmem:[%s1 + $0xa8] sm:$0xff]
  %v76 = vld [vmem:[%s1 + $0xb0] sm:$0xff]
  %v77 = vld [vmem:[%s1 + $0xb8] sm:$0xff]
  %v78 = vld [vmem:[%s1 + $0xc0] sm:$0xff]
  %v79 = vld [vmem:[%s1 + $0xc8] sm:$0xff]
  %v80 = vld [vmem:[%s1 + $0xd0] sm:$0xff]
  %v81 = vld [vmem:[%s1 + $0xd8] sm:$0xff]
  %v82 = vld [vmem:[%s1 + $0xe0] sm:$0xff]
  %v83 = vld [vmem:[%s1 + $0xe8] sm:$0xff]
  %v84 = vld [vmem:[%s1 + $0xf0] sm:$0xff]
  %v85 = vld [vmem:[%s1 + $0xf8] sm:$0xff]
  %v86 = vld [vmem:[%s4] sm:$0xf]
  %v88 = vperm.slane %v86, 0
  %v89 = vperm.slane %v86, 1
  %v90 = vperm.slane %v86, 2
  %v91 = vperm.slane %v86, 3
  %v98 = vunpack.c.l.b16 %v52
  %v99 = vunpack.c.l.b16 %v53
  %v100 = vpack.c.b16 %v99, %v98
  %v134 = vunpack.c.l.b16 %v54
  %v135 = vunpack.c.h.b16 %v54
  %v136 = vunpack.c.l.b16 %v55
  %v137 = vunpack.c.h.b16 %v55
  %v138 = vunpack.c.l.b16 %v56
  %v139 = vunpack.c.h.b16 %v56
  %v140 = vunpack.c.l.b16 %v57
  %v141 = vunpack.c.h.b16 %v57
  %v142 = vunpack.c.l.b16 %v58
  %v143 = vunpack.c.h.b16 %v58
  %v144 = vunpack.c.l.b16 %v59
  %v145 = vunpack.c.h.b16 %v59
  %v146 = vunpack.c.l.b16 %v60
  %v147 = vunpack.c.h.b16 %v60
  %v148 = vunpack.c.l.b16 %v61
  %v149 = vunpack.c.h.b16 %v61
  %v150 = vunpack.c.l.b16 %v62
  %v151 = vunpack.c.h.b16 %v62
  %v152 = vunpack.c.l.b16 %v63
  %v153 = vunpack.c.h.b16 %v63
  %v154 = vunpack.c.l.b16 %v64
  %v155 = vunpack.c.h.b16 %v64
  %v156 = vunpack.c.l.b16 %v65
  %v157 = vunpack.c.h.b16 %v65
  %v158 = vunpack.c.l.b16 %v66
  %v159 = vunpack.c.h.b16 %v66
  %v160 = vunpack.c.l.b16 %v67
  %v161 = vunpack.c.h.b16 %v67
  %v162 = vunpack.c.l.b16 %v68
  %v163 = vunpack.c.h.b16 %v68
  %v164 = vunpack.c.l.b16 %v69
  %v165 = vunpack.c.h.b16 %v69
  %v166 = vunpack.c.l.b16 %v70
  %v167 = vunpack.c.h.b16 %v70
  %v168 = vunpack.c.l.b16 %v71
  %v169 = vunpack.c.h.b16 %v71
  %v170 = vunpack.c.l.b16 %v72
  %v171 = vunpack.c.h.b16 %v72
  %v172 = vunpack.c.l.b16 %v73
  %v173 = vunpack.c.h.b16 %v73
  %v174 = vunpack.c.l.b16 %v74
  %v175 = vunpack.c.h.b16 %v74
  %v176 = vunpack.c.l.b16 %v75
  %v177 = vunpack.c.h.b16 %v75
  %v178 = vunpack.c.l.b16 %v76
  %v179 = vunpack.c.h.b16 %v76
  %v180 = vunpack.c.l.b16 %v77
  %v181 = vunpack.c.h.b16 %v77
  %v182 = vunpack.c.l.b16 %v78
  %v183 = vunpack.c.h.b16 %v78
  %v184 = vunpack.c.l.b16 %v79
  %v185 = vunpack.c.h.b16 %v79
  %v186 = vunpack.c.l.b16 %v80
  %v187 = vunpack.c.h.b16 %v80
  %v188 = vunpack.c.l.b16 %v81
  %v189 = vunpack.c.h.b16 %v81
  %v190 = vunpack.c.l.b16 %v82
  %v191 = vunpack.c.h.b16 %v82
  %v192 = vunpack.c.l.b16 %v83
  %v193 = vunpack.c.h.b16 %v83
  %v194 = vunpack.c.l.b16 %v84
  %v195 = vunpack.c.h.b16 %v84
  %v196 = vunpack.c.l.b16 %v85
  %v197 = vunpack.c.h.b16 %v85
  %v198 = vpack.c.b16 %v138, %v134
  %v199 = vpack.c.b16 %v139, %v135
  %v200 = vpack.c.b16 %v140, %v136
  %v201 = vpack.c.b16 %v141, %v137
  %v202 = vpack.c.b16 %v146, %v142
  %v203 = vpack.c.b16 %v147, %v143
  %v204 = vpack.c.b16 %v148, %v144
  %v205 = vpack.c.b16 %v149, %v145
  %v206 = vpack.c.b16 %v154, %v150
  %v207 = vpack.c.b16 %v155, %v151
  %v208 = vpack.c.b16 %v156, %v152
  %v209 = vpack.c.b16 %v157, %v153
  %v210 = vpack.c.b16 %v162, %v158
  %v211 = vpack.c.b16 %v163, %v159
  %v212 = vpack.c.b16 %v164, %v160
  %v213 = vpack.c.b16 %v165, %v161
  %v214 = vpack.c.b16 %v170, %v166
  %v215 = vpack.c.b16 %v171, %v167
  %v216 = vpack.c.b16 %v172, %v168
  %v217 = vpack.c.b16 %v173, %v169
  %v218 = vpack.c.b16 %v178, %v174
  %v219 = vpack.c.b16 %v179, %v175
  %v220 = vpack.c.b16 %v180, %v176
  %v221 = vpack.c.b16 %v181, %v177
  %v222 = vpack.c.b16 %v186, %v182
  %v223 = vpack.c.b16 %v187, %v183
  %v224 = vpack.c.b16 %v188, %v184
  %v225 = vpack.c.b16 %v189, %v185
  %v226 = vpack.c.b16 %v194, %v190
  %v227 = vpack.c.b16 %v195, %v191
  %v228 = vpack.c.b16 %v196, %v192
  %v229 = vpack.c.b16 %v197, %v193
  %262 = vmatpush.bf16.msra.mxu0 %v226
  %263 = vmatpush.bf16.msra.mxu0 %v222
  %264 = vmatpush.bf16.msra.mxu0 %v218
  %265 = vmatpush.bf16.msra.mxu0 %v214
  %266 = vmatpush.bf16.msra.mxu0 %v210
  %267 = vmatpush.bf16.msra.mxu0 %v206
  %268 = vmatpush.bf16.msra.mxu0 %v202
  %269 = vmatpush.bf16.msra.mxu0 %v198
  %270 = vmatmul.bf16.gmra.mxu0 %v100
  %v271 = vpop.f32.mrf.mxu0
  %v272 = vadd.f32 %v88, %v271
  %v273 = vpop.f32.mrf.mxu0
  %v274 = vadd.f32 %v88, %v273
  %275 = vdwg.mxu0
  %276 = vmatpush.bf16.msra.mxu0 %v227
  %277 = vmatpush.bf16.msra.mxu0 %v223
  %278 = vmatpush.bf16.msra.mxu0 %v219
  %279 = vmatpush.bf16.msra.mxu0 %v215
  %280 = vmatpush.bf16.msra.mxu0 %v211
  %281 = vmatpush.bf16.msra.mxu0 %v207
  %282 = vmatpush.bf16.msra.mxu0 %v203
  %283 = vmatpush.bf16.msra.mxu0 %v199
  %284 = vmatmul.bf16.gmra.mxu0 %v100
  %v285 = vpop.f32.mrf.mxu0
  %v286 = vadd.f32 %v89, %v285
  %v287 = vpop.f32.mrf.mxu0
  %v288 = vadd.f32 %v89, %v287
  %289 = vdwg.mxu0
  %290 = vmatpush.bf16.msra.mxu0 %v228
  %291 = vmatpush.bf16.msra.mxu0 %v224
  %292 = vmatpush.bf16.msra.mxu0 %v220
  %293 = vmatpush.bf16.msra.mxu0 %v216
  %294 = vmatpush.bf16.msra.mxu0 %v212
  %295 = vmatpush.bf16.msra.mxu0 %v208
  %296 = vmatpush.bf16.msra.mxu0 %v204
  %297 = vmatpush.bf16.msra.mxu0 %v200
  %298 = vmatmul.bf16.gmra.mxu0 %v100
  %v299 = vpop.f32.mrf.mxu0
  %v300 = vadd.f32 %v90, %v299
  %v301 = vpop.f32.mrf.mxu0
  %v302 = vadd.f32 %v90, %v301
  %303 = vdwg.mxu0
  %304 = vmatpush.bf16.msra.mxu0 %v229
  %305 = vmatpush.bf16.msra.mxu0 %v225
  %306 = vmatpush.bf16.msra.mxu0 %v221
  %307 = vmatpush.bf16.msra.mxu0 %v217
  %308 = vmatpush.bf16.msra.mxu0 %v213
  %309 = vmatpush.bf16.msra.mxu0 %v209
  %310 = vmatpush.bf16.msra.mxu0 %v205
  %311 = vmatpush.bf16.msra.mxu0 %v201
  %312 = vmatmul.bf16.gmra.mxu0 %v100
  %v313 = vpop.f32.mrf.mxu0
  %v314 = vadd.f32 %v91, %v313
  %v315 = vpop.f32.mrf.mxu0
  %v316 = vadd.f32 %v91, %v315
  %317 = vdwg.mxu0
  %318 = vst [vmem:[#allocation2] sm:$0xff] %v272
  %319 = vst [vmem:[#allocation2 + $0x8] sm:$0xff] %v286
  %320 = vst [vmem:[#allocation2 + $0x10] sm:$0xff] %v300
  %321 = vst [vmem:[#allocation2 + $0x18] sm:$0xff] %v314
  %322 = vst [vmem:[#allocation2 + $0x20] sm:$0xff] %v274
  %323 = vst [vmem:[#allocation2 + $0x28] sm:$0xff] %v288
  %324 = vst [vmem:[#allocation2 + $0x30] sm:$0xff] %v302
  %325 = vst [vmem:[#allocation2 + $0x38] sm:$0xff] %v316
  %326 = vst [vmem:[#allocation3] sm:$0x3] 0.0
  %327 = vst [vmem:[#allocation4] sm:$0x3] 0.0
  %v328 = vld [vmem:[#allocation2] sm:$0x3]
  %v329 = vld [vmem:[#allocation2 + $0x8] sm:$0x3]
  %v330 = vld [vmem:[#allocation2 + $0x10] sm:$0x3]
  %v331 = vld [vmem:[#allocation2 + $0x18] sm:$0x3]
  %v332 = vld [vmem:[#allocation3] sm:$0x3]
  %v333 = vpack.c.bf16 %v332, %v332
  %v366 = vunpack.c.l.b16 %v20
  %v367 = vunpack.c.h.b16 %v20
  %v368 = vunpack.c.l.b16 %v21
  %v369 = vunpack.c.h.b16 %v21
  %v370 = vunpack.c.l.b16 %v22
  %v371 = vunpack.c.h.b16 %v22
  %v372 = vunpack.c.l.b16 %v23
  %v373 = vunpack.c.h.b16 %v23
  %v374 = vunpack.c.l.b16 %v24
  %v375 = vunpack.c.h.b16 %v24
  %v376 = vunpack.c.l.b16 %v25
  %v377 = vunpack.c.h.b16 %v25
  %v378 = vunpack.c.l.b16 %v26
  %v379 = vunpack.c.h.b16 %v26
  %v380 = vunpack.c.l.b16 %v27
  %v381 = vunpack.c.h.b16 %v27
  %v382 = vunpack.c.l.b16 %v28
  %v383 = vunpack.c.h.b16 %v28
  %v384 = vunpack.c.l.b16 %v29
  %v385 = vunpack.c.h.b16 %v29
  %v386 = vunpack.c.l.b16 %v30
  %v387 = vunpack.c.h.b16 %v30
  %v388 = vunpack.c.l.b16 %v31
  %v389 = vunpack.c.h.b16 %v31
  %v390 = vunpack.c.l.b16 %v32
  %v391 = vunpack.c.h.b16 %v32
  %v392 = vunpack.c.l.b16 %v33
  %v393 = vunpack.c.h.b16 %v33
  %v394 = vunpack.c.l.b16 %v34
  %v395 = vunpack.c.h.b16 %v34
  %v396 = vunpack.c.l.b16 %v35
  %v397 = vunpack.c.h.b16 %v35
  %v398 = vunpack.c.l.b16 %v36
  %v399 = vunpack.c.h.b16 %v36
  %v400 = vunpack.c.l.b16 %v37
  %v401 = vunpack.c.h.b16 %v37
  %v402 = vunpack.c.l.b16 %v38
  %v403 = vunpack.c.h.b16 %v38
  %v404 = vunpack.c.l.b16 %v39
  %v405 = vunpack.c.h.b16 %v39
  %v406 = vunpack.c.l.b16 %v40
  %v407 = vunpack.c.h.b16 %v40
  %v408 = vunpack.c.l.b16 %v41
  %v409 = vunpack.c.h.b16 %v41
  %v410 = vunpack.c.l.b16 %v42
  %v411 = vunpack.c.h.b16 %v42
  %v412 = vunpack.c.l.b16 %v43
  %v413 = vunpack.c.h.b16 %v43
  %v414 = vunpack.c.l.b16 %v44
  %v415 = vunpack.c.h.b16 %v44
  %v416 = vunpack.c.l.b16 %v45
  %v417 = vunpack.c.h.b16 %v45
  %v418 = vunpack.c.l.b16 %v46
  %v419 = vunpack.c.h.b16 %v46
  %v420 = vunpack.c.l.b16 %v47
  %v421 = vunpack.c.h.b16 %v47
  %v422 = vunpack.c.l.b16 %v48
  %v423 = vunpack.c.h.b16 %v48
  %v424 = vunpack.c.l.b16 %v49
  %v425 = vunpack.c.h.b16 %v49
  %v426 = vunpack.c.l.b16 %v50
  %v427 = vunpack.c.h.b16 %v50
  %v428 = vunpack.c.l.b16 %v51
  %v429 = vunpack.c.h.b16 %v51
  %v430 = vpack.c.b16 %v370, %v366
  %v431 = vpack.c.b16 %v371, %v367
  %v432 = vpack.c.b16 %v372, %v368
  %v433 = vpack.c.b16 %v373, %v369
  %v434 = vpack.c.b16 %v378, %v374
  %v435 = vpack.c.b16 %v379, %v375
  %v436 = vpack.c.b16 %v380, %v376
  %v437 = vpack.c.b16 %v381, %v377
  %v438 = vpack.c.b16 %v386, %v382
  %v439 = vpack.c.b16 %v387, %v383
  %v440 = vpack.c.b16 %v388, %v384
  %v441 = vpack.c.b16 %v389, %v385
  %v442 = vpack.c.b16 %v394, %v390
  %v443 = vpack.c.b16 %v395, %v391
  %v444 = vpack.c.b16 %v396, %v392
  %v445 = vpack.c.b16 %v397, %v393
  %v446 = vpack.c.b16 %v402, %v398
  %v447 = vpack.c.b16 %v403, %v399
  %v448 = vpack.c.b16 %v404, %v400
  %v449 = vpack.c.b16 %v405, %v401
  %v450 = vpack.c.b16 %v410, %v406
  %v451 = vpack.c.b16 %v411, %v407
  %v452 = vpack.c.b16 %v412, %v408
  %v453 = vpack.c.b16 %v413, %v409
  %v454 = vpack.c.b16 %v418, %v414
  %v455 = vpack.c.b16 %v419, %v415
  %v456 = vpack.c.b16 %v420, %v416
  %v457 = vpack.c.b16 %v421, %v417
  %v458 = vpack.c.b16 %v426, %v422
  %v459 = vpack.c.b16 %v427, %v423
  %v460 = vpack.c.b16 %v428, %v424
  %v461 = vpack.c.b16 %v429, %v425
  %494 = vmatpush.bf16.msra.mxu0 %v458
  %495 = vmatpush.bf16.msra.mxu0 %v454
  %496 = vmatpush.bf16.msra.mxu0 %v450
  %497 = vmatpush.bf16.msra.mxu0 %v446
  %498 = vmatpush.bf16.msra.mxu0 %v442
  %499 = vmatpush.bf16.msra.mxu0 %v438
  %500 = vmatpush.bf16.msra.mxu0 %v434
  %501 = vmatpush.bf16.msra.mxu0 %v430
  %502 = vmatmul.bf16.gmra.mxu0 %v333
  %v503 = vpop.f32.mrf.mxu0
  %v504 = vadd.f32 0.0, %v503
  %v505 = vpop.f32.mrf.mxu0
  %506 = vdwg.mxu0
  %507 = vmatpush.bf16.msra.mxu0 %v459
  %508 = vmatpush.bf16.msra.mxu0 %v455
  %509 = vmatpush.bf16.msra.mxu0 %v451
  %510 = vmatpush.bf16.msra.mxu0 %v447
  %511 = vmatpush.bf16.msra.mxu0 %v443
  %512 = vmatpush.bf16.msra.mxu0 %v439
  %513 = vmatpush.bf16.msra.mxu0 %v435
  %514 = vmatpush.bf16.msra.mxu0 %v431
  %515 = vmatmul.bf16.gmra.mxu0 %v333
  %v516 = vpop.f32.mrf.mxu0
  %v517 = vadd.f32 0.0, %v516
  %v518 = vpop.f32.mrf.mxu0
  %519 = vdwg.mxu0
  %520 = vmatpush.bf16.msra.mxu0 %v460
  %521 = vmatpush.bf16.msra.mxu0 %v456
  %522 = vmatpush.bf16.msra.mxu0 %v452
  %523 = vmatpush.bf16.msra.mxu0 %v448
  %524 = vmatpush.bf16.msra.mxu0 %v444
  %525 = vmatpush.bf16.msra.mxu0 %v440
  %526 = vmatpush.bf16.msra.mxu0 %v436
  %527 = vmatpush.bf16.msra.mxu0 %v432
  %528 = vmatmul.bf16.gmra.mxu0 %v333
  %v529 = vpop.f32.mrf.mxu0
  %v530 = vadd.f32 0.0, %v529
  %v531 = vpop.f32.mrf.mxu0
  %532 = vdwg.mxu0
  %533 = vmatpush.bf16.msra.mxu0 %v461
  %534 = vmatpush.bf16.msra.mxu0 %v457
  %535 = vmatpush.bf16.msra.mxu0 %v453
  %536 = vmatpush.bf16.msra.mxu0 %v449
  %537 = vmatpush.bf16.msra.mxu0 %v445
  %538 = vmatpush.bf16.msra.mxu0 %v441
  %539 = vmatpush.bf16.msra.mxu0 %v437
  %540 = vmatpush.bf16.msra.mxu0 %v433
  %541 = vmatmul.bf16.gmra.mxu0 %v333
  %v542 = vpop.f32.mrf.mxu0
  %v543 = vadd.f32 0.0, %v542
  %v544 = vpop.f32.mrf.mxu0
  %545 = vdwg.mxu0
  %v546 = vadd.f32 %v328, %v504
  %v547 = vadd.f32 %v329, %v517
  %v548 = vadd.f32 %v330, %v530
  %v549 = vadd.f32 %v331, %v543
  %v550 = vxor.u32 %v546, 2147483648
  %v551 = vmul.f32 %v550, 1.442695
  %v552 = vpow.pop %v551
  %v553 = vadd.f32 %v552, 1.0
  %v554 = vrcp.pop %v553
  %v555 = vmul.f32 %v553, %v554
  %v556 = vsub.f32 1.0, %v555
  %v557 = vmul.f32 %v554, %v556
  %v558 = vadd.f32 %v554, %v557
  %vm559 = vweird.f32 %v553
  %vm560 = vweird.f32 %v554
  %vm561 = vmor %vm559, %vm560
  %v562 = vsel %vm561, %v554, %v558
  %v563 = vand.u32 2147483647, %v553
  %vm564 = vcmp.eq.f32.partialorder %v563, 8.507059e+37
  %v565 = vand.u32 %v553, 2147483648
  %v566 = vor.u32 1.1754944e-38, %v565
  %v567 = vsel %vm564, %v566, %v562
  %v568 = vmul.f32 1.0, %v567
  %v569 = vxor.u32 %v547, 2147483648
  %v570 = vmul.f32 %v569, 1.442695
  %v571 = vpow.pop %v570
  %v572 = vadd.f32 %v571, 1.0
  %v573 = vrcp.pop %v572
  %v574 = vmul.f32 %v572, %v573
  %v575 = vsub.f32 1.0, %v574
  %v576 = vmul.f32 %v573, %v575
  %v577 = vadd.f32 %v573, %v576
  %vm578 = vweird.f32 %v572
  %vm579 = vweird.f32 %v573
  %vm580 = vmor %vm578, %vm579
  %v581 = vsel %vm580, %v573, %v577
  %v582 = vand.u32 2147483647, %v572
  %vm583 = vcmp.eq.f32.partialorder %v582, 8.507059e+37
  %v584 = vand.u32 %v572, 2147483648
  %v585 = vor.u32 1.1754944e-38, %v584
  %v586 = vsel %vm583, %v585, %v581
  %v587 = vmul.f32 1.0, %v586
  %v588 = vtanh.pop %v548
  %v589 = vxor.u32 %v549, 2147483648
  %v590 = vmul.f32 %v589, 1.442695
  %v591 = vpow.pop %v590
  %v592 = vadd.f32 %v591, 1.0
  %v593 = vrcp.pop %v592
  %v594 = vmul.f32 %v592, %v593
  %v595 = vsub.f32 1.0, %v594
  %v596 = vmul.f32 %v593, %v595
  %v597 = vadd.f32 %v593, %v596
  %vm598 = vweird.f32 %v592
  %vm599 = vweird.f32 %v593
  %vm600 = vmor %vm598, %vm599
  %v601 = vsel %vm600, %v593, %v597
  %v602 = vand.u32 2147483647, %v592
  %vm603 = vcmp.eq.f32.partialorder %v602, 8.507059e+37
  %v604 = vand.u32 %v592, 2147483648
  %v605 = vor.u32 1.1754944e-38, %v604
  %v606 = vsel %vm603, %v605, %v601
  %v607 = vmul.f32 1.0, %v606
  %v608 = vld [vmem:[#allocation4] sm:$0x3]
  %v609 = vmul.f32 %v587, %v608
  %v610 = vmul.f32 %v568, %v588
  %v611 = vadd.f32 %v609, %v610
  %v612 = vtanh.pop %v611
  %v613 = vmul.f32 %v607, %v612
  %614 = vst [vmem:[#allocation4] sm:$0x3] %v611
  %615 = vst [vmem:[#allocation3] sm:$0x3] %v613
  %v616 = vpack.c.bf16 %v613, %v613
  %617 = vst [vmem:[%s5] sm:$0x1] %v616
  %v618 = vld [vmem:[#allocation2] sm:$0xc]
  %v619 = vld [vmem:[#allocation2 + $0x8] sm:$0xc]
  %v620 = vld [vmem:[#allocation2 + $0x10] sm:$0xc]
  %v621 = vld [vmem:[#allocation2 + $0x18] sm:$0xc]
  %v622 = vld [vmem:[#allocation3] sm:$0x3]
  %v623 = vpack.c.bf16 %v622, %v622
  %624 = vmatpush.bf16.msra.mxu0 %v458
  %625 = vmatpush.bf16.msra.mxu0 %v454
  %626 = vmatpush.bf16.msra.mxu0 %v450
  %627 = vmatpush.bf16.msra.mxu0 %v446
  %628 = vmatpush.bf16.msra.mxu0 %v442
  %629 = vmatpush.bf16.msra.mxu0 %v438
  %630 = vmatpush.bf16.msra.mxu0 %v434
  %631 = vmatpush.bf16.msra.mxu0 %v430
  %632 = vmatmul.bf16.gmra.mxu0 %v623
  %v633 = vpop.f32.mrf.mxu0
  %v634 = vadd.f32 0.0, %v633
  %v635 = vpop.f32.mrf.mxu0
  %636 = vdwg.mxu0
  %637 = vmatpush.bf16.msra.mxu0 %v459
  %638 = vmatpush.bf16.msra.mxu0 %v455
  %639 = vmatpush.bf16.msra.mxu0 %v451
  %640 = vmatpush.bf16.msra.mxu0 %v447
  %641 = vmatpush.bf16.msra.mxu0 %v443
  %642 = vmatpush.bf16.msra.mxu0 %v439
  %643 = vmatpush.bf16.msra.mxu0 %v435
  %644 = vmatpush.bf16.msra.mxu0 %v431
  %645 = vmatmul.bf16.gmra.mxu0 %v623
  %v646 = vpop.f32.mrf.mxu0
  %v647 = vadd.f32 0.0, %v646
  %v648 = vpop.f32.mrf.mxu0
  %649 = vdwg.mxu0
  %650 = vmatpush.bf16.msra.mxu0 %v460
  %651 = vmatpush.bf16.msra.mxu0 %v456
  %652 = vmatpush.bf16.msra.mxu0 %v452
  %653 = vmatpush.bf16.msra.mxu0 %v448
  %654 = vmatpush.bf16.msra.mxu0 %v444
  %655 = vmatpush.bf16.msra.mxu0 %v440
  %656 = vmatpush.bf16.msra.mxu0 %v436
  %657 = vmatpush.bf16.msra.mxu0 %v432
  %658 = vmatmul.bf16.gmra.mxu0 %v623
  %v659 = vpop.f32.mrf.mxu0
  %v660 = vadd.f32 0.0, %v659
  %v661 = vpop.f32.mrf.mxu0
  %662 = vdwg.mxu0
  %663 = vmatpush.bf16.msra.mxu0 %v461
  %664 = vmatpush.bf16.msra.mxu0 %v457
  %665 = vmatpush.bf16.msra.mxu0 %v453
  %666 = vmatpush.bf16.msra.mxu0 %v449
  %667 = vmatpush.bf16.msra.mxu0 %v445
  %668 = vmatpush.bf16.msra.mxu0 %v441
  %669 = vmatpush.bf16.msra.mxu0 %v437
  %670 = vmatpush.bf16.msra.mxu0 %v433
  %671 = vmatmul.bf16.gmra.mxu0 %v623
  %v672 = vpop.f32.mrf.mxu0
  %v673 = vadd.f32 0.0, %v672
  %v674 = vpop.f32.mrf.mxu0
  %675 = vdwg.mxu0
  %v680 = vrot.slane %v634, 6
  %v681 = vrot.slane %v647, 6
  %v682 = vrot.slane %v660, 6
  %v683 = vrot.slane %v673, 6
  %v688 = vadd.f32 %v618, %v680
  %v689 = vadd.f32 %v619, %v681
  %v690 = vadd.f32 %v620, %v682
  %v691 = vadd.f32 %v621, %v683
  %v692 = vxor.u32 %v688, 2147483648
  %v693 = vmul.f32 %v692, 1.442695
  %v694 = vpow.pop %v693
  %v695 = vadd.f32 %v694, 1.0
  %v696 = vrcp.pop %v695
  %v697 = vmul.f32 %v695, %v696
  %v698 = vsub.f32 1.0, %v697
  %v699 = vmul.f32 %v696, %v698
  %v700 = vadd.f32 %v696, %v699
  %vm701 = vweird.f32 %v695
  %vm702 = vweird.f32 %v696
  %vm703 = vmor %vm701, %vm702
  %v704 = vsel %vm703, %v696, %v700
  %v705 = vand.u32 2147483647, %v695
  %vm706 = vcmp.eq.f32.partialorder %v705, 8.507059e+37
  %v707 = vand.u32 %v695, 2147483648
  %v708 = vor.u32 1.1754944e-38, %v707
  %v709 = vsel %vm706, %v708, %v704
  %v710 = vmul.f32 1.0, %v709
  %v711 = vxor.u32 %v689, 2147483648
  %v712 = vmul.f32 %v711, 1.442695
  %v713 = vpow.pop %v712
  %v714 = vadd.f32 %v713, 1.0
  %v715 = vrcp.pop %v714
  %v716 = vmul.f32 %v714, %v715
  %v717 = vsub.f32 1.0, %v716
  %v718 = vmul.f32 %v715, %v717
  %v719 = vadd.f32 %v715, %v718
  %vm720 = vweird.f32 %v714
  %vm721 = vweird.f32 %v715
  %vm722 = vmor %vm720, %vm721
  %v723 = vsel %vm722, %v715, %v719
  %v724 = vand.u32 2147483647, %v714
  %vm725 = vcmp.eq.f32.partialorder %v724, 8.507059e+37
  %v726 = vand.u32 %v714, 2147483648
  %v727 = vor.u32 1.1754944e-38, %v726
  %v728 = vsel %vm725, %v727, %v723
  %v729 = vmul.f32 1.0, %v728
  %v730 = vtanh.pop %v690
  %v731 = vxor.u32 %v691, 2147483648
  %v732 = vmul.f32 %v731, 1.442695
  %v733 = vpow.pop %v732
  %v734 = vadd.f32 %v733, 1.0
  %v735 = vrcp.pop %v734
  %v736 = vmul.f32 %v734, %v735
  %v737 = vsub.f32 1.0, %v736
  %v738 = vmul.f32 %v735, %v737
  %v739 = vadd.f32 %v735, %v738
  %vm740 = vweird.f32 %v734
  %vm741 = vweird.f32 %v735
  %vm742 = vmor %vm740, %vm741
  %v743 = vsel %vm742, %v735, %v739
  %v744 = vand.u32 2147483647, %v734
  %vm745 = vcmp.eq.f32.partialorder %v744, 8.507059e+37
  %v746 = vand.u32 %v734, 2147483648
  %v747 = vor.u32 1.1754944e-38, %v746
  %v748 = vsel %vm745, %v747, %v743
  %v749 = vmul.f32 1.0, %v748
  %v750 = vld [vmem:[#allocation4] sm:$0x3]
  %v752 = vrot.slane %v750, 6
  %v754 = vmul.f32 %v729, %v752
  %v755 = vmul.f32 %v710, %v730
  %v756 = vadd.f32 %v754, %v755
  %v757 = vtanh.pop %v756
  %v758 = vmul.f32 %v749, %v757
  %759 = vst [vmem:[#allocation4 - $0x2] sm:$0xc] %v756
  %760 = vst [vmem:[#allocation3 - $0x2] sm:$0xc] %v758
  %v761 = vpack.c.bf16 %v758, %v758
  %762 = vst [vmem:[%s5] sm:$0x2] %v761
  %v763 = vld [vmem:[#allocation2] sm:$0x30]
  %v764 = vld [vmem:[#allocation2 + $0x8] sm:$0x30]
  %v765 = vld [vmem:[#allocation2 + $0x10] sm:$0x30]
  %v766 = vld [vmem:[#allocation2 + $0x18] sm:$0x30]
  %v767 = vld [vmem:[#allocation3] sm:$0x3]
  %v768 = vpack.c.bf16 %v767, %v767
  %769 = vmatpush.bf16.msra.mxu0 %v458
  %770 = vmatpush.bf16.msra.mxu0 %v454
  %771 = vmatpush.bf16.msra.mxu0 %v450
  %772 = vmatpush.bf16.msra.mxu0 %v446
  %773 = vmatpush.bf16.msra.mxu0 %v442
  %774 = vmatpush.bf16.msra.mxu0 %v438
  %775 = vmatpush.bf16.msra.mxu0 %v434
  %776 = vmatpush.bf16.msra.mxu0 %v430
  %777 = vmatmul.bf16.gmra.mxu0 %v768
  %v778 = vpop.f32.mrf.mxu0
  %v779 = vadd.f32 0.0, %v778
  %v780 = vpop.f32.mrf.mxu0
  %781 = vdwg.mxu0
  %782 = vmatpush.bf16.msra.mxu0 %v459
  %783 = vmatpush.bf16.msra.mxu0 %v455
  %784 = vmatpush.bf16.msra.mxu0 %v451
  %785 = vmatpush.bf16.msra.mxu0 %v447
  %786 = vmatpush.bf16.msra.mxu0 %v443
  %787 = vmatpush.bf16.msra.mxu0 %v439
  %788 = vmatpush.bf16.msra.mxu0 %v435
  %789 = vmatpush.bf16.msra.mxu0 %v431
  %790 = vmatmul.bf16.gmra.mxu0 %v768
  %v791 = vpop.f32.mrf.mxu0
  %v792 = vadd.f32 0.0, %v791
  %v793 = vpop.f32.mrf.mxu0
  %794 = vdwg.mxu0
  %795 = vmatpush.bf16.msra.mxu0 %v460
  %796 = vmatpush.bf16.msra.mxu0 %v456
  %797 = vmatpush.bf16.msra.mxu0 %v452
  %798 = vmatpush.bf16.msra.mxu0 %v448
  %799 = vmatpush.bf16.msra.mxu0 %v444
  %800 = vmatpush.bf16.msra.mxu0 %v440
  %801 = vmatpush.bf16.msra.mxu0 %v436
  %802 = vmatpush.bf16.msra.mxu0 %v432
  %803 = vmatmul.bf16.gmra.mxu0 %v768
  %v804 = vpop.f32.mrf.mxu0
  %v805 = vadd.f32 0.0, %v804
  %v806 = vpop.f32.mrf.mxu0
  %807 = vdwg.mxu0
  %808 = vmatpush.bf16.msra.mxu0 %v461
  %809 = vmatpush.bf16.msra.mxu0 %v457
  %810 = vmatpush.bf16.msra.mxu0 %v453
  %811 = vmatpush.bf16.msra.mxu0 %v449
  %812 = vmatpush.bf16.msra.mxu0 %v445
  %813 = vmatpush.bf16.msra.mxu0 %v441
  %814 = vmatpush.bf16.msra.mxu0 %v437
  %815 = vmatpush.bf16.msra.mxu0 %v433
  %816 = vmatmul.bf16.gmra.mxu0 %v768
  %v817 = vpop.f32.mrf.mxu0
  %v818 = vadd.f32 0.0, %v817
  %v819 = vpop.f32.mrf.mxu0
  %820 = vdwg.mxu0
  %v825 = vrot.slane %v779, 4
  %v826 = vrot.slane %v792, 4
  %v827 = vrot.slane %v805, 4
  %v828 = vrot.slane %v818, 4
  %v833 = vadd.f32 %v763, %v825
  %v834 = vadd.f32 %v764, %v826
  %v835 = vadd.f32 %v765, %v827
  %v836 = vadd.f32 %v766, %v828
  %v837 = vxor.u32 %v833, 2147483648
  %v838 = vmul.f32 %v837, 1.442695
  %v839 = vpow.pop %v838
  %v840 = vadd.f32 %v839, 1.0
  %v841 = vrcp.pop %v840
  %v842 = vmul.f32 %v840, %v841
  %v843 = vsub.f32 1.0, %v842
  %v844 = vmul.f32 %v841, %v843
  %v845 = vadd.f32 %v841, %v844
  %vm846 = vweird.f32 %v840
  %vm847 = vweird.f32 %v841
  %vm848 = vmor %vm846, %vm847
  %v849 = vsel %vm848, %v841, %v845
  %v850 = vand.u32 2147483647, %v840
  %vm851 = vcmp.eq.f32.partialorder %v850, 8.507059e+37
  %v852 = vand.u32 %v840, 2147483648
  %v853 = vor.u32 1.1754944e-38, %v852
  %v854 = vsel %vm851, %v853, %v849
  %v855 = vmul.f32 1.0, %v854
  %v856 = vxor.u32 %v834, 2147483648
  %v857 = vmul.f32 %v856, 1.442695
  %v858 = vpow.pop %v857
  %v859 = vadd.f32 %v858, 1.0
  %v860 = vrcp.pop %v859
  %v861 = vmul.f32 %v859, %v860
  %v862 = vsub.f32 1.0, %v861
  %v863 = vmul.f32 %v860, %v862
  %v864 = vadd.f32 %v860, %v863
  %vm865 = vweird.f32 %v859
  %vm866 = vweird.f32 %v860
  %vm867 = vmor %vm865, %vm866
  %v868 = vsel %vm867, %v860, %v864
  %v869 = vand.u32 2147483647, %v859
  %vm870 = vcmp.eq.f32.partialorder %v869, 8.507059e+37
  %v871 = vand.u32 %v859, 2147483648
  %v872 = vor.u32 1.1754944e-38, %v871
  %v873 = vsel %vm870, %v872, %v868
  %v874 = vmul.f32 1.0, %v873
  %v875 = vtanh.pop %v835
  %v876 = vxor.u32 %v836, 2147483648
  %v877 = vmul.f32 %v876, 1.442695
  %v878 = vpow.pop %v877
  %v879 = vadd.f32 %v878, 1.0
  %v880 = vrcp.pop %v879
  %v881 = vmul.f32 %v879, %v880
  %v882 = vsub.f32 1.0, %v881
  %v883 = vmul.f32 %v880, %v882
  %v884 = vadd.f32 %v880, %v883
  %vm885 = vweird.f32 %v879
  %vm886 = vweird.f32 %v880
  %vm887 = vmor %vm885, %vm886
  %v888 = vsel %vm887, %v880, %v884
  %v889 = vand.u32 2147483647, %v879
  %vm890 = vcmp.eq.f32.partialorder %v889, 8.507059e+37
  %v891 = vand.u32 %v879, 2147483648
  %v892 = vor.u32 1.1754944e-38, %v891
  %v893 = vsel %vm890, %v892, %v888
  %v894 = vmul.f32 1.0, %v893
  %v895 = vld [vmem:[#allocation4] sm:$0x3]
  %v897 = vrot.slane %v895, 4
  %v899 = vmul.f32 %v874, %v897
  %v900 = vmul.f32 %v855, %v875
  %v901 = vadd.f32 %v899, %v900
  %v902 = vtanh.pop %v901
  %v903 = vmul.f32 %v894, %v902
  %904 = vst [vmem:[#allocation4 - $0x4] sm:$0x30] %v901
  %905 = vst [vmem:[#allocation3 - $0x4] sm:$0x30] %v903
  %v906 = vpack.c.bf16 %v903, %v903
  %907 = vst [vmem:[%s5] sm:$0x4] %v906
  %v908 = vld [vmem:[#allocation2] sm:$0xc0]
  %v909 = vld [vmem:[#allocation2 + $0x8] sm:$0xc0]
  %v910 = vld [vmem:[#allocation2 + $0x10] sm:$0xc0]
  %v911 = vld [vmem:[#allocation2 + $0x18] sm:$0xc0]
  %v912 = vld [vmem:[#allocation3] sm:$0x3]
  %v913 = vpack.c.bf16 %v912, %v912
  %914 = vmatpush.bf16.msra.mxu0 %v458
  %915 = vmatpush.bf16.msra.mxu0 %v454
  %916 = vmatpush.bf16.msra.mxu0 %v450
  %917 = vmatpush.bf16.msra.mxu0 %v446
  %918 = vmatpush.bf16.msra.mxu0 %v442
  %919 = vmatpush.bf16.msra.mxu0 %v438
  %920 = vmatpush.bf16.msra.mxu0 %v434
  %921 = vmatpush.bf16.msra.mxu0 %v430
  %922 = vmatmul.bf16.gmra.mxu0 %v913
  %v923 = vpop.f32.mrf.mxu0
  %v924 = vadd.f32 0.0, %v923
  %v925 = vpop.f32.mrf.mxu0
  %926 = vdwg.mxu0
  %927 = vmatpush.bf16.msra.mxu0 %v459
  %928 = vmatpush.bf16.msra.mxu0 %v455
  %929 = vmatpush.bf16.msra.mxu0 %v451
  %930 = vmatpush.bf16.msra.mxu0 %v447
  %931 = vmatpush.bf16.msra.mxu0 %v443
  %932 = vmatpush.bf16.msra.mxu0 %v439
  %933 = vmatpush.bf16.msra.mxu0 %v435
  %934 = vmatpush.bf16.msra.mxu0 %v431
  %935 = vmatmul.bf16.gmra.mxu0 %v913
  %v936 = vpop.f32.mrf.mxu0
  %v937 = vadd.f32 0.0, %v936
  %v938 = vpop.f32.mrf.mxu0
  %939 = vdwg.mxu0
  %940 = vmatpush.bf16.msra.mxu0 %v460
  %941 = vmatpush.bf16.msra.mxu0 %v456
  %942 = vmatpush.bf16.msra.mxu0 %v452
  %943 = vmatpush.bf16.msra.mxu0 %v448
  %944 = vmatpush.bf16.msra.mxu0 %v444
  %945 = vmatpush.bf16.msra.mxu0 %v440
  %946 = vmatpush.bf16.msra.mxu0 %v436
  %947 = vmatpush.bf16.msra.mxu0 %v432
  %948 = vmatmul.bf16.gmra.mxu0 %v913
  %v949 = vpop.f32.mrf.mxu0
  %v950 = vadd.f32 0.0, %v949
  %v951 = vpop.f32.mrf.mxu0
  %952 = vdwg.mxu0
  %953 = vmatpush.bf16.msra.mxu0 %v461
  %954 = vmatpush.bf16.msra.mxu0 %v457
  %955 = vmatpush.bf16.msra.mxu0 %v453
  %956 = vmatpush.bf16.msra.mxu0 %v449
  %957 = vmatpush.bf16.msra.mxu0 %v445
  %958 = vmatpush.bf16.msra.mxu0 %v441
  %959 = vmatpush.bf16.msra.mxu0 %v437
  %960 = vmatpush.bf16.msra.mxu0 %v433
  %961 = vmatmul.bf16.gmra.mxu0 %v913
  %v962 = vpop.f32.mrf.mxu0
  %v963 = vadd.f32 0.0, %v962
  %v964 = vpop.f32.mrf.mxu0
  %965 = vdwg.mxu0
  %v970 = vrot.slane %v924, 2
  %v971 = vrot.slane %v937, 2
  %v972 = vrot.slane %v950, 2
  %v973 = vrot.slane %v963, 2
  %v978 = vadd.f32 %v908, %v970
  %v979 = vadd.f32 %v909, %v971
  %v980 = vadd.f32 %v910, %v972
  %v981 = vadd.f32 %v911, %v973
  %v982 = vxor.u32 %v978, 2147483648
  %v983 = vmul.f32 %v982, 1.442695
  %v984 = vpow.pop %v983
  %v985 = vadd.f32 %v984, 1.0
  %v986 = vrcp.pop %v985
  %v987 = vmul.f32 %v985, %v986
  %v988 = vsub.f32 1.0, %v987
  %v989 = vmul.f32 %v986, %v988
  %v990 = vadd.f32 %v986, %v989
  %vm991 = vweird.f32 %v985
  %vm992 = vweird.f32 %v986
  %vm993 = vmor %vm991, %vm992
  %v994 = vsel %vm993, %v986, %v990
  %v995 = vand.u32 2147483647, %v985
  %vm996 = vcmp.eq.f32.partialorder %v995, 8.507059e+37
  %v997 = vand.u32 %v985, 2147483648
  %v998 = vor.u32 1.1754944e-38, %v997
  %v999 = vsel %vm996, %v998, %v994
  %v1000 = vmul.f32 1.0, %v999
  %v1001 = vxor.u32 %v979, 2147483648
  %v1002 = vmul.f32 %v1001, 1.442695
  %v1003 = vpow.pop %v1002
  %v1004 = vadd.f32 %v1003, 1.0
  %v1005 = vrcp.pop %v1004
  %v1006 = vmul.f32 %v1004, %v1005
  %v1007 = vsub.f32 1.0, %v1006
  %v1008 = vmul.f32 %v1005, %v1007
  %v1009 = vadd.f32 %v1005, %v1008
  %vm1010 = vweird.f32 %v1004
  %vm1011 = vweird.f32 %v1005
  %vm1012 = vmor %vm1010, %vm1011
  %v1013 = vsel %vm1012, %v1005, %v1009
  %v1014 = vand.u32 2147483647, %v1004
  %vm1015 = vcmp.eq.f32.partialorder %v1014, 8.507059e+37
  %v1016 = vand.u32 %v1004, 2147483648
  %v1017 = vor.u32 1.1754944e-38, %v1016
  %v1018 = vsel %vm1015, %v1017, %v1013
  %v1019 = vmul.f32 1.0, %v1018
  %v1020 = vtanh.pop %v980
  %v1021 = vxor.u32 %v981, 2147483648
  %v1022 = vmul.f32 %v1021, 1.442695
  %v1023 = vpow.pop %v1022
  %v1024 = vadd.f32 %v1023, 1.0
  %v1025 = vrcp.pop %v1024
  %v1026 = vmul.f32 %v1024, %v1025
  %v1027 = vsub.f32 1.0, %v1026
  %v1028 = vmul.f32 %v1025, %v1027
  %v1029 = vadd.f32 %v1025, %v1028
  %vm1030 = vweird.f32 %v1024
  %vm1031 = vweird.f32 %v1025
  %vm1032 = vmor %vm1030, %vm1031
  %v1033 = vsel %vm1032, %v1025, %v1029
  %v1034 = vand.u32 2147483647, %v1024
  %vm1035 = vcmp.eq.f32.partialorder %v1034, 8.507059e+37
  %v1036 = vand.u32 %v1024, 2147483648
  %v1037 = vor.u32 1.1754944e-38, %v1036
  %v1038 = vsel %vm1035, %v1037, %v1033
  %v1039 = vmul.f32 1.0, %v1038
  %v1040 = vld [vmem:[#allocation4] sm:$0x3]
  %v1042 = vrot.slane %v1040, 2
  %v1044 = vmul.f32 %v1019, %v1042
  %v1045 = vmul.f32 %v1000, %v1020
  %v1046 = vadd.f32 %v1044, %v1045
  %v1047 = vtanh.pop %v1046
  %v1048 = vmul.f32 %v1039, %v1047
  %1049 = vst [vmem:[#allocation4 - $0x6] sm:$0xc0] %v1046
  %1050 = vst [vmem:[#allocation3 - $0x6] sm:$0xc0] %v1048
  %v1051 = vpack.c.bf16 %v1048, %v1048
  %1052 = vst [vmem:[%s5] sm:$0x8] %v1051
  %v1053 = vld [vmem:[#allocation2 + $0x20] sm:$0x3]
  %v1054 = vld [vmem:[#allocation2 + $0x28] sm:$0x3]
  %v1055 = vld [vmem:[#allocation2 + $0x30] sm:$0x3]
  %v1056 = vld [vmem:[#allocation2 + $0x38] sm:$0x3]
  %v1057 = vld [vmem:[#allocation3] sm:$0x3]
  %v1058 = vpack.c.bf16 %v1057, %v1057
  %1059 = vmatpush.bf16.msra.mxu0 %v458
  %1060 = vmatpush.bf16.msra.mxu0 %v454
  %1061 = vmatpush.bf16.msra.mxu0 %v450
  %1062 = vmatpush.bf16.msra.mxu0 %v446
  %1063 = vmatpush.bf16.msra.mxu0 %v442
  %1064 = vmatpush.bf16.msra.mxu0 %v438
  %1065 = vmatpush.bf16.msra.mxu0 %v434
  %1066 = vmatpush.bf16.msra.mxu0 %v430
  %1067 = vmatmul.bf16.gmra.mxu0 %v1058
  %v1068 = vpop.f32.mrf.mxu0
  %v1069 = vadd.f32 0.0, %v1068
  %v1070 = vpop.f32.mrf.mxu0
  %1071 = vdwg.mxu0
  %1072 = vmatpush.bf16.msra.mxu0 %v459
  %1073 = vmatpush.bf16.msra.mxu0 %v455
  %1074 = vmatpush.bf16.msra.mxu0 %v451
  %1075 = vmatpush.bf16.msra.mxu0 %v447
  %1076 = vmatpush.bf16.msra.mxu0 %v443
  %1077 = vmatpush.bf16.msra.mxu0 %v439
  %1078 = vmatpush.bf16.msra.mxu0 %v435
  %1079 = vmatpush.bf16.msra.mxu0 %v431
  %1080 = vmatmul.bf16.gmra.mxu0 %v1058
  %v1081 = vpop.f32.mrf.mxu0
  %v1082 = vadd.f32 0.0, %v1081
  %v1083 = vpop.f32.mrf.mxu0
  %1084 = vdwg.mxu0
  %1085 = vmatpush.bf16.msra.mxu0 %v460
  %1086 = vmatpush.bf16.msra.mxu0 %v456
  %1087 = vmatpush.bf16.msra.mxu0 %v452
  %1088 = vmatpush.bf16.msra.mxu0 %v448
  %1089 = vmatpush.bf16.msra.mxu0 %v444
  %1090 = vmatpush.bf16.msra.mxu0 %v440
  %1091 = vmatpush.bf16.msra.mxu0 %v436
  %1092 = vmatpush.bf16.msra.mxu0 %v432
  %1093 = vmatmul.bf16.gmra.mxu0 %v1058
  %v1094 = vpop.f32.mrf.mxu0
  %v1095 = vadd.f32 0.0, %v1094
  %v1096 = vpop.f32.mrf.mxu0
  %1097 = vdwg.mxu0
  %1098 = vmatpush.bf16.msra.mxu0 %v461
  %1099 = vmatpush.bf16.msra.mxu0 %v457
  %1100 = vmatpush.bf16.msra.mxu0 %v453
  %1101 = vmatpush.bf16.msra.mxu0 %v449
  %1102 = vmatpush.bf16.msra.mxu0 %v445
  %1103 = vmatpush.bf16.msra.mxu0 %v441
  %1104 = vmatpush.bf16.msra.mxu0 %v437
  %1105 = vmatpush.bf16.msra.mxu0 %v433
  %1106 = vmatmul.bf16.gmra.mxu0 %v1058
  %v1107 = vpop.f32.mrf.mxu0
  %v1108 = vadd.f32 0.0, %v1107
  %v1109 = vpop.f32.mrf.mxu0
  %1110 = vdwg.mxu0
  %v1111 = vadd.f32 %v1053, %v1069
  %v1112 = vadd.f32 %v1054, %v1082
  %v1113 = vadd.f32 %v1055, %v1095
  %v1114 = vadd.f32 %v1056, %v1108
  %v1115 = vxor.u32 %v1111, 2147483648
  %v1116 = vmul.f32 %v1115, 1.442695
  %v1117 = vpow.pop %v1116
  %v1118 = vadd.f32 %v1117, 1.0
  %v1119 = vrcp.pop %v1118
  %v1120 = vmul.f32 %v1118, %v1119
  %v1121 = vsub.f32 1.0, %v1120
  %v1122 = vmul.f32 %v1119, %v1121
  %v1123 = vadd.f32 %v1119, %v1122
  %vm1124 = vweird.f32 %v1118
  %vm1125 = vweird.f32 %v1119
  %vm1126 = vmor %vm1124, %vm1125
  %v1127 = vsel %vm1126, %v1119, %v1123
  %v1128 = vand.u32 2147483647, %v1118
  %vm1129 = vcmp.eq.f32.partialorder %v1128, 8.507059e+37
  %v1130 = vand.u32 %v1118, 2147483648
  %v1131 = vor.u32 1.1754944e-38, %v1130
  %v1132 = vsel %vm1129, %v1131, %v1127
  %v1133 = vmul.f32 1.0, %v1132
  %v1134 = vxor.u32 %v1112, 2147483648
  %v1135 = vmul.f32 %v1134, 1.442695
  %v1136 = vpow.pop %v1135
  %v1137 = vadd.f32 %v1136, 1.0
  %v1138 = vrcp.pop %v1137
  %v1139 = vmul.f32 %v1137, %v1138
  %v1140 = vsub.f32 1.0, %v1139
  %v1141 = vmul.f32 %v1138, %v1140
  %v1142 = vadd.f32 %v1138, %v1141
  %vm1143 = vweird.f32 %v1137
  %vm1144 = vweird.f32 %v1138
  %vm1145 = vmor %vm1143, %vm1144
  %v1146 = vsel %vm1145, %v1138, %v1142
  %v1147 = vand.u32 2147483647, %v1137
  %vm1148 = vcmp.eq.f32.partialorder %v1147, 8.507059e+37
  %v1149 = vand.u32 %v1137, 2147483648
  %v1150 = vor.u32 1.1754944e-38, %v1149
  %v1151 = vsel %vm1148, %v1150, %v1146
  %v1152 = vmul.f32 1.0, %v1151
  %v1153 = vtanh.pop %v1113
  %v1154 = vxor.u32 %v1114, 2147483648
  %v1155 = vmul.f32 %v1154, 1.442695
  %v1156 = vpow.pop %v1155
  %v1157 = vadd.f32 %v1156, 1.0
  %v1158 = vrcp.pop %v1157
  %v1159 = vmul.f32 %v1157, %v1158
  %v1160 = vsub.f32 1.0, %v1159
  %v1161 = vmul.f32 %v1158, %v1160
  %v1162 = vadd.f32 %v1158, %v1161
  %vm1163 = vweird.f32 %v1157
  %vm1164 = vweird.f32 %v1158
  %vm1165 = vmor %vm1163, %vm1164
  %v1166 = vsel %vm1165, %v1158, %v1162
  %v1167 = vand.u32 2147483647, %v1157
  %vm1168 = vcmp.eq.f32.partialorder %v1167, 8.507059e+37
  %v1169 = vand.u32 %v1157, 2147483648
  %v1170 = vor.u32 1.1754944e-38, %v1169
  %v1171 = vsel %vm1168, %v1170, %v1166
  %v1172 = vmul.f32 1.0, %v1171
  %v1173 = vld [vmem:[#allocation4] sm:$0x3]
  %v1174 = vmul.f32 %v1152, %v1173
  %v1175 = vmul.f32 %v1133, %v1153
  %v1176 = vadd.f32 %v1174, %v1175
  %v1177 = vtanh.pop %v1176
  %v1178 = vmul.f32 %v1172, %v1177
  %1179 = vst [vmem:[#allocation4] sm:$0x3] %v1176
  %1180 = vst [vmem:[#allocation3] sm:$0x3] %v1178
  %v1181 = vpack.c.bf16 %v1178, %v1178
  %1182 = vst [vmem:[%s5 + $0x4] sm:$0x1] %v1181
  %v1183 = vld [vmem:[#allocation2 + $0x20] sm:$0xc]
  %v1184 = vld [vmem:[#allocation2 + $0x28] sm:$0xc]
  %v1185 = vld [vmem:[#allocation2 + $0x30] sm:$0xc]
  %v1186 = vld [vmem:[#allocation2 + $0x38] sm:$0xc]
  %v1187 = vld [vmem:[#allocation3] sm:$0x3]
  %v1188 = vpack.c.bf16 %v1187, %v1187
  %1189 = vmatpush.bf16.msra.mxu0 %v458
  %1190 = vmatpush.bf16.msra.mxu0 %v454
  %1191 = vmatpush.bf16.msra.mxu0 %v450
  %1192 = vmatpush.bf16.msra.mxu0 %v446
  %1193 = vmatpush.bf16.msra.mxu0 %v442
  %1194 = vmatpush.bf16.msra.mxu0 %v438
  %1195 = vmatpush.bf16.msra.mxu0 %v434
  %1196 = vmatpush.bf16.msra.mxu0 %v430
  %1197 = vmatmul.bf16.gmra.mxu0 %v1188
  %v1198 = vpop.f32.mrf.mxu0
  %v1199 = vadd.f32 0.0, %v1198
  %v1200 = vpop.f32.mrf.mxu0
  %1201 = vdwg.mxu0
  %1202 = vmatpush.bf16.msra.mxu0 %v459
  %1203 = vmatpush.bf16.msra.mxu0 %v455
  %1204 = vmatpush.bf16.msra.mxu0 %v451
  %1205 = vmatpush.bf16.msra.mxu0 %v447
  %1206 = vmatpush.bf16.msra.mxu0 %v443
  %1207 = vmatpush.bf16.msra.mxu0 %v439
  %1208 = vmatpush.bf16.msra.mxu0 %v435
  %1209 = vmatpush.bf16.msra.mxu0 %v431
  %1210 = vmatmul.bf16.gmra.mxu0 %v1188
  %v1211 = vpop.f32.mrf.mxu0
  %v1212 = vadd.f32 0.0, %v1211
  %v1213 = vpop.f32.mrf.mxu0
  %1214 = vdwg.mxu0
  %1215 = vmatpush.bf16.msra.mxu0 %v460
  %1216 = vmatpush.bf16.msra.mxu0 %v456
  %1217 = vmatpush.bf16.msra.mxu0 %v452
  %1218 = vmatpush.bf16.msra.mxu0 %v448
  %1219 = vmatpush.bf16.msra.mxu0 %v444
  %1220 = vmatpush.bf16.msra.mxu0 %v440
  %1221 = vmatpush.bf16.msra.mxu0 %v436
  %1222 = vmatpush.bf16.msra.mxu0 %v432
  %1223 = vmatmul.bf16.gmra.mxu0 %v1188
  %v1224 = vpop.f32.mrf.mxu0
  %v1225 = vadd.f32 0.0, %v1224
  %v1226 = vpop.f32.mrf.mxu0
  %1227 = vdwg.mxu0
  %1228 = vmatpush.bf16.msra.mxu0 %v461
  %1229 = vmatpush.bf16.msra.mxu0 %v457
  %1230 = vmatpush.bf16.msra.mxu0 %v453
  %1231 = vmatpush.bf16.msra.mxu0 %v449
  %1232 = vmatpush.bf16.msra.mxu0 %v445
  %1233 = vmatpush.bf16.msra.mxu0 %v441
  %1234 = vmatpush.bf16.msra.mxu0 %v437
  %1235 = vmatpush.bf16.msra.mxu0 %v433
  %1236 = vmatmul.bf16.gmra.mxu0 %v1188
  %v1237 = vpop.f32.mrf.mxu0
  %v1238 = vadd.f32 0.0, %v1237
  %v1239 = vpop.f32.mrf.mxu0
  %1240 = vdwg.mxu0
  %v1245 = vrot.slane %v1199, 6
  %v1246 = vrot.slane %v1212, 6
  %v1247 = vrot.slane %v1225, 6
  %v1248 = vrot.slane %v1238, 6
  %v1253 = vadd.f32 %v1183, %v1245
  %v1254 = vadd.f32 %v1184, %v1246
  %v1255 = vadd.f32 %v1185, %v1247
  %v1256 = vadd.f32 %v1186, %v1248
  %v1257 = vxor.u32 %v1253, 2147483648
  %v1258 = vmul.f32 %v1257, 1.442695
  %v1259 = vpow.pop %v1258
  %v1260 = vadd.f32 %v1259, 1.0
  %v1261 = vrcp.pop %v1260
  %v1262 = vmul.f32 %v1260, %v1261
  %v1263 = vsub.f32 1.0, %v1262
  %v1264 = vmul.f32 %v1261, %v1263
  %v1265 = vadd.f32 %v1261, %v1264
  %vm1266 = vweird.f32 %v1260
  %vm1267 = vweird.f32 %v1261
  %vm1268 = vmor %vm1266, %vm1267
  %v1269 = vsel %vm1268, %v1261, %v1265
  %v1270 = vand.u32 2147483647, %v1260
  %vm1271 = vcmp.eq.f32.partialorder %v1270, 8.507059e+37
  %v1272 = vand.u32 %v1260, 2147483648
  %v1273 = vor.u32 1.1754944e-38, %v1272
  %v1274 = vsel %vm1271, %v1273, %v1269
  %v1275 = vmul.f32 1.0, %v1274
  %v1276 = vxor.u32 %v1254, 2147483648
  %v1277 = vmul.f32 %v1276, 1.442695
  %v1278 = vpow.pop %v1277
  %v1279 = vadd.f32 %v1278, 1.0
  %v1280 = vrcp.pop %v1279
  %v1281 = vmul.f32 %v1279, %v1280
  %v1282 = vsub.f32 1.0, %v1281
  %v1283 = vmul.f32 %v1280, %v1282
  %v1284 = vadd.f32 %v1280, %v1283
  %vm1285 = vweird.f32 %v1279
  %vm1286 = vweird.f32 %v1280
  %vm1287 = vmor %vm1285, %vm1286
  %v1288 = vsel %vm1287, %v1280, %v1284
  %v1289 = vand.u32 2147483647, %v1279
  %vm1290 = vcmp.eq.f32.partialorder %v1289, 8.507059e+37
  %v1291 = vand.u32 %v1279, 2147483648
  %v1292 = vor.u32 1.1754944e-38, %v1291
  %v1293 = vsel %vm1290, %v1292, %v1288
  %v1294 = vmul.f32 1.0, %v1293
  %v1295 = vtanh.pop %v1255
  %v1296 = vxor.u32 %v1256, 2147483648
  %v1297 = vmul.f32 %v1296, 1.442695
  %v1298 = vpow.pop %v1297
  %v1299 = vadd.f32 %v1298, 1.0
  %v1300 = vrcp.pop %v1299
  %v1301 = vmul.f32 %v1299, %v1300
  %v1302 = vsub.f32 1.0, %v1301
  %v1303 = vmul.f32 %v1300, %v1302
  %v1304 = vadd.f32 %v1300, %v1303
  %vm1305 = vweird.f32 %v1299
  %vm1306 = vweird.f32 %v1300
  %vm1307 = vmor %vm1305, %vm1306
  %v1308 = vsel %vm1307, %v1300, %v1304
  %v1309 = vand.u32 2147483647, %v1299
  %vm1310 = vcmp.eq.f32.partialorder %v1309, 8.507059e+37
  %v1311 = vand.u32 %v1299, 2147483648
  %v1312 = vor.u32 1.1754944e-38, %v1311
  %v1313 = vsel %vm1310, %v1312, %v1308
  %v1314 = vmul.f32 1.0, %v1313
  %v1315 = vld [vmem:[#allocation4] sm:$0x3]
  %v1317 = vrot.slane %v1315, 6
  %v1319 = vmul.f32 %v1294, %v1317
  %v1320 = vmul.f32 %v1275, %v1295
  %v1321 = vadd.f32 %v1319, %v1320
  %v1322 = vtanh.pop %v1321
  %v1323 = vmul.f32 %v1314, %v1322
  %1324 = vst [vmem:[#allocation4 - $0x2] sm:$0xc] %v1321
  %1325 = vst [vmem:[#allocation3 - $0x2] sm:$0xc] %v1323
  %v1326 = vpack.c.bf16 %v1323, %v1323
  %1327 = vst [vmem:[%s5 + $0x4] sm:$0x2] %v1326
  %v1328 = vld [vmem:[#allocation2 + $0x20] sm:$0x30]
  %v1329 = vld [vmem:[#allocation2 + $0x28] sm:$0x30]
  %v1330 = vld [vmem:[#allocation2 + $0x30] sm:$0x30]
  %v1331 = vld [vmem:[#allocation2 + $0x38] sm:$0x30]
  %v1332 = vld [vmem:[#allocation3] sm:$0x3]
  %v1333 = vpack.c.bf16 %v1332, %v1332
  %1334 = vmatpush.bf16.msra.mxu0 %v458
  %1335 = vmatpush.bf16.msra.mxu0 %v454
  %1336 = vmatpush.bf16.msra.mxu0 %v450
  %1337 = vmatpush.bf16.msra.mxu0 %v446
  %1338 = vmatpush.bf16.msra.mxu0 %v442
  %1339 = vmatpush.bf16.msra.mxu0 %v438
  %1340 = vmatpush.bf16.msra.mxu0 %v434
  %1341 = vmatpush.bf16.msra.mxu0 %v430
  %1342 = vmatmul.bf16.gmra.mxu0 %v1333
  %v1343 = vpop.f32.mrf.mxu0
  %v1344 = vadd.f32 0.0, %v1343
  %v1345 = vpop.f32.mrf.mxu0
  %1346 = vdwg.mxu0
  %1347 = vmatpush.bf16.msra.mxu0 %v459
  %1348 = vmatpush.bf16.msra.mxu0 %v455
  %1349 = vmatpush.bf16.msra.mxu0 %v451
  %1350 = vmatpush.bf16.msra.mxu0 %v447
  %1351 = vmatpush.bf16.msra.mxu0 %v443
  %1352 = vmatpush.bf16.msra.mxu0 %v439
  %1353 = vmatpush.bf16.msra.mxu0 %v435
  %1354 = vmatpush.bf16.msra.mxu0 %v431
  %1355 = vmatmul.bf16.gmra.mxu0 %v1333
  %v1356 = vpop.f32.mrf.mxu0
  %v1357 = vadd.f32 0.0, %v1356
  %v1358 = vpop.f32.mrf.mxu0
  %1359 = vdwg.mxu0
  %1360 = vmatpush.bf16.msra.mxu0 %v460
  %1361 = vmatpush.bf16.msra.mxu0 %v456
  %1362 = vmatpush.bf16.msra.mxu0 %v452
  %1363 = vmatpush.bf16.msra.mxu0 %v448
  %1364 = vmatpush.bf16.msra.mxu0 %v444
  %1365 = vmatpush.bf16.msra.mxu0 %v440
  %1366 = vmatpush.bf16.msra.mxu0 %v436
  %1367 = vmatpush.bf16.msra.mxu0 %v432
  %1368 = vmatmul.bf16.gmra.mxu0 %v1333
  %v1369 = vpop.f32.mrf.mxu0
  %v1370 = vadd.f32 0.0, %v1369
  %v1371 = vpop.f32.mrf.mxu0
  %1372 = vdwg.mxu0
  %1373 = vmatpush.bf16.msra.mxu0 %v461
  %1374 = vmatpush.bf16.msra.mxu0 %v457
  %1375 = vmatpush.bf16.msra.mxu0 %v453
  %1376 = vmatpush.bf16.msra.mxu0 %v449
  %1377 = vmatpush.bf16.msra.mxu0 %v445
  %1378 = vmatpush.bf16.msra.mxu0 %v441
  %1379 = vmatpush.bf16.msra.mxu0 %v437
  %1380 = vmatpush.bf16.msra.mxu0 %v433
  %1381 = vmatmul.bf16.gmra.mxu0 %v1333
  %v1382 = vpop.f32.mrf.mxu0
  %v1383 = vadd.f32 0.0, %v1382
  %v1384 = vpop.f32.mrf.mxu0
  %1385 = vdwg.mxu0
  %v1390 = vrot.slane %v1344, 4
  %v1391 = vrot.slane %v1357, 4
  %v1392 = vrot.slane %v1370, 4
  %v1393 = vrot.slane %v1383, 4
  %v1398 = vadd.f32 %v1328, %v1390
  %v1399 = vadd.f32 %v1329, %v1391
  %v1400 = vadd.f32 %v1330, %v1392
  %v1401 = vadd.f32 %v1331, %v1393
  %v1402 = vxor.u32 %v1398, 2147483648
  %v1403 = vmul.f32 %v1402, 1.442695
  %v1404 = vpow.pop %v1403
  %v1405 = vadd.f32 %v1404, 1.0
  %v1406 = vrcp.pop %v1405
  %v1407 = vmul.f32 %v1405, %v1406
  %v1408 = vsub.f32 1.0, %v1407
  %v1409 = vmul.f32 %v1406, %v1408
  %v1410 = vadd.f32 %v1406, %v1409
  %vm1411 = vweird.f32 %v1405
  %vm1412 = vweird.f32 %v1406
  %vm1413 = vmor %vm1411, %vm1412
  %v1414 = vsel %vm1413, %v1406, %v1410
  %v1415 = vand.u32 2147483647, %v1405
  %vm1416 = vcmp.eq.f32.partialorder %v1415, 8.507059e+37
  %v1417 = vand.u32 %v1405, 2147483648
  %v1418 = vor.u32 1.1754944e-38, %v1417
  %v1419 = vsel %vm1416, %v1418, %v1414
  %v1420 = vmul.f32 1.0, %v1419
  %v1421 = vxor.u32 %v1399, 2147483648
  %v1422 = vmul.f32 %v1421, 1.442695
  %v1423 = vpow.pop %v1422
  %v1424 = vadd.f32 %v1423, 1.0
  %v1425 = vrcp.pop %v1424
  %v1426 = vmul.f32 %v1424, %v1425
  %v1427 = vsub.f32 1.0, %v1426
  %v1428 = vmul.f32 %v1425, %v1427
  %v1429 = vadd.f32 %v1425, %v1428
  %vm1430 = vweird.f32 %v1424
  %vm1431 = vweird.f32 %v1425
  %vm1432 = vmor %vm1430, %vm1431
  %v1433 = vsel %vm1432, %v1425, %v1429
  %v1434 = vand.u32 2147483647, %v1424
  %vm1435 = vcmp.eq.f32.partialorder %v1434, 8.507059e+37
  %v1436 = vand.u32 %v1424, 2147483648
  %v1437 = vor.u32 1.1754944e-38, %v1436
  %v1438 = vsel %vm1435, %v1437, %v1433
  %v1439 = vmul.f32 1.0, %v1438
  %v1440 = vtanh.pop %v1400
  %v1441 = vxor.u32 %v1401, 2147483648
  %v1442 = vmul.f32 %v1441, 1.442695
  %v1443 = vpow.pop %v1442
  %v1444 = vadd.f32 %v1443, 1.0
  %v1445 = vrcp.pop %v1444
  %v1446 = vmul.f32 %v1444, %v1445
  %v1447 = vsub.f32 1.0, %v1446
  %v1448 = vmul.f32 %v1445, %v1447
  %v1449 = vadd.f32 %v1445, %v1448
  %vm1450 = vweird.f32 %v1444
  %vm1451 = vweird.f32 %v1445
  %vm1452 = vmor %vm1450, %vm1451
  %v1453 = vsel %vm1452, %v1445, %v1449
  %v1454 = vand.u32 2147483647, %v1444
  %vm1455 = vcmp.eq.f32.partialorder %v1454, 8.507059e+37
  %v1456 = vand.u32 %v1444, 2147483648
  %v1457 = vor.u32 1.1754944e-38, %v1456
  %v1458 = vsel %vm1455, %v1457, %v1453
  %v1459 = vmul.f32 1.0, %v1458
  %v1460 = vld [vmem:[#allocation4] sm:$0x3]
  %v1462 = vrot.slane %v1460, 4
  %v1464 = vmul.f32 %v1439, %v1462
  %v1465 = vmul.f32 %v1420, %v1440
  %v1466 = vadd.f32 %v1464, %v1465
  %v1467 = vtanh.pop %v1466
  %v1468 = vmul.f32 %v1459, %v1467
  %1469 = vst [vmem:[#allocation4 - $0x4] sm:$0x30] %v1466
  %1470 = vst [vmem:[#allocation3 - $0x4] sm:$0x30] %v1468
  %v1471 = vpack.c.bf16 %v1468, %v1468
  %1472 = vst [vmem:[%s5 + $0x4] sm:$0x4] %v1471
  %v1473 = vld [vmem:[#allocation2 + $0x20] sm:$0xc0]
  %v1474 = vld [vmem:[#allocation2 + $0x28] sm:$0xc0]
  %v1475 = vld [vmem:[#allocation2 + $0x30] sm:$0xc0]
  %v1476 = vld [vmem:[#allocation2 + $0x38] sm:$0xc0]
  %v1477 = vld [vmem:[#allocation3] sm:$0x3]
  %v1478 = vpack.c.bf16 %v1477, %v1477
  %1479 = vmatpush.bf16.msra.mxu0 %v458
  %1480 = vmatpush.bf16.msra.mxu0 %v454
  %1481 = vmatpush.bf16.msra.mxu0 %v450
  %1482 = vmatpush.bf16.msra.mxu0 %v446
  %1483 = vmatpush.bf16.msra.mxu0 %v442
  %1484 = vmatpush.bf16.msra.mxu0 %v438
  %1485 = vmatpush.bf16.msra.mxu0 %v434
  %1486 = vmatpush.bf16.msra.mxu0 %v430
  %1487 = vmatmul.bf16.gmra.mxu0 %v1478
  %v1488 = vpop.f32.mrf.mxu0
  %v1489 = vadd.f32 0.0, %v1488
  %v1490 = vpop.f32.mrf.mxu0
  %1491 = vdwg.mxu0
  %1492 = vmatpush.bf16.msra.mxu0 %v459
  %1493 = vmatpush.bf16.msra.mxu0 %v455
  %1494 = vmatpush.bf16.msra.mxu0 %v451
  %1495 = vmatpush.bf16.msra.mxu0 %v447
  %1496 = vmatpush.bf16.msra.mxu0 %v443
  %1497 = vmatpush.bf16.msra.mxu0 %v439
  %1498 = vmatpush.bf16.msra.mxu0 %v435
  %1499 = vmatpush.bf16.msra.mxu0 %v431
  %1500 = vmatmul.bf16.gmra.mxu0 %v1478
  %v1501 = vpop.f32.mrf.mxu0
  %v1502 = vadd.f32 0.0, %v1501
  %v1503 = vpop.f32.mrf.mxu0
  %1504 = vdwg.mxu0
  %1505 = vmatpush.bf16.msra.mxu0 %v460
  %1506 = vmatpush.bf16.msra.mxu0 %v456
  %1507 = vmatpush.bf16.msra.mxu0 %v452
  %1508 = vmatpush.bf16.msra.mxu0 %v448
  %1509 = vmatpush.bf16.msra.mxu0 %v444
  %1510 = vmatpush.bf16.msra.mxu0 %v440
  %1511 = vmatpush.bf16.msra.mxu0 %v436
  %1512 = vmatpush.bf16.msra.mxu0 %v432
  %1513 = vmatmul.bf16.gmra.mxu0 %v1478
  %v1514 = vpop.f32.mrf.mxu0
  %v1515 = vadd.f32 0.0, %v1514
  %v1516 = vpop.f32.mrf.mxu0
  %1517 = vdwg.mxu0
  %1518 = vmatpush.bf16.msra.mxu0 %v461
  %1519 = vmatpush.bf16.msra.mxu0 %v457
  %1520 = vmatpush.bf16.msra.mxu0 %v453
  %1521 = vmatpush.bf16.msra.mxu0 %v449
  %1522 = vmatpush.bf16.msra.mxu0 %v445
  %1523 = vmatpush.bf16.msra.mxu0 %v441
  %1524 = vmatpush.bf16.msra.mxu0 %v437
  %1525 = vmatpush.bf16.msra.mxu0 %v433
  %1526 = vmatmul.bf16.gmra.mxu0 %v1478
  %v1527 = vpop.f32.mrf.mxu0
  %v1528 = vadd.f32 0.0, %v1527
  %v1529 = vpop.f32.mrf.mxu0
  %1530 = vdwg.mxu0
  %v1535 = vrot.slane %v1489, 2
  %v1536 = vrot.slane %v1502, 2
  %v1537 = vrot.slane %v1515, 2
  %v1538 = vrot.slane %v1528, 2
  %v1543 = vadd.f32 %v1473, %v1535
  %v1544 = vadd.f32 %v1474, %v1536
  %v1545 = vadd.f32 %v1475, %v1537
  %v1546 = vadd.f32 %v1476, %v1538
  %v1547 = vxor.u32 %v1543, 2147483648
  %v1548 = vmul.f32 %v1547, 1.442695
  %v1549 = vpow.pop %v1548
  %v1550 = vadd.f32 %v1549, 1.0
  %v1551 = vrcp.pop %v1550
  %v1552 = vmul.f32 %v1550, %v1551
  %v1553 = vsub.f32 1.0, %v1552
  %v1554 = vmul.f32 %v1551, %v1553
  %v1555 = vadd.f32 %v1551, %v1554
  %vm1556 = vweird.f32 %v1550
  %vm1557 = vweird.f32 %v1551
  %vm1558 = vmor %vm1556, %vm1557
  %v1559 = vsel %vm1558, %v1551, %v1555
  %v1560 = vand.u32 2147483647, %v1550
  %vm1561 = vcmp.eq.f32.partialorder %v1560, 8.507059e+37
  %v1562 = vand.u32 %v1550, 2147483648
  %v1563 = vor.u32 1.1754944e-38, %v1562
  %v1564 = vsel %vm1561, %v1563, %v1559
  %v1565 = vmul.f32 1.0, %v1564
  %v1566 = vxor.u32 %v1544, 2147483648
  %v1567 = vmul.f32 %v1566, 1.442695
  %v1568 = vpow.pop %v1567
  %v1569 = vadd.f32 %v1568, 1.0
  %v1570 = vrcp.pop %v1569
  %v1571 = vmul.f32 %v1569, %v1570
  %v1572 = vsub.f32 1.0, %v1571
  %v1573 = vmul.f32 %v1570, %v1572
  %v1574 = vadd.f32 %v1570, %v1573
  %vm1575 = vweird.f32 %v1569
  %vm1576 = vweird.f32 %v1570
  %vm1577 = vmor %vm1575, %vm1576
  %v1578 = vsel %vm1577, %v1570, %v1574
  %v1579 = vand.u32 2147483647, %v1569
  %vm1580 = vcmp.eq.f32.partialorder %v1579, 8.507059e+37
  %v1581 = vand.u32 %v1569, 2147483648
  %v1582 = vor.u32 1.1754944e-38, %v1581
  %v1583 = vsel %vm1580, %v1582, %v1578
  %v1584 = vmul.f32 1.0, %v1583
  %v1585 = vtanh.pop %v1545
  %v1586 = vxor.u32 %v1546, 2147483648
  %v1587 = vmul.f32 %v1586, 1.442695
  %v1588 = vpow.pop %v1587
  %v1589 = vadd.f32 %v1588, 1.0
  %v1590 = vrcp.pop %v1589
  %v1591 = vmul.f32 %v1589, %v1590
  %v1592 = vsub.f32 1.0, %v1591
  %v1593 = vmul.f32 %v1590, %v1592
  %v1594 = vadd.f32 %v1590, %v1593
  %vm1595 = vweird.f32 %v1589
  %vm1596 = vweird.f32 %v1590
  %vm1597 = vmor %vm1595, %vm1596
  %v1598 = vsel %vm1597, %v1590, %v1594
  %v1599 = vand.u32 2147483647, %v1589
  %vm1600 = vcmp.eq.f32.partialorder %v1599, 8.507059e+37
  %v1601 = vand.u32 %v1589, 2147483648
  %v1602 = vor.u32 1.1754944e-38, %v1601
  %v1603 = vsel %vm1600, %v1602, %v1598
  %v1604 = vmul.f32 1.0, %v1603
  %v1605 = vld [vmem:[#allocation4] sm:$0x3]
  %v1607 = vrot.slane %v1605, 2
  %v1609 = vmul.f32 %v1584, %v1607
  %v1610 = vmul.f32 %v1565, %v1585
  %v1611 = vadd.f32 %v1609, %v1610
  %v1612 = vtanh.pop %v1611
  %v1613 = vmul.f32 %v1604, %v1612
  %1614 = vst [vmem:[#allocation4 - $0x6] sm:$0xc0] %v1611
  %1615 = vst [vmem:[#allocation3 - $0x6] sm:$0xc0] %v1613
  %v1616 = vpack.c.bf16 %v1613, %v1613
  %1617 = vst [vmem:[%s5 + $0x4] sm:$0x8] %v1616
  %s1618 = scalar_lea.vmem %s3, 256
  %v1619 = vld [vmem:[%s1618] sm:$0xff]
  %v1620 = vld [vmem:[%s1618 + $0x8] sm:$0xff]
  %v1621 = vld [vmem:[%s1618 + $0x10] sm:$0xff]
  %v1622 = vld [vmem:[%s1618 + $0x18] sm:$0xff]
  %v1623 = vld [vmem:[%s1618 + $0x20] sm:$0xff]
  %v1624 = vld [vmem:[%s1618 + $0x28] sm:$0xff]
  %v1625 = vld [vmem:[%s1618 + $0x30] sm:$0xff]
  %v1626 = vld [vmem:[%s1618 + $0x38] sm:$0xff]
  %v1627 = vld [vmem:[%s1618 + $0x40] sm:$0xff]
  %v1628 = vld [vmem:[%s1618 + $0x48] sm:$0xff]
  %v1629 = vld [vmem:[%s1618 + $0x50] sm:$0xff]
  %v1630 = vld [vmem:[%s1618 + $0x58] sm:$0xff]
  %v1631 = vld [vmem:[%s1618 + $0x60] sm:$0xff]
  %v1632 = vld [vmem:[%s1618 + $0x68] sm:$0xff]
  %v1633 = vld [vmem:[%s1618 + $0x70] sm:$0xff]
  %v1634 = vld [vmem:[%s1618 + $0x78] sm:$0xff]
  %v1635 = vld [vmem:[%s1618 + $0x80] sm:$0xff]
  %v1636 = vld [vmem:[%s1618 + $0x88] sm:$0xff]
  %v1637 = vld [vmem:[%s1618 + $0x90] sm:$0xff]
  %v1638 = vld [vmem:[%s1618 + $0x98] sm:$0xff]
  %v1639 = vld [vmem:[%s1618 + $0xa0] sm:$0xff]
  %v1640 = vld [vmem:[%s1618 + $0xa8] sm:$0xff]
  %v1641 = vld [vmem:[%s1618 + $0xb0] sm:$0xff]
  %v1642 = vld [vmem:[%s1618 + $0xb8] sm:$0xff]
  %v1643 = vld [vmem:[%s1618 + $0xc0] sm:$0xff]
  %v1644 = vld [vmem:[%s1618 + $0xc8] sm:$0xff]
  %v1645 = vld [vmem:[%s1618 + $0xd0] sm:$0xff]
  %v1646 = vld [vmem:[%s1618 + $0xd8] sm:$0xff]
  %v1647 = vld [vmem:[%s1618 + $0xe0] sm:$0xff]
  %v1648 = vld [vmem:[%s1618 + $0xe8] sm:$0xff]
  %v1649 = vld [vmem:[%s1618 + $0xf0] sm:$0xff]
  %v1650 = vld [vmem:[%s1618 + $0xf8] sm:$0xff]
  %v1651 = vld [vmem:[%s5] sm:$0xf]
  %v1652 = vld [vmem:[%s5 + $0x4] sm:$0xf]
  %v1653 = vld [vmem:[%s2] sm:$0xff]
  %v1654 = vld [vmem:[%s2 + $0x8] sm:$0xff]
  %v1655 = vld [vmem:[%s2 + $0x10] sm:$0xff]
  %v1656 = vld [vmem:[%s2 + $0x18] sm:$0xff]
  %v1657 = vld [vmem:[%s2 + $0x20] sm:$0xff]
  %v1658 = vld [vmem:[%s2 + $0x28] sm:$0xff]
  %v1659 = vld [vmem:[%s2 + $0x30] sm:$0xff]
  %v1660 = vld [vmem:[%s2 + $0x38] sm:$0xff]
  %v1661 = vld [vmem:[%s2 + $0x40] sm:$0xff]
  %v1662 = vld [vmem:[%s2 + $0x48] sm:$0xff]
  %v1663 = vld [vmem:[%s2 + $0x50] sm:$0xff]
  %v1664 = vld [vmem:[%s2 + $0x58] sm:$0xff]
  %v1665 = vld [vmem:[%s2 + $0x60] sm:$0xff]
  %v1666 = vld [vmem:[%s2 + $0x68] sm:$0xff]
  %v1667 = vld [vmem:[%s2 + $0x70] sm:$0xff]
  %v1668 = vld [vmem:[%s2 + $0x78] sm:$0xff]
  %v1669 = vld [vmem:[%s2 + $0x80] sm:$0xff]
  %v1670 = vld [vmem:[%s2 + $0x88] sm:$0xff]
  %v1671 = vld [vmem:[%s2 + $0x90] sm:$0xff]
  %v1672 = vld [vmem:[%s2 + $0x98] sm:$0xff]
  %v1673 = vld [vmem:[%s2 + $0xa0] sm:$0xff]
  %v1674 = vld [vmem:[%s2 + $0xa8] sm:$0xff]
  %v1675 = vld [vmem:[%s2 + $0xb0] sm:$0xff]
  %v1676 = vld [vmem:[%s2 + $0xb8] sm:$0xff]
  %v1677 = vld [vmem:[%s2 + $0xc0] sm:$0xff]
  %v1678 = vld [vmem:[%s2 + $0xc8] sm:$0xff]
  %v1679 = vld [vmem:[%s2 + $0xd0] sm:$0xff]
  %v1680 = vld [vmem:[%s2 + $0xd8] sm:$0xff]
  %v1681 = vld [vmem:[%s2 + $0xe0] sm:$0xff]
  %v1682 = vld [vmem:[%s2 + $0xe8] sm:$0xff]
  %v1683 = vld [vmem:[%s2 + $0xf0] sm:$0xff]
  %v1684 = vld [vmem:[%s2 + $0xf8] sm:$0xff]
  %s1685 = scalar_lea.vmem %s4, 4
  %v1686 = vld [vmem:[%s1685] sm:$0xf]
  %v1688 = vperm.slane %v1686, 0
  %v1689 = vperm.slane %v1686, 1
  %v1690 = vperm.slane %v1686, 2
  %v1691 = vperm.slane %v1686, 3
  %v1698 = vunpack.c.l.b16 %v1651
  %v1699 = vunpack.c.l.b16 %v1652
  %v1700 = vpack.c.b16 %v1699, %v1698
  %v1734 = vunpack.c.l.b16 %v1653
  %v1735 = vunpack.c.h.b16 %v1653
  %v1736 = vunpack.c.l.b16 %v1654
  %v1737 = vunpack.c.h.b16 %v1654
  %v1738 = vunpack.c.l.b16 %v1655
  %v1739 = vunpack.c.h.b16 %v1655
  %v1740 = vunpack.c.l.b16 %v1656
  %v1741 = vunpack.c.h.b16 %v1656
  %v1742 = vunpack.c.l.b16 %v1657
  %v1743 = vunpack.c.h.b16 %v1657
  %v1744 = vunpack.c.l.b16 %v1658
  %v1745 = vunpack.c.h.b16 %v1658
  %v1746 = vunpack.c.l.b16 %v1659
  %v1747 = vunpack.c.h.b16 %v1659
  %v1748 = vunpack.c.l.b16 %v1660
  %v1749 = vunpack.c.h.b16 %v1660
  %v1750 = vunpack.c.l.b16 %v1661
  %v1751 = vunpack.c.h.b16 %v1661
  %v1752 = vunpack.c.l.b16 %v1662
  %v1753 = vunpack.c.h.b16 %v1662
  %v1754 = vunpack.c.l.b16 %v1663
  %v1755 = vunpack.c.h.b16 %v1663
  %v1756 = vunpack.c.l.b16 %v1664
  %v1757 = vunpack.c.h.b16 %v1664
  %v1758 = vunpack.c.l.b16 %v1665
  %v1759 = vunpack.c.h.b16 %v1665
  %v1760 = vunpack.c.l.b16 %v1666
  %v1761 = vunpack.c.h.b16 %v1666
  %v1762 = vunpack.c.l.b16 %v1667
  %v1763 = vunpack.c.h.b16 %v1667
  %v1764 = vunpack.c.l.b16 %v1668
  %v1765 = vunpack.c.h.b16 %v1668
  %v1766 = vunpack.c.l.b16 %v1669
  %v1767 = vunpack.c.h.b16 %v1669
  %v1768 = vunpack.c.l.b16 %v1670
  %v1769 = vunpack.c.h.b16 %v1670
  %v1770 = vunpack.c.l.b16 %v1671
  %v1771 = vunpack.c.h.b16 %v1671
  %v1772 = vunpack.c.l.b16 %v1672
  %v1773 = vunpack.c.h.b16 %v1672
  %v1774 = vunpack.c.l.b16 %v1673
  %v1775 = vunpack.c.h.b16 %v1673
  %v1776 = vunpack.c.l.b16 %v1674
  %v1777 = vunpack.c.h.b16 %v1674
  %v1778 = vunpack.c.l.b16 %v1675
  %v1779 = vunpack.c.h.b16 %v1675
  %v1780 = vunpack.c.l.b16 %v1676
  %v1781 = vunpack.c.h.b16 %v1676
  %v1782 = vunpack.c.l.b16 %v1677
  %v1783 = vunpack.c.h.b16 %v1677
  %v1784 = vunpack.c.l.b16 %v1678
  %v1785 = vunpack.c.h.b16 %v1678
  %v1786 = vunpack.c.l.b16 %v1679
  %v1787 = vunpack.c.h.b16 %v1679
  %v1788 = vunpack.c.l.b16 %v1680
  %v1789 = vunpack.c.h.b16 %v1680
  %v1790 = vunpack.c.l.b16 %v1681
  %v1791 = vunpack.c.h.b16 %v1681
  %v1792 = vunpack.c.l.b16 %v1682
  %v1793 = vunpack.c.h.b16 %v1682
  %v1794 = vunpack.c.l.b16 %v1683
  %v1795 = vunpack.c.h.b16 %v1683
  %v1796 = vunpack.c.l.b16 %v1684
  %v1797 = vunpack.c.h.b16 %v1684
  %v1798 = vpack.c.b16 %v1738, %v1734
  %v1799 = vpack.c.b16 %v1739, %v1735
  %v1800 = vpack.c.b16 %v1740, %v1736
  %v1801 = vpack.c.b16 %v1741, %v1737
  %v1802 = vpack.c.b16 %v1746, %v1742
  %v1803 = vpack.c.b16 %v1747, %v1743
  %v1804 = vpack.c.b16 %v1748, %v1744
  %v1805 = vpack.c.b16 %v1749, %v1745
  %v1806 = vpack.c.b16 %v1754, %v1750
  %v1807 = vpack.c.b16 %v1755, %v1751
  %v1808 = vpack.c.b16 %v1756, %v1752
  %v1809 = vpack.c.b16 %v1757, %v1753
  %v1810 = vpack.c.b16 %v1762, %v1758
  %v1811 = vpack.c.b16 %v1763, %v1759
  %v1812 = vpack.c.b16 %v1764, %v1760
  %v1813 = vpack.c.b16 %v1765, %v1761
  %v1814 = vpack.c.b16 %v1770, %v1766
  %v1815 = vpack.c.b16 %v1771, %v1767
  %v1816 = vpack.c.b16 %v1772, %v1768
  %v1817 = vpack.c.b16 %v1773, %v1769
  %v1818 = vpack.c.b16 %v1778, %v1774
  %v1819 = vpack.c.b16 %v1779, %v1775
  %v1820 = vpack.c.b16 %v1780, %v1776
  %v1821 = vpack.c.b16 %v1781, %v1777
  %v1822 = vpack.c.b16 %v1786, %v1782
  %v1823 = vpack.c.b16 %v1787, %v1783
  %v1824 = vpack.c.b16 %v1788, %v1784
  %v1825 = vpack.c.b16 %v1789, %v1785
  %v1826 = vpack.c.b16 %v1794, %v1790
  %v1827 = vpack.c.b16 %v1795, %v1791
  %v1828 = vpack.c.b16 %v1796, %v1792
  %v1829 = vpack.c.b16 %v1797, %v1793
  %1862 = vmatpush.bf16.msra.mxu0 %v1826
  %1863 = vmatpush.bf16.msra.mxu0 %v1822
  %1864 = vmatpush.bf16.msra.mxu0 %v1818
  %1865 = vmatpush.bf16.msra.mxu0 %v1814
  %1866 = vmatpush.bf16.msra.mxu0 %v1810
  %1867 = vmatpush.bf16.msra.mxu0 %v1806
  %1868 = vmatpush.bf16.msra.mxu0 %v1802
  %1869 = vmatpush.bf16.msra.mxu0 %v1798
  %1870 = vmatmul.bf16.gmra.mxu0 %v1700
  %v1871 = vpop.f32.mrf.mxu0
  %v1872 = vadd.f32 %v1688, %v1871
  %v1873 = vpop.f32.mrf.mxu0
  %v1874 = vadd.f32 %v1688, %v1873
  %1875 = vdwg.mxu0
  %1876 = vmatpush.bf16.msra.mxu0 %v1827
  %1877 = vmatpush.bf16.msra.mxu0 %v1823
  %1878 = vmatpush.bf16.msra.mxu0 %v1819
  %1879 = vmatpush.bf16.msra.mxu0 %v1815
  %1880 = vmatpush.bf16.msra.mxu0 %v1811
  %1881 = vmatpush.bf16.msra.mxu0 %v1807
  %1882 = vmatpush.bf16.msra.mxu0 %v1803
  %1883 = vmatpush.bf16.msra.mxu0 %v1799
  %1884 = vmatmul.bf16.gmra.mxu0 %v1700
  %v1885 = vpop.f32.mrf.mxu0
  %v1886 = vadd.f32 %v1689, %v1885
  %v1887 = vpop.f32.mrf.mxu0
  %v1888 = vadd.f32 %v1689, %v1887
  %1889 = vdwg.mxu0
  %1890 = vmatpush.bf16.msra.mxu0 %v1828
  %1891 = vmatpush.bf16.msra.mxu0 %v1824
  %1892 = vmatpush.bf16.msra.mxu0 %v1820
  %1893 = vmatpush.bf16.msra.mxu0 %v1816
  %1894 = vmatpush.bf16.msra.mxu0 %v1812
  %1895 = vmatpush.bf16.msra.mxu0 %v1808
  %1896 = vmatpush.bf16.msra.mxu0 %v1804
  %1897 = vmatpush.bf16.msra.mxu0 %v1800
  %1898 = vmatmul.bf16.gmra.mxu0 %v1700
  %v1899 = vpop.f32.mrf.mxu0
  %v1900 = vadd.f32 %v1690, %v1899
  %v1901 = vpop.f32.mrf.mxu0
  %v1902 = vadd.f32 %v1690, %v1901
  %1903 = vdwg.mxu0
  %1904 = vmatpush.bf16.msra.mxu0 %v1829
  %1905 = vmatpush.bf16.msra.mxu0 %v1825
  %1906 = vmatpush.bf16.msra.mxu0 %v1821
  %1907 = vmatpush.bf16.msra.mxu0 %v1817
  %1908 = vmatpush.bf16.msra.mxu0 %v1813
  %1909 = vmatpush.bf16.msra.mxu0 %v1809
  %1910 = vmatpush.bf16.msra.mxu0 %v1805
  %1911 = vmatpush.bf16.msra.mxu0 %v1801
  %1912 = vmatmul.bf16.gmra.mxu0 %v1700
  %v1913 = vpop.f32.mrf.mxu0
  %v1914 = vadd.f32 %v1691, %v1913
  %v1915 = vpop.f32.mrf.mxu0
  %v1916 = vadd.f32 %v1691, %v1915
  %1917 = vdwg.mxu0
  %1918 = vst [vmem:[#allocation2] sm:$0xff] %v1872
  %1919 = vst [vmem:[#allocation2 + $0x8] sm:$0xff] %v1886
  %1920 = vst [vmem:[#allocation2 + $0x10] sm:$0xff] %v1900
  %1921 = vst [vmem:[#allocation2 + $0x18] sm:$0xff] %v1914
  %1922 = vst [vmem:[#allocation2 + $0x20] sm:$0xff] %v1874
  %1923 = vst [vmem:[#allocation2 + $0x28] sm:$0xff] %v1888
  %1924 = vst [vmem:[#allocation2 + $0x30] sm:$0xff] %v1902
  %1925 = vst [vmem:[#allocation2 + $0x38] sm:$0xff] %v1916
  %1926 = vst [vmem:[#allocation3] sm:$0x3] 0.0
  %1927 = vst [vmem:[#allocation4] sm:$0x3] 0.0
  %v1928 = vld [vmem:[#allocation2] sm:$0x3]
  %v1929 = vld [vmem:[#allocation2 + $0x8] sm:$0x3]
  %v1930 = vld [vmem:[#allocation2 + $0x10] sm:$0x3]
  %v1931 = vld [vmem:[#allocation2 + $0x18] sm:$0x3]
  %v1932 = vld [vmem:[#allocation3] sm:$0x3]
  %v1933 = vpack.c.bf16 %v1932, %v1932
  %v1966 = vunpack.c.l.b16 %v1619
  %v1967 = vunpack.c.h.b16 %v1619
  %v1968 = vunpack.c.l.b16 %v1620
  %v1969 = vunpack.c.h.b16 %v1620
  %v1970 = vunpack.c.l.b16 %v1621
  %v1971 = vunpack.c.h.b16 %v1621
  %v1972 = vunpack.c.l.b16 %v1622
  %v1973 = vunpack.c.h.b16 %v1622
  %v1974 = vunpack.c.l.b16 %v1623
  %v1975 = vunpack.c.h.b16 %v1623
  %v1976 = vunpack.c.l.b16 %v1624
  %v1977 = vunpack.c.h.b16 %v1624
  %v1978 = vunpack.c.l.b16 %v1625
  %v1979 = vunpack.c.h.b16 %v1625
  %v1980 = vunpack.c.l.b16 %v1626
  %v1981 = vunpack.c.h.b16 %v1626
  %v1982 = vunpack.c.l.b16 %v1627
  %v1983 = vunpack.c.h.b16 %v1627
  %v1984 = vunpack.c.l.b16 %v1628
  %v1985 = vunpack.c.h.b16 %v1628
  %v1986 = vunpack.c.l.b16 %v1629
  %v1987 = vunpack.c.h.b16 %v1629
  %v1988 = vunpack.c.l.b16 %v1630
  %v1989 = vunpack.c.h.b16 %v1630
  %v1990 = vunpack.c.l.b16 %v1631
  %v1991 = vunpack.c.h.b16 %v1631
  %v1992 = vunpack.c.l.b16 %v1632
  %v1993 = vunpack.c.h.b16 %v1632
  %v1994 = vunpack.c.l.b16 %v1633
  %v1995 = vunpack.c.h.b16 %v1633
  %v1996 = vunpack.c.l.b16 %v1634
  %v1997 = vunpack.c.h.b16 %v1634
  %v1998 = vunpack.c.l.b16 %v1635
  %v1999 = vunpack.c.h.b16 %v1635
  %v2000 = vunpack.c.l.b16 %v1636
  %v2001 = vunpack.c.h.b16 %v1636
  %v2002 = vunpack.c.l.b16 %v1637
  %v2003 = vunpack.c.h.b16 %v1637
  %v2004 = vunpack.c.l.b16 %v1638
  %v2005 = vunpack.c.h.b16 %v1638
  %v2006 = vunpack.c.l.b16 %v1639
  %v2007 = vunpack.c.h.b16 %v1639
  %v2008 = vunpack.c.l.b16 %v1640
  %v2009 = vunpack.c.h.b16 %v1640
  %v2010 = vunpack.c.l.b16 %v1641
  %v2011 = vunpack.c.h.b16 %v1641
  %v2012 = vunpack.c.l.b16 %v1642
  %v2013 = vunpack.c.h.b16 %v1642
  %v2014 = vunpack.c.l.b16 %v1643
  %v2015 = vunpack.c.h.b16 %v1643
  %v2016 = vunpack.c.l.b16 %v1644
  %v2017 = vunpack.c.h.b16 %v1644
  %v2018 = vunpack.c.l.b16 %v1645
  %v2019 = vunpack.c.h.b16 %v1645
  %v2020 = vunpack.c.l.b16 %v1646
  %v2021 = vunpack.c.h.b16 %v1646
  %v2022 = vunpack.c.l.b16 %v1647
  %v2023 = vunpack.c.h.b16 %v1647
  %v2024 = vunpack.c.l.b16 %v1648
  %v2025 = vunpack.c.h.b16 %v1648
  %v2026 = vunpack.c.l.b16 %v1649
  %v2027 = vunpack.c.h.b16 %v1649
  %v2028 = vunpack.c.l.b16 %v1650
  %v2029 = vunpack.c.h.b16 %v1650
  %v2030 = vpack.c.b16 %v1970, %v1966
  %v2031 = vpack.c.b16 %v1971, %v1967
  %v2032 = vpack.c.b16 %v1972, %v1968
  %v2033 = vpack.c.b16 %v1973, %v1969
  %v2034 = vpack.c.b16 %v1978, %v1974
  %v2035 = vpack.c.b16 %v1979, %v1975
  %v2036 = vpack.c.b16 %v1980, %v1976
  %v2037 = vpack.c.b16 %v1981, %v1977
  %v2038 = vpack.c.b16 %v1986, %v1982
  %v2039 = vpack.c.b16 %v1987, %v1983
  %v2040 = vpack.c.b16 %v1988, %v1984
  %v2041 = vpack.c.b16 %v1989, %v1985
  %v2042 = vpack.c.b16 %v1994, %v1990
  %v2043 = vpack.c.b16 %v1995, %v1991
  %v2044 = vpack.c.b16 %v1996, %v1992
  %v2045 = vpack.c.b16 %v1997, %v1993
  %v2046 = vpack.c.b16 %v2002, %v1998
  %v2047 = vpack.c.b16 %v2003, %v1999
  %v2048 = vpack.c.b16 %v2004, %v2000
  %v2049 = vpack.c.b16 %v2005, %v2001
  %v2050 = vpack.c.b16 %v2010, %v2006
  %v2051 = vpack.c.b16 %v2011, %v2007
  %v2052 = vpack.c.b16 %v2012, %v2008
  %v2053 = vpack.c.b16 %v2013, %v2009
  %v2054 = vpack.c.b16 %v2018, %v2014
  %v2055 = vpack.c.b16 %v2019, %v2015
  %v2056 = vpack.c.b16 %v2020, %v2016
  %v2057 = vpack.c.b16 %v2021, %v2017
  %v2058 = vpack.c.b16 %v2026, %v2022
  %v2059 = vpack.c.b16 %v2027, %v2023
  %v2060 = vpack.c.b16 %v2028, %v2024
  %v2061 = vpack.c.b16 %v2029, %v2025
  %2094 = vmatpush.bf16.msra.mxu0 %v2058
  %2095 = vmatpush.bf16.msra.mxu0 %v2054
  %2096 = vmatpush.bf16.msra.mxu0 %v2050
  %2097 = vmatpush.bf16.msra.mxu0 %v2046
  %2098 = vmatpush.bf16.msra.mxu0 %v2042
  %2099 = vmatpush.bf16.msra.mxu0 %v2038
  %2100 = vmatpush.bf16.msra.mxu0 %v2034
  %2101 = vmatpush.bf16.msra.mxu0 %v2030
  %2102 = vmatmul.bf16.gmra.mxu0 %v1933
  %v2103 = vpop.f32.mrf.mxu0
  %v2104 = vadd.f32 0.0, %v2103
  %v2105 = vpop.f32.mrf.mxu0
  %2106 = vdwg.mxu0
  %2107 = vmatpush.bf16.msra.mxu0 %v2059
  %2108 = vmatpush.bf16.msra.mxu0 %v2055
  %2109 = vmatpush.bf16.msra.mxu0 %v2051
  %2110 = vmatpush.bf16.msra.mxu0 %v2047
  %2111 = vmatpush.bf16.msra.mxu0 %v2043
  %2112 = vmatpush.bf16.msra.mxu0 %v2039
  %2113 = vmatpush.bf16.msra.mxu0 %v2035
  %2114 = vmatpush.bf16.msra.mxu0 %v2031
  %2115 = vmatmul.bf16.gmra.mxu0 %v1933
  %v2116 = vpop.f32.mrf.mxu0
  %v2117 = vadd.f32 0.0, %v2116
  %v2118 = vpop.f32.mrf.mxu0
  %2119 = vdwg.mxu0
  %2120 = vmatpush.bf16.msra.mxu0 %v2060
  %2121 = vmatpush.bf16.msra.mxu0 %v2056
  %2122 = vmatpush.bf16.msra.mxu0 %v2052
  %2123 = vmatpush.bf16.msra.mxu0 %v2048
  %2124 = vmatpush.bf16.msra.mxu0 %v2044
  %2125 = vmatpush.bf16.msra.mxu0 %v2040
  %2126 = vmatpush.bf16.msra.mxu0 %v2036
  %2127 = vmatpush.bf16.msra.mxu0 %v2032
  %2128 = vmatmul.bf16.gmra.mxu0 %v1933
  %v2129 = vpop.f32.mrf.mxu0
  %v2130 = vadd.f32 0.0, %v2129
  %v2131 = vpop.f32.mrf.mxu0
  %2132 = vdwg.mxu0
  %2133 = vmatpush.bf16.msra.mxu0 %v2061
  %2134 = vmatpush.bf16.msra.mxu0 %v2057
  %2135 = vmatpush.bf16.msra.mxu0 %v2053
  %2136 = vmatpush.bf16.msra.mxu0 %v2049
  %2137 = vmatpush.bf16.msra.mxu0 %v2045
  %2138 = vmatpush.bf16.msra.mxu0 %v2041
  %2139 = vmatpush.bf16.msra.mxu0 %v2037
  %2140 = vmatpush.bf16.msra.mxu0 %v2033
  %2141 = vmatmul.bf16.gmra.mxu0 %v1933
  %v2142 = vpop.f32.mrf.mxu0
  %v2143 = vadd.f32 0.0, %v2142
  %v2144 = vpop.f32.mrf.mxu0
  %2145 = vdwg.mxu0
  %v2146 = vadd.f32 %v1928, %v2104
  %v2147 = vadd.f32 %v1929, %v2117
  %v2148 = vadd.f32 %v1930, %v2130
  %v2149 = vadd.f32 %v1931, %v2143
  %v2150 = vxor.u32 %v2146, 2147483648
  %v2151 = vmul.f32 %v2150, 1.442695
  %v2152 = vpow.pop %v2151
  %v2153 = vadd.f32 %v2152, 1.0
  %v2154 = vrcp.pop %v2153
  %v2155 = vmul.f32 %v2153, %v2154
  %v2156 = vsub.f32 1.0, %v2155
  %v2157 = vmul.f32 %v2154, %v2156
  %v2158 = vadd.f32 %v2154, %v2157
  %vm2159 = vweird.f32 %v2153
  %vm2160 = vweird.f32 %v2154
  %vm2161 = vmor %vm2159, %vm2160
  %v2162 = vsel %vm2161, %v2154, %v2158
  %v2163 = vand.u32 2147483647, %v2153
  %vm2164 = vcmp.eq.f32.partialorder %v2163, 8.507059e+37
  %v2165 = vand.u32 %v2153, 2147483648
  %v2166 = vor.u32 1.1754944e-38, %v2165
  %v2167 = vsel %vm2164, %v2166, %v2162
  %v2168 = vmul.f32 1.0, %v2167
  %v2169 = vxor.u32 %v2147, 2147483648
  %v2170 = vmul.f32 %v2169, 1.442695
  %v2171 = vpow.pop %v2170
  %v2172 = vadd.f32 %v2171, 1.0
  %v2173 = vrcp.pop %v2172
  %v2174 = vmul.f32 %v2172, %v2173
  %v2175 = vsub.f32 1.0, %v2174
  %v2176 = vmul.f32 %v2173, %v2175
  %v2177 = vadd.f32 %v2173, %v2176
  %vm2178 = vweird.f32 %v2172
  %vm2179 = vweird.f32 %v2173
  %vm2180 = vmor %vm2178, %vm2179
  %v2181 = vsel %vm2180, %v2173, %v2177
  %v2182 = vand.u32 2147483647, %v2172
  %vm2183 = vcmp.eq.f32.partialorder %v2182, 8.507059e+37
  %v2184 = vand.u32 %v2172, 2147483648
  %v2185 = vor.u32 1.1754944e-38, %v2184
  %v2186 = vsel %vm2183, %v2185, %v2181
  %v2187 = vmul.f32 1.0, %v2186
  %v2188 = vtanh.pop %v2148
  %v2189 = vxor.u32 %v2149, 2147483648
  %v2190 = vmul.f32 %v2189, 1.442695
  %v2191 = vpow.pop %v2190
  %v2192 = vadd.f32 %v2191, 1.0
  %v2193 = vrcp.pop %v2192
  %v2194 = vmul.f32 %v2192, %v2193
  %v2195 = vsub.f32 1.0, %v2194
  %v2196 = vmul.f32 %v2193, %v2195
  %v2197 = vadd.f32 %v2193, %v2196
  %vm2198 = vweird.f32 %v2192
  %vm2199 = vweird.f32 %v2193
  %vm2200 = vmor %vm2198, %vm2199
  %v2201 = vsel %vm2200, %v2193, %v2197
  %v2202 = vand.u32 2147483647, %v2192
  %vm2203 = vcmp.eq.f32.partialorder %v2202, 8.507059e+37
  %v2204 = vand.u32 %v2192, 2147483648
  %v2205 = vor.u32 1.1754944e-38, %v2204
  %v2206 = vsel %vm2203, %v2205, %v2201
  %v2207 = vmul.f32 1.0, %v2206
  %v2208 = vld [vmem:[#allocation4] sm:$0x3]
  %v2209 = vmul.f32 %v2187, %v2208
  %v2210 = vmul.f32 %v2168, %v2188
  %v2211 = vadd.f32 %v2209, %v2210
  %v2212 = vtanh.pop %v2211
  %v2213 = vmul.f32 %v2207, %v2212
  %2214 = vst [vmem:[#allocation4] sm:$0x3] %v2211
  %2215 = vst [vmem:[#allocation3] sm:$0x3] %v2213
  %v2216 = vpack.c.bf16 %v2213, %v2213
  %2217 = vst [vmem:[%s5] sm:$0x1] %v2216
  %v2218 = vld [vmem:[#allocation2] sm:$0xc]
  %v2219 = vld [vmem:[#allocation2 + $0x8] sm:$0xc]
  %v2220 = vld [vmem:[#allocation2 + $0x10] sm:$0xc]
  %v2221 = vld [vmem:[#allocation2 + $0x18] sm:$0xc]
  %v2222 = vld [vmem:[#allocation3] sm:$0x3]
  %v2223 = vpack.c.bf16 %v2222, %v2222
  %2224 = vmatpush.bf16.msra.mxu0 %v2058
  %2225 = vmatpush.bf16.msra.mxu0 %v2054
  %2226 = vmatpush.bf16.msra.mxu0 %v2050
  %2227 = vmatpush.bf16.msra.mxu0 %v2046
  %2228 = vmatpush.bf16.msra.mxu0 %v2042
  %2229 = vmatpush.bf16.msra.mxu0 %v2038
  %2230 = vmatpush.bf16.msra.mxu0 %v2034
  %2231 = vmatpush.bf16.msra.mxu0 %v2030
  %2232 = vmatmul.bf16.gmra.mxu0 %v2223
  %v2233 = vpop.f32.mrf.mxu0
  %v2234 = vadd.f32 0.0, %v2233
  %v2235 = vpop.f32.mrf.mxu0
  %2236 = vdwg.mxu0
  %2237 = vmatpush.bf16.msra.mxu0 %v2059
  %2238 = vmatpush.bf16.msra.mxu0 %v2055
  %2239 = vmatpush.bf16.msra.mxu0 %v2051
  %2240 = vmatpush.bf16.msra.mxu0 %v2047
  %2241 = vmatpush.bf16.msra.mxu0 %v2043
  %2242 = vmatpush.bf16.msra.mxu0 %v2039
  %2243 = vmatpush.bf16.msra.mxu0 %v2035
  %2244 = vmatpush.bf16.msra.mxu0 %v2031
  %2245 = vmatmul.bf16.gmra.mxu0 %v2223
  %v2246 = vpop.f32.mrf.mxu0
  %v2247 = vadd.f32 0.0, %v2246
  %v2248 = vpop.f32.mrf.mxu0
  %2249 = vdwg.mxu0
  %2250 = vmatpush.bf16.msra.mxu0 %v2060
  %2251 = vmatpush.bf16.msra.mxu0 %v2056
  %2252 = vmatpush.bf16.msra.mxu0 %v2052
  %2253 = vmatpush.bf16.msra.mxu0 %v2048
  %2254 = vmatpush.bf16.msra.mxu0 %v2044
  %2255 = vmatpush.bf16.msra.mxu0 %v2040
  %2256 = vmatpush.bf16.msra.mxu0 %v2036
  %2257 = vmatpush.bf16.msra.mxu0 %v2032
  %2258 = vmatmul.bf16.gmra.mxu0 %v2223
  %v2259 = vpop.f32.mrf.mxu0
  %v2260 = vadd.f32 0.0, %v2259
  %v2261 = vpop.f32.mrf.mxu0
  %2262 = vdwg.mxu0
  %2263 = vmatpush.bf16.msra.mxu0 %v2061
  %2264 = vmatpush.bf16.msra.mxu0 %v2057
  %2265 = vmatpush.bf16.msra.mxu0 %v2053
  %2266 = vmatpush.bf16.msra.mxu0 %v2049
  %2267 = vmatpush.bf16.msra.mxu0 %v2045
  %2268 = vmatpush.bf16.msra.mxu0 %v2041
  %2269 = vmatpush.bf16.msra.mxu0 %v2037
  %2270 = vmatpush.bf16.msra.mxu0 %v2033
  %2271 = vmatmul.bf16.gmra.mxu0 %v2223
  %v2272 = vpop.f32.mrf.mxu0
  %v2273 = vadd.f32 0.0, %v2272
  %v2274 = vpop.f32.mrf.mxu0
  %2275 = vdwg.mxu0
  %v2280 = vrot.slane %v2234, 6
  %v2281 = vrot.slane %v2247, 6
  %v2282 = vrot.slane %v2260, 6
  %v2283 = vrot.slane %v2273, 6
  %v2288 = vadd.f32 %v2218, %v2280
  %v2289 = vadd.f32 %v2219, %v2281
  %v2290 = vadd.f32 %v2220, %v2282
  %v2291 = vadd.f32 %v2221, %v2283
  %v2292 = vxor.u32 %v2288, 2147483648
  %v2293 = vmul.f32 %v2292, 1.442695
  %v2294 = vpow.pop %v2293
  %v2295 = vadd.f32 %v2294, 1.0
  %v2296 = vrcp.pop %v2295
  %v2297 = vmul.f32 %v2295, %v2296
  %v2298 = vsub.f32 1.0, %v2297
  %v2299 = vmul.f32 %v2296, %v2298
  %v2300 = vadd.f32 %v2296, %v2299
  %vm2301 = vweird.f32 %v2295
  %vm2302 = vweird.f32 %v2296
  %vm2303 = vmor %vm2301, %vm2302
  %v2304 = vsel %vm2303, %v2296, %v2300
  %v2305 = vand.u32 2147483647, %v2295
  %vm2306 = vcmp.eq.f32.partialorder %v2305, 8.507059e+37
  %v2307 = vand.u32 %v2295, 2147483648
  %v2308 = vor.u32 1.1754944e-38, %v2307
  %v2309 = vsel %vm2306, %v2308, %v2304
  %v2310 = vmul.f32 1.0, %v2309
  %v2311 = vxor.u32 %v2289, 2147483648
  %v2312 = vmul.f32 %v2311, 1.442695
  %v2313 = vpow.pop %v2312
  %v2314 = vadd.f32 %v2313, 1.0
  %v2315 = vrcp.pop %v2314
  %v2316 = vmul.f32 %v2314, %v2315
  %v2317 = vsub.f32 1.0, %v2316
  %v2318 = vmul.f32 %v2315, %v2317
  %v2319 = vadd.f32 %v2315, %v2318
  %vm2320 = vweird.f32 %v2314
  %vm2321 = vweird.f32 %v2315
  %vm2322 = vmor %vm2320, %vm2321
  %v2323 = vsel %vm2322, %v2315, %v2319
  %v2324 = vand.u32 2147483647, %v2314
  %vm2325 = vcmp.eq.f32.partialorder %v2324, 8.507059e+37
  %v2326 = vand.u32 %v2314, 2147483648
  %v2327 = vor.u32 1.1754944e-38, %v2326
  %v2328 = vsel %vm2325, %v2327, %v2323
  %v2329 = vmul.f32 1.0, %v2328
  %v2330 = vtanh.pop %v2290
  %v2331 = vxor.u32 %v2291, 2147483648
  %v2332 = vmul.f32 %v2331, 1.442695
  %v2333 = vpow.pop %v2332
  %v2334 = vadd.f32 %v2333, 1.0
  %v2335 = vrcp.pop %v2334
  %v2336 = vmul.f32 %v2334, %v2335
  %v2337 = vsub.f32 1.0, %v2336
  %v2338 = vmul.f32 %v2335, %v2337
  %v2339 = vadd.f32 %v2335, %v2338
  %vm2340 = vweird.f32 %v2334
  %vm2341 = vweird.f32 %v2335
  %vm2342 = vmor %vm2340, %vm2341
  %v2343 = vsel %vm2342, %v2335, %v2339
  %v2344 = vand.u32 2147483647, %v2334
  %vm2345 = vcmp.eq.f32.partialorder %v2344, 8.507059e+37
  %v2346 = vand.u32 %v2334, 2147483648
  %v2347 = vor.u32 1.1754944e-38, %v2346
  %v2348 = vsel %vm2345, %v2347, %v2343
  %v2349 = vmul.f32 1.0, %v2348
  %v2350 = vld [vmem:[#allocation4] sm:$0x3]
  %v2352 = vrot.slane %v2350, 6
  %v2354 = vmul.f32 %v2329, %v2352
  %v2355 = vmul.f32 %v2310, %v2330
  %v2356 = vadd.f32 %v2354, %v2355
  %v2357 = vtanh.pop %v2356
  %v2358 = vmul.f32 %v2349, %v2357
  %2359 = vst [vmem:[#allocation4 - $0x2] sm:$0xc] %v2356
  %2360 = vst [vmem:[#allocation3 - $0x2] sm:$0xc] %v2358
  %v2361 = vpack.c.bf16 %v2358, %v2358
  %2362 = vst [vmem:[%s5] sm:$0x2] %v2361
  %v2363 = vld [vmem:[#allocation2] sm:$0x30]
  %v2364 = vld [vmem:[#allocation2 + $0x8] sm:$0x30]
  %v2365 = vld [vmem:[#allocation2 + $0x10] sm:$0x30]
  %v2366 = vld [vmem:[#allocation2 + $0x18] sm:$0x30]
  %v2367 = vld [vmem:[#allocation3] sm:$0x3]
  %v2368 = vpack.c.bf16 %v2367, %v2367
  %2369 = vmatpush.bf16.msra.mxu0 %v2058
  %2370 = vmatpush.bf16.msra.mxu0 %v2054
  %2371 = vmatpush.bf16.msra.mxu0 %v2050
  %2372 = vmatpush.bf16.msra.mxu0 %v2046
  %2373 = vmatpush.bf16.msra.mxu0 %v2042
  %2374 = vmatpush.bf16.msra.mxu0 %v2038
  %2375 = vmatpush.bf16.msra.mxu0 %v2034
  %2376 = vmatpush.bf16.msra.mxu0 %v2030
  %2377 = vmatmul.bf16.gmra.mxu0 %v2368
  %v2378 = vpop.f32.mrf.mxu0
  %v2379 = vadd.f32 0.0, %v2378
  %v2380 = vpop.f32.mrf.mxu0
  %2381 = vdwg.mxu0
  %2382 = vmatpush.bf16.msra.mxu0 %v2059
  %2383 = vmatpush.bf16.msra.mxu0 %v2055
  %2384 = vmatpush.bf16.msra.mxu0 %v2051
  %2385 = vmatpush.bf16.msra.mxu0 %v2047
  %2386 = vmatpush.bf16.msra.mxu0 %v2043
  %2387 = vmatpush.bf16.msra.mxu0 %v2039
  %2388 = vmatpush.bf16.msra.mxu0 %v2035
  %2389 = vmatpush.bf16.msra.mxu0 %v2031
  %2390 = vmatmul.bf16.gmra.mxu0 %v2368
  %v2391 = vpop.f32.mrf.mxu0
  %v2392 = vadd.f32 0.0, %v2391
  %v2393 = vpop.f32.mrf.mxu0
  %2394 = vdwg.mxu0
  %2395 = vmatpush.bf16.msra.mxu0 %v2060
  %2396 = vmatpush.bf16.msra.mxu0 %v2056
  %2397 = vmatpush.bf16.msra.mxu0 %v2052
  %2398 = vmatpush.bf16.msra.mxu0 %v2048
  %2399 = vmatpush.bf16.msra.mxu0 %v2044
  %2400 = vmatpush.bf16.msra.mxu0 %v2040
  %2401 = vmatpush.bf16.msra.mxu0 %v2036
  %2402 = vmatpush.bf16.msra.mxu0 %v2032
  %2403 = vmatmul.bf16.gmra.mxu0 %v2368
  %v2404 = vpop.f32.mrf.mxu0
  %v2405 = vadd.f32 0.0, %v2404
  %v2406 = vpop.f32.mrf.mxu0
  %2407 = vdwg.mxu0
  %2408 = vmatpush.bf16.msra.mxu0 %v2061
  %2409 = vmatpush.bf16.msra.mxu0 %v2057
  %2410 = vmatpush.bf16.msra.mxu0 %v2053
  %2411 = vmatpush.bf16.msra.mxu0 %v2049
  %2412 = vmatpush.bf16.msra.mxu0 %v2045
  %2413 = vmatpush.bf16.msra.mxu0 %v2041
  %2414 = vmatpush.bf16.msra.mxu0 %v2037
  %2415 = vmatpush.bf16.msra.mxu0 %v2033
  %2416 = vmatmul.bf16.gmra.mxu0 %v2368
  %v2417 = vpop.f32.mrf.mxu0
  %v2418 = vadd.f32 0.0, %v2417
  %v2419 = vpop.f32.mrf.mxu0
  %2420 = vdwg.mxu0
  %v2425 = vrot.slane %v2379, 4
  %v2426 = vrot.slane %v2392, 4
  %v2427 = vrot.slane %v2405, 4
  %v2428 = vrot.slane %v2418, 4
  %v2433 = vadd.f32 %v2363, %v2425
  %v2434 = vadd.f32 %v2364, %v2426
  %v2435 = vadd.f32 %v2365, %v2427
  %v2436 = vadd.f32 %v2366, %v2428
  %v2437 = vxor.u32 %v2433, 2147483648
  %v2438 = vmul.f32 %v2437, 1.442695
  %v2439 = vpow.pop %v2438
  %v2440 = vadd.f32 %v2439, 1.0
  %v2441 = vrcp.pop %v2440
  %v2442 = vmul.f32 %v2440, %v2441
  %v2443 = vsub.f32 1.0, %v2442
  %v2444 = vmul.f32 %v2441, %v2443
  %v2445 = vadd.f32 %v2441, %v2444
  %vm2446 = vweird.f32 %v2440
  %vm2447 = vweird.f32 %v2441
  %vm2448 = vmor %vm2446, %vm2447
  %v2449 = vsel %vm2448, %v2441, %v2445
  %v2450 = vand.u32 2147483647, %v2440
  %vm2451 = vcmp.eq.f32.partialorder %v2450, 8.507059e+37
  %v2452 = vand.u32 %v2440, 2147483648
  %v2453 = vor.u32 1.1754944e-38, %v2452
  %v2454 = vsel %vm2451, %v2453, %v2449
  %v2455 = vmul.f32 1.0, %v2454
  %v2456 = vxor.u32 %v2434, 2147483648
  %v2457 = vmul.f32 %v2456, 1.442695
  %v2458 = vpow.pop %v2457
  %v2459 = vadd.f32 %v2458, 1.0
  %v2460 = vrcp.pop %v2459
  %v2461 = vmul.f32 %v2459, %v2460
  %v2462 = vsub.f32 1.0, %v2461
  %v2463 = vmul.f32 %v2460, %v2462
  %v2464 = vadd.f32 %v2460, %v2463
  %vm2465 = vweird.f32 %v2459
  %vm2466 = vweird.f32 %v2460
  %vm2467 = vmor %vm2465, %vm2466
  %v2468 = vsel %vm2467, %v2460, %v2464
  %v2469 = vand.u32 2147483647, %v2459
  %vm2470 = vcmp.eq.f32.partialorder %v2469, 8.507059e+37
  %v2471 = vand.u32 %v2459, 2147483648
  %v2472 = vor.u32 1.1754944e-38, %v2471
  %v2473 = vsel %vm2470, %v2472, %v2468
  %v2474 = vmul.f32 1.0, %v2473
  %v2475 = vtanh.pop %v2435
  %v2476 = vxor.u32 %v2436, 2147483648
  %v2477 = vmul.f32 %v2476, 1.442695
  %v2478 = vpow.pop %v2477
  %v2479 = vadd.f32 %v2478, 1.0
  %v2480 = vrcp.pop %v2479
  %v2481 = vmul.f32 %v2479, %v2480
  %v2482 = vsub.f32 1.0, %v2481
  %v2483 = vmul.f32 %v2480, %v2482
  %v2484 = vadd.f32 %v2480, %v2483
  %vm2485 = vweird.f32 %v2479
  %vm2486 = vweird.f32 %v2480
  %vm2487 = vmor %vm2485, %vm2486
  %v2488 = vsel %vm2487, %v2480, %v2484
  %v2489 = vand.u32 2147483647, %v2479
  %vm2490 = vcmp.eq.f32.partialorder %v2489, 8.507059e+37
  %v2491 = vand.u32 %v2479, 2147483648
  %v2492 = vor.u32 1.1754944e-38, %v2491
  %v2493 = vsel %vm2490, %v2492, %v2488
  %v2494 = vmul.f32 1.0, %v2493
  %v2495 = vld [vmem:[#allocation4] sm:$0x3]
  %v2497 = vrot.slane %v2495, 4
  %v2499 = vmul.f32 %v2474, %v2497
  %v2500 = vmul.f32 %v2455, %v2475
  %v2501 = vadd.f32 %v2499, %v2500
  %v2502 = vtanh.pop %v2501
  %v2503 = vmul.f32 %v2494, %v2502
  %2504 = vst [vmem:[#allocation4 - $0x4] sm:$0x30] %v2501
  %2505 = vst [vmem:[#allocation3 - $0x4] sm:$0x30] %v2503
  %v2506 = vpack.c.bf16 %v2503, %v2503
  %2507 = vst [vmem:[%s5] sm:$0x4] %v2506
  %v2508 = vld [vmem:[#allocation2] sm:$0xc0]
  %v2509 = vld [vmem:[#allocation2 + $0x8] sm:$0xc0]
  %v2510 = vld [vmem:[#allocation2 + $0x10] sm:$0xc0]
  %v2511 = vld [vmem:[#allocation2 + $0x18] sm:$0xc0]
  %v2512 = vld [vmem:[#allocation3] sm:$0x3]
  %v2513 = vpack.c.bf16 %v2512, %v2512
  %2514 = vmatpush.bf16.msra.mxu0 %v2058
  %2515 = vmatpush.bf16.msra.mxu0 %v2054
  %2516 = vmatpush.bf16.msra.mxu0 %v2050
  %2517 = vmatpush.bf16.msra.mxu0 %v2046
  %2518 = vmatpush.bf16.msra.mxu0 %v2042
  %2519 = vmatpush.bf16.msra.mxu0 %v2038
  %2520 = vmatpush.bf16.msra.mxu0 %v2034
  %2521 = vmatpush.bf16.msra.mxu0 %v2030
  %2522 = vmatmul.bf16.gmra.mxu0 %v2513
  %v2523 = vpop.f32.mrf.mxu0
  %v2524 = vadd.f32 0.0, %v2523
  %v2525 = vpop.f32.mrf.mxu0
  %2526 = vdwg.mxu0
  %2527 = vmatpush.bf16.msra.mxu0 %v2059
  %2528 = vmatpush.bf16.msra.mxu0 %v2055
  %2529 = vmatpush.bf16.msra.mxu0 %v2051
  %2530 = vmatpush.bf16.msra.mxu0 %v2047
  %2531 = vmatpush.bf16.msra.mxu0 %v2043
  %2532 = vmatpush.bf16.msra.mxu0 %v2039
  %2533 = vmatpush.bf16.msra.mxu0 %v2035
  %2534 = vmatpush.bf16.msra.mxu0 %v2031
  %2535 = vmatmul.bf16.gmra.mxu0 %v2513
  %v2536 = vpop.f32.mrf.mxu0
  %v2537 = vadd.f32 0.0, %v2536
  %v2538 = vpop.f32.mrf.mxu0
  %2539 = vdwg.mxu0
  %2540 = vmatpush.bf16.msra.mxu0 %v2060
  %2541 = vmatpush.bf16.msra.mxu0 %v2056
  %2542 = vmatpush.bf16.msra.mxu0 %v2052
  %2543 = vmatpush.bf16.msra.mxu0 %v2048
  %2544 = vmatpush.bf16.msra.mxu0 %v2044
  %2545 = vmatpush.bf16.msra.mxu0 %v2040
  %2546 = vmatpush.bf16.msra.mxu0 %v2036
  %2547 = vmatpush.bf16.msra.mxu0 %v2032
  %2548 = vmatmul.bf16.gmra.mxu0 %v2513
  %v2549 = vpop.f32.mrf.mxu0
  %v2550 = vadd.f32 0.0, %v2549
  %v2551 = vpop.f32.mrf.mxu0
  %2552 = vdwg.mxu0
  %2553 = vmatpush.bf16.msra.mxu0 %v2061
  %2554 = vmatpush.bf16.msra.mxu0 %v2057
  %2555 = vmatpush.bf16.msra.mxu0 %v2053
  %2556 = vmatpush.bf16.msra.mxu0 %v2049
  %2557 = vmatpush.bf16.msra.mxu0 %v2045
  %2558 = vmatpush.bf16.msra.mxu0 %v2041
  %2559 = vmatpush.bf16.msra.mxu0 %v2037
  %2560 = vmatpush.bf16.msra.mxu0 %v2033
  %2561 = vmatmul.bf16.gmra.mxu0 %v2513
  %v2562 = vpop.f32.mrf.mxu0
  %v2563 = vadd.f32 0.0, %v2562
  %v2564 = vpop.f32.mrf.mxu0
  %2565 = vdwg.mxu0
  %v2570 = vrot.slane %v2524, 2
  %v2571 = vrot.slane %v2537, 2
  %v2572 = vrot.slane %v2550, 2
  %v2573 = vrot.slane %v2563, 2
  %v2578 = vadd.f32 %v2508, %v2570
  %v2579 = vadd.f32 %v2509, %v2571
  %v2580 = vadd.f32 %v2510, %v2572
  %v2581 = vadd.f32 %v2511, %v2573
  %v2582 = vxor.u32 %v2578, 2147483648
  %v2583 = vmul.f32 %v2582, 1.442695
  %v2584 = vpow.pop %v2583
  %v2585 = vadd.f32 %v2584, 1.0
  %v2586 = vrcp.pop %v2585
  %v2587 = vmul.f32 %v2585, %v2586
  %v2588 = vsub.f32 1.0, %v2587
  %v2589 = vmul.f32 %v2586, %v2588
  %v2590 = vadd.f32 %v2586, %v2589
  %vm2591 = vweird.f32 %v2585
  %vm2592 = vweird.f32 %v2586
  %vm2593 = vmor %vm2591, %vm2592
  %v2594 = vsel %vm2593, %v2586, %v2590
  %v2595 = vand.u32 2147483647, %v2585
  %vm2596 = vcmp.eq.f32.partialorder %v2595, 8.507059e+37
  %v2597 = vand.u32 %v2585, 2147483648
  %v2598 = vor.u32 1.1754944e-38, %v2597
  %v2599 = vsel %vm2596, %v2598, %v2594
  %v2600 = vmul.f32 1.0, %v2599
  %v2601 = vxor.u32 %v2579, 2147483648
  %v2602 = vmul.f32 %v2601, 1.442695
  %v2603 = vpow.pop %v2602
  %v2604 = vadd.f32 %v2603, 1.0
  %v2605 = vrcp.pop %v2604
  %v2606 = vmul.f32 %v2604, %v2605
  %v2607 = vsub.f32 1.0, %v2606
  %v2608 = vmul.f32 %v2605, %v2607
  %v2609 = vadd.f32 %v2605, %v2608
  %vm2610 = vweird.f32 %v2604
  %vm2611 = vweird.f32 %v2605
  %vm2612 = vmor %vm2610, %vm2611
  %v2613 = vsel %vm2612, %v2605, %v2609
  %v2614 = vand.u32 2147483647, %v2604
  %vm2615 = vcmp.eq.f32.partialorder %v2614, 8.507059e+37
  %v2616 = vand.u32 %v2604, 2147483648
  %v2617 = vor.u32 1.1754944e-38, %v2616
  %v2618 = vsel %vm2615, %v2617, %v2613
  %v2619 = vmul.f32 1.0, %v2618
  %v2620 = vtanh.pop %v2580
  %v2621 = vxor.u32 %v2581, 2147483648
  %v2622 = vmul.f32 %v2621, 1.442695
  %v2623 = vpow.pop %v2622
  %v2624 = vadd.f32 %v2623, 1.0
  %v2625 = vrcp.pop %v2624
  %v2626 = vmul.f32 %v2624, %v2625
  %v2627 = vsub.f32 1.0, %v2626
  %v2628 = vmul.f32 %v2625, %v2627
  %v2629 = vadd.f32 %v2625, %v2628
  %vm2630 = vweird.f32 %v2624
  %vm2631 = vweird.f32 %v2625
  %vm2632 = vmor %vm2630, %vm2631
  %v2633 = vsel %vm2632, %v2625, %v2629
  %v2634 = vand.u32 2147483647, %v2624
  %vm2635 = vcmp.eq.f32.partialorder %v2634, 8.507059e+37
  %v2636 = vand.u32 %v2624, 2147483648
  %v2637 = vor.u32 1.1754944e-38, %v2636
  %v2638 = vsel %vm2635, %v2637, %v2633
  %v2639 = vmul.f32 1.0, %v2638
  %v2640 = vld [vmem:[#allocation4] sm:$0x3]
  %v2642 = vrot.slane %v2640, 2
  %v2644 = vmul.f32 %v2619, %v2642
  %v2645 = vmul.f32 %v2600, %v2620
  %v2646 = vadd.f32 %v2644, %v2645
  %v2647 = vtanh.pop %v2646
  %v2648 = vmul.f32 %v2639, %v2647
  %2649 = vst [vmem:[#allocation4 - $0x6] sm:$0xc0] %v2646
  %2650 = vst [vmem:[#allocation3 - $0x6] sm:$0xc0] %v2648
  %v2651 = vpack.c.bf16 %v2648, %v2648
  %2652 = vst [vmem:[%s5] sm:$0x8] %v2651
  %v2653 = vld [vmem:[#allocation2 + $0x20] sm:$0x3]
  %v2654 = vld [vmem:[#allocation2 + $0x28] sm:$0x3]
  %v2655 = vld [vmem:[#allocation2 + $0x30] sm:$0x3]
  %v2656 = vld [vmem:[#allocation2 + $0x38] sm:$0x3]
  %v2657 = vld [vmem:[#allocation3] sm:$0x3]
  %v2658 = vpack.c.bf16 %v2657, %v2657
  %2659 = vmatpush.bf16.msra.mxu0 %v2058
  %2660 = vmatpush.bf16.msra.mxu0 %v2054
  %2661 = vmatpush.bf16.msra.mxu0 %v2050
  %2662 = vmatpush.bf16.msra.mxu0 %v2046
  %2663 = vmatpush.bf16.msra.mxu0 %v2042
  %2664 = vmatpush.bf16.msra.mxu0 %v2038
  %2665 = vmatpush.bf16.msra.mxu0 %v2034
  %2666 = vmatpush.bf16.msra.mxu0 %v2030
  %2667 = vmatmul.bf16.gmra.mxu0 %v2658
  %v2668 = vpop.f32.mrf.mxu0
  %v2669 = vadd.f32 0.0, %v2668
  %v2670 = vpop.f32.mrf.mxu0
  %2671 = vdwg.mxu0
  %2672 = vmatpush.bf16.msra.mxu0 %v2059
  %2673 = vmatpush.bf16.msra.mxu0 %v2055
  %2674 = vmatpush.bf16.msra.mxu0 %v2051
  %2675 = vmatpush.bf16.msra.mxu0 %v2047
  %2676 = vmatpush.bf16.msra.mxu0 %v2043
  %2677 = vmatpush.bf16.msra.mxu0 %v2039
  %2678 = vmatpush.bf16.msra.mxu0 %v2035
  %2679 = vmatpush.bf16.msra.mxu0 %v2031
  %2680 = vmatmul.bf16.gmra.mxu0 %v2658
  %v2681 = vpop.f32.mrf.mxu0
  %v2682 = vadd.f32 0.0, %v2681
  %v2683 = vpop.f32.mrf.mxu0
  %2684 = vdwg.mxu0
  %2685 = vmatpush.bf16.msra.mxu0 %v2060
  %2686 = vmatpush.bf16.msra.mxu0 %v2056
  %2687 = vmatpush.bf16.msra.mxu0 %v2052
  %2688 = vmatpush.bf16.msra.mxu0 %v2048
  %2689 = vmatpush.bf16.msra.mxu0 %v2044
  %2690 = vmatpush.bf16.msra.mxu0 %v2040
  %2691 = vmatpush.bf16.msra.mxu0 %v2036
  %2692 = vmatpush.bf16.msra.mxu0 %v2032
  %2693 = vmatmul.bf16.gmra.mxu0 %v2658
  %v2694 = vpop.f32.mrf.mxu0
  %v2695 = vadd.f32 0.0, %v2694
  %v2696 = vpop.f32.mrf.mxu0
  %2697 = vdwg.mxu0
  %2698 = vmatpush.bf16.msra.mxu0 %v2061
  %2699 = vmatpush.bf16.msra.mxu0 %v2057
  %2700 = vmatpush.bf16.msra.mxu0 %v2053
  %2701 = vmatpush.bf16.msra.mxu0 %v2049
  %2702 = vmatpush.bf16.msra.mxu0 %v2045
  %2703 = vmatpush.bf16.msra.mxu0 %v2041
  %2704 = vmatpush.bf16.msra.mxu0 %v2037
  %2705 = vmatpush.bf16.msra.mxu0 %v2033
  %2706 = vmatmul.bf16.gmra.mxu0 %v2658
  %v2707 = vpop.f32.mrf.mxu0
  %v2708 = vadd.f32 0.0, %v2707
  %v2709 = vpop.f32.mrf.mxu0
  %2710 = vdwg.mxu0
  %v2711 = vadd.f32 %v2653, %v2669
  %v2712 = vadd.f32 %v2654, %v2682
  %v2713 = vadd.f32 %v2655, %v2695
  %v2714 = vadd.f32 %v2656, %v2708
  %v2715 = vxor.u32 %v2711, 2147483648
  %v2716 = vmul.f32 %v2715, 1.442695
  %v2717 = vpow.pop %v2716
  %v2718 = vadd.f32 %v2717, 1.0
  %v2719 = vrcp.pop %v2718
  %v2720 = vmul.f32 %v2718, %v2719
  %v2721 = vsub.f32 1.0, %v2720
  %v2722 = vmul.f32 %v2719, %v2721
  %v2723 = vadd.f32 %v2719, %v2722
  %vm2724 = vweird.f32 %v2718
  %vm2725 = vweird.f32 %v2719
  %vm2726 = vmor %vm2724, %vm2725
  %v2727 = vsel %vm2726, %v2719, %v2723
  %v2728 = vand.u32 2147483647, %v2718
  %vm2729 = vcmp.eq.f32.partialorder %v2728, 8.507059e+37
  %v2730 = vand.u32 %v2718, 2147483648
  %v2731 = vor.u32 1.1754944e-38, %v2730
  %v2732 = vsel %vm2729, %v2731, %v2727
  %v2733 = vmul.f32 1.0, %v2732
  %v2734 = vxor.u32 %v2712, 2147483648
  %v2735 = vmul.f32 %v2734, 1.442695
  %v2736 = vpow.pop %v2735
  %v2737 = vadd.f32 %v2736, 1.0
  %v2738 = vrcp.pop %v2737
  %v2739 = vmul.f32 %v2737, %v2738
  %v2740 = vsub.f32 1.0, %v2739
  %v2741 = vmul.f32 %v2738, %v2740
  %v2742 = vadd.f32 %v2738, %v2741
  %vm2743 = vweird.f32 %v2737
  %vm2744 = vweird.f32 %v2738
  %vm2745 = vmor %vm2743, %vm2744
  %v2746 = vsel %vm2745, %v2738, %v2742
  %v2747 = vand.u32 2147483647, %v2737
  %vm2748 = vcmp.eq.f32.partialorder %v2747, 8.507059e+37
  %v2749 = vand.u32 %v2737, 2147483648
  %v2750 = vor.u32 1.1754944e-38, %v2749
  %v2751 = vsel %vm2748, %v2750, %v2746
  %v2752 = vmul.f32 1.0, %v2751
  %v2753 = vtanh.pop %v2713
  %v2754 = vxor.u32 %v2714, 2147483648
  %v2755 = vmul.f32 %v2754, 1.442695
  %v2756 = vpow.pop %v2755
  %v2757 = vadd.f32 %v2756, 1.0
  %v2758 = vrcp.pop %v2757
  %v2759 = vmul.f32 %v2757, %v2758
  %v2760 = vsub.f32 1.0, %v2759
  %v2761 = vmul.f32 %v2758, %v2760
  %v2762 = vadd.f32 %v2758, %v2761
  %vm2763 = vweird.f32 %v2757
  %vm2764 = vweird.f32 %v2758
  %vm2765 = vmor %vm2763, %vm2764
  %v2766 = vsel %vm2765, %v2758, %v2762
  %v2767 = vand.u32 2147483647, %v2757
  %vm2768 = vcmp.eq.f32.partialorder %v2767, 8.507059e+37
  %v2769 = vand.u32 %v2757, 2147483648
  %v2770 = vor.u32 1.1754944e-38, %v2769
  %v2771 = vsel %vm2768, %v2770, %v2766
  %v2772 = vmul.f32 1.0, %v2771
  %v2773 = vld [vmem:[#allocation4] sm:$0x3]
  %v2774 = vmul.f32 %v2752, %v2773
  %v2775 = vmul.f32 %v2733, %v2753
  %v2776 = vadd.f32 %v2774, %v2775
  %v2777 = vtanh.pop %v2776
  %v2778 = vmul.f32 %v2772, %v2777
  %2779 = vst [vmem:[#allocation4] sm:$0x3] %v2776
  %2780 = vst [vmem:[#allocation3] sm:$0x3] %v2778
  %v2781 = vpack.c.bf16 %v2778, %v2778
  %2782 = vst [vmem:[%s5 + $0x4] sm:$0x1] %v2781
  %v2783 = vld [vmem:[#allocation2 + $0x20] sm:$0xc]
  %v2784 = vld [vmem:[#allocation2 + $0x28] sm:$0xc]
  %v2785 = vld [vmem:[#allocation2 + $0x30] sm:$0xc]
  %v2786 = vld [vmem:[#allocation2 + $0x38] sm:$0xc]
  %v2787 = vld [vmem:[#allocation3] sm:$0x3]
  %v2788 = vpack.c.bf16 %v2787, %v2787
  %2789 = vmatpush.bf16.msra.mxu0 %v2058
  %2790 = vmatpush.bf16.msra.mxu0 %v2054
  %2791 = vmatpush.bf16.msra.mxu0 %v2050
  %2792 = vmatpush.bf16.msra.mxu0 %v2046
  %2793 = vmatpush.bf16.msra.mxu0 %v2042
  %2794 = vmatpush.bf16.msra.mxu0 %v2038
  %2795 = vmatpush.bf16.msra.mxu0 %v2034
  %2796 = vmatpush.bf16.msra.mxu0 %v2030
  %2797 = vmatmul.bf16.gmra.mxu0 %v2788
  %v2798 = vpop.f32.mrf.mxu0
  %v2799 = vadd.f32 0.0, %v2798
  %v2800 = vpop.f32.mrf.mxu0
  %2801 = vdwg.mxu0
  %2802 = vmatpush.bf16.msra.mxu0 %v2059
  %2803 = vmatpush.bf16.msra.mxu0 %v2055
  %2804 = vmatpush.bf16.msra.mxu0 %v2051
  %2805 = vmatpush.bf16.msra.mxu0 %v2047
  %2806 = vmatpush.bf16.msra.mxu0 %v2043
  %2807 = vmatpush.bf16.msra.mxu0 %v2039
  %2808 = vmatpush.bf16.msra.mxu0 %v2035
  %2809 = vmatpush.bf16.msra.mxu0 %v2031
  %2810 = vmatmul.bf16.gmra.mxu0 %v2788
  %v2811 = vpop.f32.mrf.mxu0
  %v2812 = vadd.f32 0.0, %v2811
  %v2813 = vpop.f32.mrf.mxu0
  %2814 = vdwg.mxu0
  %2815 = vmatpush.bf16.msra.mxu0 %v2060
  %2816 = vmatpush.bf16.msra.mxu0 %v2056
  %2817 = vmatpush.bf16.msra.mxu0 %v2052
  %2818 = vmatpush.bf16.msra.mxu0 %v2048
  %2819 = vmatpush.bf16.msra.mxu0 %v2044
  %2820 = vmatpush.bf16.msra.mxu0 %v2040
  %2821 = vmatpush.bf16.msra.mxu0 %v2036
  %2822 = vmatpush.bf16.msra.mxu0 %v2032
  %2823 = vmatmul.bf16.gmra.mxu0 %v2788
  %v2824 = vpop.f32.mrf.mxu0
  %v2825 = vadd.f32 0.0, %v2824
  %v2826 = vpop.f32.mrf.mxu0
  %2827 = vdwg.mxu0
  %2828 = vmatpush.bf16.msra.mxu0 %v2061
  %2829 = vmatpush.bf16.msra.mxu0 %v2057
  %2830 = vmatpush.bf16.msra.mxu0 %v2053
  %2831 = vmatpush.bf16.msra.mxu0 %v2049
  %2832 = vmatpush.bf16.msra.mxu0 %v2045
  %2833 = vmatpush.bf16.msra.mxu0 %v2041
  %2834 = vmatpush.bf16.msra.mxu0 %v2037
  %2835 = vmatpush.bf16.msra.mxu0 %v2033
  %2836 = vmatmul.bf16.gmra.mxu0 %v2788
  %v2837 = vpop.f32.mrf.mxu0
  %v2838 = vadd.f32 0.0, %v2837
  %v2839 = vpop.f32.mrf.mxu0
  %2840 = vdwg.mxu0
  %v2845 = vrot.slane %v2799, 6
  %v2846 = vrot.slane %v2812, 6
  %v2847 = vrot.slane %v2825, 6
  %v2848 = vrot.slane %v2838, 6
  %v2853 = vadd.f32 %v2783, %v2845
  %v2854 = vadd.f32 %v2784, %v2846
  %v2855 = vadd.f32 %v2785, %v2847
  %v2856 = vadd.f32 %v2786, %v2848
  %v2857 = vxor.u32 %v2853, 2147483648
  %v2858 = vmul.f32 %v2857, 1.442695
  %v2859 = vpow.pop %v2858
  %v2860 = vadd.f32 %v2859, 1.0
  %v2861 = vrcp.pop %v2860
  %v2862 = vmul.f32 %v2860, %v2861
  %v2863 = vsub.f32 1.0, %v2862
  %v2864 = vmul.f32 %v2861, %v2863
  %v2865 = vadd.f32 %v2861, %v2864
  %vm2866 = vweird.f32 %v2860
  %vm2867 = vweird.f32 %v2861
  %vm2868 = vmor %vm2866, %vm2867
  %v2869 = vsel %vm2868, %v2861, %v2865
  %v2870 = vand.u32 2147483647, %v2860
  %vm2871 = vcmp.eq.f32.partialorder %v2870, 8.507059e+37
  %v2872 = vand.u32 %v2860, 2147483648
  %v2873 = vor.u32 1.1754944e-38, %v2872
  %v2874 = vsel %vm2871, %v2873, %v2869
  %v2875 = vmul.f32 1.0, %v2874
  %v2876 = vxor.u32 %v2854, 2147483648
  %v2877 = vmul.f32 %v2876, 1.442695
  %v2878 = vpow.pop %v2877
  %v2879 = vadd.f32 %v2878, 1.0
  %v2880 = vrcp.pop %v2879
  %v2881 = vmul.f32 %v2879, %v2880
  %v2882 = vsub.f32 1.0, %v2881
  %v2883 = vmul.f32 %v2880, %v2882
  %v2884 = vadd.f32 %v2880, %v2883
  %vm2885 = vweird.f32 %v2879
  %vm2886 = vweird.f32 %v2880
  %vm2887 = vmor %vm2885, %vm2886
  %v2888 = vsel %vm2887, %v2880, %v2884
  %v2889 = vand.u32 2147483647, %v2879
  %vm2890 = vcmp.eq.f32.partialorder %v2889, 8.507059e+37
  %v2891 = vand.u32 %v2879, 2147483648
  %v2892 = vor.u32 1.1754944e-38, %v2891
  %v2893 = vsel %vm2890, %v2892, %v2888
  %v2894 = vmul.f32 1.0, %v2893
  %v2895 = vtanh.pop %v2855
  %v2896 = vxor.u32 %v2856, 2147483648
  %v2897 = vmul.f32 %v2896, 1.442695
  %v2898 = vpow.pop %v2897
  %v2899 = vadd.f32 %v2898, 1.0
  %v2900 = vrcp.pop %v2899
  %v2901 = vmul.f32 %v2899, %v2900
  %v2902 = vsub.f32 1.0, %v2901
  %v2903 = vmul.f32 %v2900, %v2902
  %v2904 = vadd.f32 %v2900, %v2903
  %vm2905 = vweird.f32 %v2899
  %vm2906 = vweird.f32 %v2900
  %vm2907 = vmor %vm2905, %vm2906
  %v2908 = vsel %vm2907, %v2900, %v2904
  %v2909 = vand.u32 2147483647, %v2899
  %vm2910 = vcmp.eq.f32.partialorder %v2909, 8.507059e+37
  %v2911 = vand.u32 %v2899, 2147483648
  %v2912 = vor.u32 1.1754944e-38, %v2911
  %v2913 = vsel %vm2910, %v2912, %v2908
  %v2914 = vmul.f32 1.0, %v2913
  %v2915 = vld [vmem:[#allocation4] sm:$0x3]
  %v2917 = vrot.slane %v2915, 6
  %v2919 = vmul.f32 %v2894, %v2917
  %v2920 = vmul.f32 %v2875, %v2895
  %v2921 = vadd.f32 %v2919, %v2920
  %v2922 = vtanh.pop %v2921
  %v2923 = vmul.f32 %v2914, %v2922
  %2924 = vst [vmem:[#allocation4 - $0x2] sm:$0xc] %v2921
  %2925 = vst [vmem:[#allocation3 - $0x2] sm:$0xc] %v2923
  %v2926 = vpack.c.bf16 %v2923, %v2923
  %2927 = vst [vmem:[%s5 + $0x4] sm:$0x2] %v2926
  %v2928 = vld [vmem:[#allocation2 + $0x20] sm:$0x30]
  %v2929 = vld [vmem:[#allocation2 + $0x28] sm:$0x30]
  %v2930 = vld [vmem:[#allocation2 + $0x30] sm:$0x30]
  %v2931 = vld [vmem:[#allocation2 + $0x38] sm:$0x30]
  %v2932 = vld [vmem:[#allocation3] sm:$0x3]
  %v2933 = vpack.c.bf16 %v2932, %v2932
  %2934 = vmatpush.bf16.msra.mxu0 %v2058
  %2935 = vmatpush.bf16.msra.mxu0 %v2054
  %2936 = vmatpush.bf16.msra.mxu0 %v2050
  %2937 = vmatpush.bf16.msra.mxu0 %v2046
  %2938 = vmatpush.bf16.msra.mxu0 %v2042
  %2939 = vmatpush.bf16.msra.mxu0 %v2038
  %2940 = vmatpush.bf16.msra.mxu0 %v2034
  %2941 = vmatpush.bf16.msra.mxu0 %v2030
  %2942 = vmatmul.bf16.gmra.mxu0 %v2933
  %v2943 = vpop.f32.mrf.mxu0
  %v2944 = vadd.f32 0.0, %v2943
  %v2945 = vpop.f32.mrf.mxu0
  %2946 = vdwg.mxu0
  %2947 = vmatpush.bf16.msra.mxu0 %v2059
  %2948 = vmatpush.bf16.msra.mxu0 %v2055
  %2949 = vmatpush.bf16.msra.mxu0 %v2051
  %2950 = vmatpush.bf16.msra.mxu0 %v2047
  %2951 = vmatpush.bf16.msra.mxu0 %v2043
  %2952 = vmatpush.bf16.msra.mxu0 %v2039
  %2953 = vmatpush.bf16.msra.mxu0 %v2035
  %2954 = vmatpush.bf16.msra.mxu0 %v2031
  %2955 = vmatmul.bf16.gmra.mxu0 %v2933
  %v2956 = vpop.f32.mrf.mxu0
  %v2957 = vadd.f32 0.0, %v2956
  %v2958 = vpop.f32.mrf.mxu0
  %2959 = vdwg.mxu0
  %2960 = vmatpush.bf16.msra.mxu0 %v2060
  %2961 = vmatpush.bf16.msra.mxu0 %v2056
  %2962 = vmatpush.bf16.msra.mxu0 %v2052
  %2963 = vmatpush.bf16.msra.mxu0 %v2048
  %2964 = vmatpush.bf16.msra.mxu0 %v2044
  %2965 = vmatpush.bf16.msra.mxu0 %v2040
  %2966 = vmatpush.bf16.msra.mxu0 %v2036
  %2967 = vmatpush.bf16.msra.mxu0 %v2032
  %2968 = vmatmul.bf16.gmra.mxu0 %v2933
  %v2969 = vpop.f32.mrf.mxu0
  %v2970 = vadd.f32 0.0, %v2969
  %v2971 = vpop.f32.mrf.mxu0
  %2972 = vdwg.mxu0
  %2973 = vmatpush.bf16.msra.mxu0 %v2061
  %2974 = vmatpush.bf16.msra.mxu0 %v2057
  %2975 = vmatpush.bf16.msra.mxu0 %v2053
  %2976 = vmatpush.bf16.msra.mxu0 %v2049
  %2977 = vmatpush.bf16.msra.mxu0 %v2045
  %2978 = vmatpush.bf16.msra.mxu0 %v2041
  %2979 = vmatpush.bf16.msra.mxu0 %v2037
  %2980 = vmatpush.bf16.msra.mxu0 %v2033
  %2981 = vmatmul.bf16.gmra.mxu0 %v2933
  %v2982 = vpop.f32.mrf.mxu0
  %v2983 = vadd.f32 0.0, %v2982
  %v2984 = vpop.f32.mrf.mxu0
  %2985 = vdwg.mxu0
  %v2990 = vrot.slane %v2944, 4
  %v2991 = vrot.slane %v2957, 4
  %v2992 = vrot.slane %v2970, 4
  %v2993 = vrot.slane %v2983, 4
  %v2998 = vadd.f32 %v2928, %v2990
  %v2999 = vadd.f32 %v2929, %v2991
  %v3000 = vadd.f32 %v2930, %v2992
  %v3001 = vadd.f32 %v2931, %v2993
  %v3002 = vxor.u32 %v2998, 2147483648
  %v3003 = vmul.f32 %v3002, 1.442695
  %v3004 = vpow.pop %v3003
  %v3005 = vadd.f32 %v3004, 1.0
  %v3006 = vrcp.pop %v3005
  %v3007 = vmul.f32 %v3005, %v3006
  %v3008 = vsub.f32 1.0, %v3007
  %v3009 = vmul.f32 %v3006, %v3008
  %v3010 = vadd.f32 %v3006, %v3009
  %vm3011 = vweird.f32 %v3005
  %vm3012 = vweird.f32 %v3006
  %vm3013 = vmor %vm3011, %vm3012
  %v3014 = vsel %vm3013, %v3006, %v3010
  %v3015 = vand.u32 2147483647, %v3005
  %vm3016 = vcmp.eq.f32.partialorder %v3015, 8.507059e+37
  %v3017 = vand.u32 %v3005, 2147483648
  %v3018 = vor.u32 1.1754944e-38, %v3017
  %v3019 = vsel %vm3016, %v3018, %v3014
  %v3020 = vmul.f32 1.0, %v3019
  %v3021 = vxor.u32 %v2999, 2147483648
  %v3022 = vmul.f32 %v3021, 1.442695
  %v3023 = vpow.pop %v3022
  %v3024 = vadd.f32 %v3023, 1.0
  %v3025 = vrcp.pop %v3024
  %v3026 = vmul.f32 %v3024, %v3025
  %v3027 = vsub.f32 1.0, %v3026
  %v3028 = vmul.f32 %v3025, %v3027
  %v3029 = vadd.f32 %v3025, %v3028
  %vm3030 = vweird.f32 %v3024
  %vm3031 = vweird.f32 %v3025
  %vm3032 = vmor %vm3030, %vm3031
  %v3033 = vsel %vm3032, %v3025, %v3029
  %v3034 = vand.u32 2147483647, %v3024
  %vm3035 = vcmp.eq.f32.partialorder %v3034, 8.507059e+37
  %v3036 = vand.u32 %v3024, 2147483648
  %v3037 = vor.u32 1.1754944e-38, %v3036
  %v3038 = vsel %vm3035, %v3037, %v3033
  %v3039 = vmul.f32 1.0, %v3038
  %v3040 = vtanh.pop %v3000
  %v3041 = vxor.u32 %v3001, 2147483648
  %v3042 = vmul.f32 %v3041, 1.442695
  %v3043 = vpow.pop %v3042
  %v3044 = vadd.f32 %v3043, 1.0
  %v3045 = vrcp.pop %v3044
  %v3046 = vmul.f32 %v3044, %v3045
  %v3047 = vsub.f32 1.0, %v3046
  %v3048 = vmul.f32 %v3045, %v3047
  %v3049 = vadd.f32 %v3045, %v3048
  %vm3050 = vweird.f32 %v3044
  %vm3051 = vweird.f32 %v3045
  %vm3052 = vmor %vm3050, %vm3051
  %v3053 = vsel %vm3052, %v3045, %v3049
  %v3054 = vand.u32 2147483647, %v3044
  %vm3055 = vcmp.eq.f32.partialorder %v3054, 8.507059e+37
  %v3056 = vand.u32 %v3044, 2147483648
  %v3057 = vor.u32 1.1754944e-38, %v3056
  %v3058 = vsel %vm3055, %v3057, %v3053
  %v3059 = vmul.f32 1.0, %v3058
  %v3060 = vld [vmem:[#allocation4] sm:$0x3]
  %v3062 = vrot.slane %v3060, 4
  %v3064 = vmul.f32 %v3039, %v3062
  %v3065 = vmul.f32 %v3020, %v3040
  %v3066 = vadd.f32 %v3064, %v3065
  %v3067 = vtanh.pop %v3066
  %v3068 = vmul.f32 %v3059, %v3067
  %3069 = vst [vmem:[#allocation4 - $0x4] sm:$0x30] %v3066
  %3070 = vst [vmem:[#allocation3 - $0x4] sm:$0x30] %v3068
  %v3071 = vpack.c.bf16 %v3068, %v3068
  %3072 = vst [vmem:[%s5 + $0x4] sm:$0x4] %v3071
  %v3073 = vld [vmem:[#allocation2 + $0x20] sm:$0xc0]
  %v3074 = vld [vmem:[#allocation2 + $0x28] sm:$0xc0]
  %v3075 = vld [vmem:[#allocation2 + $0x30] sm:$0xc0]
  %v3076 = vld [vmem:[#allocation2 + $0x38] sm:$0xc0]
  %v3077 = vld [vmem:[#allocation3] sm:$0x3]
  %v3078 = vpack.c.bf16 %v3077, %v3077
  %3079 = vmatpush.bf16.msra.mxu0 %v2058
  %3080 = vmatpush.bf16.msra.mxu0 %v2054
  %3081 = vmatpush.bf16.msra.mxu0 %v2050
  %3082 = vmatpush.bf16.msra.mxu0 %v2046
  %3083 = vmatpush.bf16.msra.mxu0 %v2042
  %3084 = vmatpush.bf16.msra.mxu0 %v2038
  %3085 = vmatpush.bf16.msra.mxu0 %v2034
  %3086 = vmatpush.bf16.msra.mxu0 %v2030
  %3087 = vmatmul.bf16.gmra.mxu0 %v3078
  %v3088 = vpop.f32.mrf.mxu0
  %v3089 = vadd.f32 0.0, %v3088
  %v3090 = vpop.f32.mrf.mxu0
  %3091 = vdwg.mxu0
  %3092 = vmatpush.bf16.msra.mxu0 %v2059
  %3093 = vmatpush.bf16.msra.mxu0 %v2055
  %3094 = vmatpush.bf16.msra.mxu0 %v2051
  %3095 = vmatpush.bf16.msra.mxu0 %v2047
  %3096 = vmatpush.bf16.msra.mxu0 %v2043
  %3097 = vmatpush.bf16.msra.mxu0 %v2039
  %3098 = vmatpush.bf16.msra.mxu0 %v2035
  %3099 = vmatpush.bf16.msra.mxu0 %v2031
  %3100 = vmatmul.bf16.gmra.mxu0 %v3078
  %v3101 = vpop.f32.mrf.mxu0
  %v3102 = vadd.f32 0.0, %v3101
  %v3103 = vpop.f32.mrf.mxu0
  %3104 = vdwg.mxu0
  %3105 = vmatpush.bf16.msra.mxu0 %v2060
  %3106 = vmatpush.bf16.msra.mxu0 %v2056
  %3107 = vmatpush.bf16.msra.mxu0 %v2052
  %3108 = vmatpush.bf16.msra.mxu0 %v2048
  %3109 = vmatpush.bf16.msra.mxu0 %v2044
  %3110 = vmatpush.bf16.msra.mxu0 %v2040
  %3111 = vmatpush.bf16.msra.mxu0 %v2036
  %3112 = vmatpush.bf16.msra.mxu0 %v2032
  %3113 = vmatmul.bf16.gmra.mxu0 %v3078
  %v3114 = vpop.f32.mrf.mxu0
  %v3115 = vadd.f32 0.0, %v3114
  %v3116 = vpop.f32.mrf.mxu0
  %3117 = vdwg.mxu0
  %3118 = vmatpush.bf16.msra.mxu0 %v2061
  %3119 = vmatpush.bf16.msra.mxu0 %v2057
  %3120 = vmatpush.bf16.msra.mxu0 %v2053
  %3121 = vmatpush.bf16.msra.mxu0 %v2049
  %3122 = vmatpush.bf16.msra.mxu0 %v2045
  %3123 = vmatpush.bf16.msra.mxu0 %v2041
  %3124 = vmatpush.bf16.msra.mxu0 %v2037
  %3125 = vmatpush.bf16.msra.mxu0 %v2033
  %3126 = vmatmul.bf16.gmra.mxu0 %v3078
  %v3127 = vpop.f32.mrf.mxu0
  %v3128 = vadd.f32 0.0, %v3127
  %v3129 = vpop.f32.mrf.mxu0
  %3130 = vdwg.mxu0
  %v3135 = vrot.slane %v3089, 2
  %v3136 = vrot.slane %v3102, 2
  %v3137 = vrot.slane %v3115, 2
  %v3138 = vrot.slane %v3128, 2
  %v3143 = vadd.f32 %v3073, %v3135
  %v3144 = vadd.f32 %v3074, %v3136
  %v3145 = vadd.f32 %v3075, %v3137
  %v3146 = vadd.f32 %v3076, %v3138
  %v3147 = vxor.u32 %v3143, 2147483648
  %v3148 = vmul.f32 %v3147, 1.442695
  %v3149 = vpow.pop %v3148
  %v3150 = vadd.f32 %v3149, 1.0
  %v3151 = vrcp.pop %v3150
  %v3152 = vmul.f32 %v3150, %v3151
  %v3153 = vsub.f32 1.0, %v3152
  %v3154 = vmul.f32 %v3151, %v3153
  %v3155 = vadd.f32 %v3151, %v3154
  %vm3156 = vweird.f32 %v3150
  %vm3157 = vweird.f32 %v3151
  %vm3158 = vmor %vm3156, %vm3157
  %v3159 = vsel %vm3158, %v3151, %v3155
  %v3160 = vand.u32 2147483647, %v3150
  %vm3161 = vcmp.eq.f32.partialorder %v3160, 8.507059e+37
  %v3162 = vand.u32 %v3150, 2147483648
  %v3163 = vor.u32 1.1754944e-38, %v3162
  %v3164 = vsel %vm3161, %v3163, %v3159
  %v3165 = vmul.f32 1.0, %v3164
  %v3166 = vxor.u32 %v3144, 2147483648
  %v3167 = vmul.f32 %v3166, 1.442695
  %v3168 = vpow.pop %v3167
  %v3169 = vadd.f32 %v3168, 1.0
  %v3170 = vrcp.pop %v3169
  %v3171 = vmul.f32 %v3169, %v3170
  %v3172 = vsub.f32 1.0, %v3171
  %v3173 = vmul.f32 %v3170, %v3172
  %v3174 = vadd.f32 %v3170, %v3173
  %vm3175 = vweird.f32 %v3169
  %vm3176 = vweird.f32 %v3170
  %vm3177 = vmor %vm3175, %vm3176
  %v3178 = vsel %vm3177, %v3170, %v3174
  %v3179 = vand.u32 2147483647, %v3169
  %vm3180 = vcmp.eq.f32.partialorder %v3179, 8.507059e+37
  %v3181 = vand.u32 %v3169, 2147483648
  %v3182 = vor.u32 1.1754944e-38, %v3181
  %v3183 = vsel %vm3180, %v3182, %v3178
  %v3184 = vmul.f32 1.0, %v3183
  %v3185 = vtanh.pop %v3145
  %v3186 = vxor.u32 %v3146, 2147483648
  %v3187 = vmul.f32 %v3186, 1.442695
  %v3188 = vpow.pop %v3187
  %v3189 = vadd.f32 %v3188, 1.0
  %v3190 = vrcp.pop %v3189
  %v3191 = vmul.f32 %v3189, %v3190
  %v3192 = vsub.f32 1.0, %v3191
  %v3193 = vmul.f32 %v3190, %v3192
  %v3194 = vadd.f32 %v3190, %v3193
  %vm3195 = vweird.f32 %v3189
  %vm3196 = vweird.f32 %v3190
  %vm3197 = vmor %vm3195, %vm3196
  %v3198 = vsel %vm3197, %v3190, %v3194
  %v3199 = vand.u32 2147483647, %v3189
  %vm3200 = vcmp.eq.f32.partialorder %v3199, 8.507059e+37
  %v3201 = vand.u32 %v3189, 2147483648
  %v3202 = vor.u32 1.1754944e-38, %v3201
  %v3203 = vsel %vm3200, %v3202, %v3198
  %v3204 = vmul.f32 1.0, %v3203
  %v3205 = vld [vmem:[#allocation4] sm:$0x3]
  %v3207 = vrot.slane %v3205, 2
  %v3209 = vmul.f32 %v3184, %v3207
  %v3210 = vmul.f32 %v3165, %v3185
  %v3211 = vadd.f32 %v3209, %v3210
  %v3212 = vtanh.pop %v3211
  %v3213 = vmul.f32 %v3204, %v3212
  %3214 = vst [vmem:[#allocation4 - $0x6] sm:$0xc0] %v3211
  %3215 = vst [vmem:[#allocation3 - $0x6] sm:$0xc0] %v3213
  %v3216 = vpack.c.bf16 %v3213, %v3213
  %3217 = vst [vmem:[%s5 + $0x4] sm:$0x8] %v3216
  // Predicated region
  $region22: #{cnn_to_lstm_forward.2} parent=0 // pred_check
    _
  $region23: #{cnn_to_lstm_forward.2} parent=0 // pred_check_branch
    %3219 = sbr.rel (0) target = $region25
  $region24: #{cnn_to_lstm_forward.2} parent=0 // pred_region
    _
  $region25: #{cnn_to_lstm_forward.2} parent=0 // pred_fallthru
    _
  // Predicated region
  $region26: #{cnn_to_lstm_forward.2} parent=0 // pred_check
    _
  $region27: #{cnn_to_lstm_forward.2} parent=0 // pred_check_branch
    %3221 = sbr.rel (0) target = $region29
  $region28: #{cnn_to_lstm_forward.2} parent=0 // pred_region
    _
  $region29: #{cnn_to_lstm_forward.2} parent=0 // pred_fallthru
    _

</llo_original>
